<compile_context>
chip_gen: v7x
topology: tpu7x:2x2x1
jax: 0.10.0
libtpu: 0.0.40
codegen_flags: <defaults>
</compile_context>

<pallas_src>
import jax
import jax.numpy as jnp
import numpy as np
from jax.experimental import pallas as pl
from jax.experimental.pallas import tpu as pltpu

C_IN = 256             # ConvTranspose1d input channels
KERNEL = 25
STRIDE = 2
PADDING = 12
OUTPUT_PADDING = 1
OUTPUT_DIM = 73        # FLAGS.output_dim (skeleton dof); any value <= C_OUT_PAD works
C_OUT_PAD = 128        # per-parity output channels padded to one lane width
C_FUSED = 2 * C_OUT_PAD
N_TAPS = 13            # taps per output parity (= ceil(KERNEL / STRIDE))
LEAD = 6               # leading zero rows per slab  (output pair m reads x rows m .. m+12)
HALO = 16              # slab = l_pad + HALO  (>= 12-row right halo, multiple of 8)
ROW_CHUNK = 128        # output rows per MXU chunk (f32 accumulator = 128 KiB of vregs)
ROW_CAP = 4096         # max input rows (bt * slab) resident per grid block
UNROLL_LIMIT = 16      # fully unroll slab/chunk loops up to this many chunks per block


def _cdiv(a, b):
    return -(-a // b)


def _round_up(v, m):
    return ((v + m - 1) // m) * m


def _convtr_kernel(x_ref, w_ref, b_ref, o_ref):
    # x_ref: (bt, slab, 256)   bf16 -- per slab: 6 leading zeros, L data rows, trailing zeros
    # w_ref: (13, 256, 256)    bf16 -- tap r: lanes 0:128 = W[:,:,24-2r], lanes 128:256 = W[:,:,25-2r]
    # b_ref: (1, 256)          f32  -- bias duplicated into both lane halves
    # o_ref: (bt, l_pad, 256)  f32  -- output pair m: even sample lanes 0:128, odd lanes 128:256
    bt = o_ref.shape[0]
    l_pad = o_ref.shape[1]
    n_full = l_pad // ROW_CHUNK
    rem = l_pad % ROW_CHUNK                      # multiple of 8 (l_pad is)
    chunks_per_slab = n_full + (1 if rem else 0)
    bias = b_ref[...]                            # hoisted: (1, 256)

    def one_chunk(s, c0, cs):
        # Output rows [c0, c0+cs) of slab s; pair m reads x rows m..m+12 of the SAME slab,
        # so no cross-batch reads (slab = l_pad + 16 >= l_pad + 12).
        acc = jnp.dot(x_ref[s, pl.ds(c0, cs), :], w_ref[0],
                      preferred_element_type=jnp.float32)
        for r in range(1, N_TAPS):               # fully unrolled fused even/odd MXU matmuls
            acc = acc + jnp.dot(x_ref[s, pl.ds(c0 + r, cs), :], w_ref[r],
                                preferred_element_type=jnp.float32)
        o_ref[s, pl.ds(c0, cs), :] = acc + bias  # sublane-aligned, lane-dense (256) store

    def one_slab(s):
        for c in range(n_full):                  # chunk bases are static & 128-aligned
            one_chunk(s, c * ROW_CHUNK, ROW_CHUNK)
        if rem:
            one_chunk(s, n_full * ROW_CHUNK, rem)

    if bt * chunks_per_slab <= UNROLL_LIMIT:
        # Small block: fully static unroll (all indices static).
        for s in range(bt):
            one_slab(s)
    else:
        # Large block: dynamic slab index inside lax.fori_loop caps code size; modest unroll
        # keeps LLO scheduling visibility on the hot (unrolled) tap loop.
        unroll = max(1, min(bt, 8 // chunks_per_slab))

        def body(s, carry):
            one_slab(s)
            return carry

        jax.lax.fori_loop(0, bt, body, 0, unroll=unroll)


def _tensorcores_per_chip():
    """Best-effort count of TensorCores that a 'parallel' grid axis shards across."""
    try:
        kind = str(getattr(jax.devices()[0], "device_kind", "")).lower()
    except Exception:
        return 1
    flat = kind.replace(" ", "")
    if "v7" in flat or "tpu7" in flat or "7x" in flat:
        return 2                                  # v7x: 2 TensorCores per chip
    if "v4" in flat:
        return 2                                  # v4 megacore
    if "v5p" in flat or ("v5" in flat and "lite" not in flat and "v5e" not in flat):
        return 2                                  # v5p megacore
    return 1                                      # v5e / v6e: single TensorCore


def _pick_tiling(batch, slab, n_cores):
    """Slabs per block (bt) and #parallel grid blocks; batch is padded to bt * n_blocks."""
    bt_cap = max(1, ROW_CAP // slab)
    n_blocks = _cdiv(batch, min(batch, bt_cap))
    if n_cores > 1:                               # keep every TensorCore busy on v7x / megacore
        n_blocks = _cdiv(n_blocks, n_cores) * n_cores
    bt = _cdiv(batch, n_blocks)                   # balance slabs across blocks (min padding)
    n_blocks = _cdiv(batch, bt)
    if n_cores > 1:
        n_blocks = _cdiv(n_blocks, n_cores) * n_cores
    return bt, n_blocks


def conv_decoder_single(x, weight, bias, *, channels_first_out=True):
    """ConvDecoderSingle forward.

    x:      (B, 256, L) f32  (PyTorch NCL layout, L = f/2)
    weight: (256, C_out, 25) (PyTorch ConvTranspose1d weight layout), C_out <= 128
    bias:   (C_out,)
    returns (B, C_out, 2L) if channels_first_out else (B, 2L, C_out)
    """
    B, c_in, L = x.shape
    assert c_in == C_IN
    c_out = weight.shape[1]
    assert weight.shape == (C_IN, c_out, KERNEL) and c_out <= C_OUT_PAD
    l_out = (L - 1) * STRIDE - 2 * PADDING + KERNEL + OUTPUT_PADDING      # == 2 * L

    # nn.Dropout(0.25) is the identity at inference time.
    # TODO(synk): training-mode dropout (pltpu.prng_seed + stateful_bernoulli mask) not implemented.

    l_pad = _round_up(L, 8)              # output pairs computed per slab (multiple of 8)
    slab = l_pad + HALO                  # 6 leading zeros + L data rows + trailing zeros
    n_cores = _tensorcores_per_chip()
    bt, n_blocks = _pick_tiling(B, slab, n_cores)
    b_pad = bt * n_blocks

    # Channels-last bf16 input, one self-contained zero-halo slab per (padded) batch element.
    # Run this wrapper under jit so XLA fuses the cast+pad into the transpose (one HBM pass).
    x_lc = jnp.transpose(x, (0, 2, 1)).astype(jnp.bfloat16)                      # (B, L, 256)
    x_slab = jnp.pad(x_lc, ((0, b_pad - B), (LEAD, slab - L - LEAD), (0, 0)))    # (b_pad, slab, 256)

    # Fused per-tap weights: lanes 0:128 = even tap W[:,:,24-2r], lanes 128:256 = odd W[:,:,25-2r].
    w_pad = jnp.zeros((C_IN, C_OUT_PAD, KERNEL), jnp.float32)
    w_pad = w_pad.at[:, :c_out, :].set(weight.astype(jnp.float32))
    w_t = jnp.transpose(w_pad, (2, 0, 1))                                        # (25, 256, 128)
    w_even = w_t[24 - 2 * np.arange(N_TAPS)]                                     # (13, 256, 128)
    w_odd = jnp.concatenate(
        [jnp.zeros((1, C_IN, C_OUT_PAD), jnp.float32),
         w_t[25 - 2 * np.arange(1, N_TAPS)]], axis=0)                            # (13, 256, 128)
    w_fused = jnp.concatenate([w_even, w_odd], axis=-1).astype(jnp.bfloat16)     # (13, 256, 256)

    b_fused = jnp.zeros((1, C_FUSED), jnp.float32)
    b_fused = b_fused.at[0, :c_out].set(bias.astype(jnp.float32))
    b_fused = b_fused.at[0, C_OUT_PAD:C_OUT_PAD + c_out].set(bias.astype(jnp.float32))

    flops = 2 * b_pad * l_pad * N_TAPS * C_IN * C_FUSED
    bytes_accessed = (b_pad * slab * C_IN * 2            # x slabs (bf16)
                      + N_TAPS * C_IN * C_FUSED * 2      # fused weights (bf16)
                      + C_FUSED * 4                      # bias
                      + b_pad * l_pad * C_FUSED * 4)     # output (f32)

    out = pl.pallas_call(
        _convtr_kernel,
        grid=(n_blocks,),
        in_specs=[
            pl.BlockSpec((bt, slab, C_IN), lambda t: (t, 0, 0)),
            # Constant index_maps: Pallas keeps these blocks resident across grid steps.
            pl.BlockSpec((N_TAPS, C_IN, C_FUSED), lambda t: (0, 0, 0)),
            pl.BlockSpec((1, C_FUSED), lambda t: (0, 0)),
        ],
        out_specs=pl.BlockSpec((bt, l_pad, C_FUSED), lambda t: (t, 0, 0)),
        out_shape=jax.ShapeDtypeStruct((b_pad, l_pad, C_FUSED), jnp.float32),
        compiler_params=pltpu.CompilerParams(
            dimension_semantics=("parallel",),            # shard blocks across TensorCores
            vmem_limit_bytes=32 * 1024 * 1024),           # ROW_CAP=4096 block needs >16 MiB on v5e
        cost_estimate=pl.CostEstimate(flops=flops, transcendentals=0,
                                      bytes_accessed=bytes_accessed),
    )(x_slab, w_fused, b_fused)

    # Even/odd lane halves -> consecutive time steps is a pure reshape; crop batch/row/lane pads.
    y = out[:B, :L].reshape(B, l_out, C_OUT_PAD)[:, :, :c_out]                   # (B, 2L, c_out)
    if channels_first_out:
        y = jnp.transpose(y, (0, 2, 1))                                          # (B, c_out, 2L)
    return y


def ref_conv_transpose1d(x, W, b):
    """Pure-JAX scatter reference for ConvTranspose1d(256->C, 25, stride=2, pad=12, out_pad=1)."""
    B, _, L = x.shape
    Cout = W.shape[1]
    L_full = (L - 1) * STRIDE + KERNEL
    y = jnp.zeros((B, Cout, L_full), jnp.float32)
    for k in range(KERNEL):
        contrib = jnp.einsum('bcl,co->bol', x, W[:, :, k])
        y = y.at[:, :, k:k + STRIDE * L:STRIDE].add(contrib)
    l_out = (L - 1) * STRIDE - 2 * PADDING + KERNEL + OUTPUT_PADDING
    return y[:, :, PADDING:PADDING + l_out] + b[None, :, None]


if __name__ == "__main__":
    key = jax.random.PRNGKey(0)
    kx, kw, kb = jax.random.split(key, 3)

    # Deterministic parameter init (mimics PyTorch uniform(-1/sqrt(fan), 1/sqrt(fan))).
    bound = 1.0 / np.sqrt(C_IN * KERNEL)
    weight = jax.random.uniform(kw, (C_IN, OUTPUT_DIM, KERNEL), jnp.float32,
                                minval=-bound, maxval=bound)
    bias = jax.random.uniform(kb, (OUTPUT_DIM,), jnp.float32,
                              minval=-bound, maxval=bound)

    fwd = jax.jit(conv_decoder_single, static_argnames=("channels_first_out",))

    # (B, L=f/2): tiny case, odd-batch / non-multiple-of-8 case, and a case large enough to
    # exercise batch padding + the in-kernel fori_loop slab path on any chip.
    for i, (B, L_in) in enumerate([(2, 8), (3, 19), (40, 8)]):
        x = jax.random.normal(jax.random.fold_in(kx, i), (B, C_IN, L_in), jnp.float32)
        out = jax.block_until_ready(fwd(x, weight, bias))
        ref = ref_conv_transpose1d(x, weight, bias)
        assert out.shape == (B, OUTPUT_DIM, 2 * L_in), out.shape
        # bf16 MXU inputs (f32 accumulation) -> loosened tolerance vs. the f32 reference.
        np.testing.assert_allclose(np.asarray(out), np.asarray(ref), rtol=2e-2, atol=2e-2)

    print("KERNEL_OK")
</pallas_src>

<mosaic_0001>
module attributes {stable_mosaic.version = 11 : i64} {
  func.func @_convtr_kernel(%arg0: i32, %arg1: memref<2x24x256xbf16, #tpu.memory_space<vmem>>, %arg2: memref<13x256x256xbf16, #tpu.memory_space<vmem>>, %arg3: memref<1x256xf32, #tpu.memory_space<vmem>>, %arg4: memref<2x8x256xf32, #tpu.memory_space<vmem>>) attributes {dimension_semantics = [#tpu.dimension_semantics<parallel>], iteration_bounds = array<i64: 1>, scalar_prefetch = 0 : i64, scratch_operands = 0 : i64, tpu.core_type = #tpu.core_type<tc>, window_params = [{transform_indices = @transform_0, window_bounds = array<i64: 2, 24, 256>}, {pipeline_mode = #tpu.pipeline_mode<synchronous>, transform_indices = @transform_1, window_bounds = array<i64: 13, 256, 256>}, {pipeline_mode = #tpu.pipeline_mode<synchronous>, transform_indices = @transform_2, window_bounds = array<i64: 1, 256>}, {transform_indices = @transform_3, window_bounds = array<i64: 2, 8, 256>}]} {
    %c0 = arith.constant 0 : index
    %c0_0 = arith.constant 0 : index
    %0 = vector.load %arg3[%c0, %c0_0] : memref<1x256xf32, #tpu.memory_space<vmem>>, vector<1x256xf32>
    %c0_1 = arith.constant 0 : index
    %c0_2 = arith.constant 0 : index
    %c0_3 = arith.constant 0 : index
    %1 = vector.load %arg1[%c0_1, %c0_2, %c0_3] : memref<2x24x256xbf16, #tpu.memory_space<vmem>>, vector<1x8x256xbf16>
    %2 = vector.shape_cast %1 : vector<1x8x256xbf16> to vector<8x256xbf16>
    %c0_4 = arith.constant 0 : index
    %c0_5 = arith.constant 0 : index
    %c0_6 = arith.constant 0 : index
    %3 = vector.load %arg2[%c0_4, %c0_5, %c0_6] : memref<13x256x256xbf16, #tpu.memory_space<vmem>>, vector<1x256x256xbf16>
    %4 = vector.shape_cast %3 : vector<1x256x256xbf16> to vector<256x256xbf16>
    %cst = arith.constant dense<0.000000e+00> : vector<8x256xf32>
    %5 = tpu.matmul %2, %4, %cst {dimension_numbers = #tpu.dot_dimension_numbers<[1], [0], [0], [1], [0, 0, 1, 1], [], []>} : vector<8x256xbf16>, vector<256x256xbf16>, vector<8x256xf32> -> vector<8x256xf32>
    %c0_7 = arith.constant 0 : index
    %c1 = arith.constant 1 : index
    %c0_8 = arith.constant 0 : index
    %6 = vector.load %arg1[%c0_7, %c1, %c0_8] : memref<2x24x256xbf16, #tpu.memory_space<vmem>>, vector<1x8x256xbf16>
    %7 = vector.shape_cast %6 : vector<1x8x256xbf16> to vector<8x256xbf16>
    %c1_9 = arith.constant 1 : index
    %c0_10 = arith.constant 0 : index
    %c0_11 = arith.constant 0 : index
    %8 = vector.load %arg2[%c1_9, %c0_10, %c0_11] : memref<13x256x256xbf16, #tpu.memory_space<vmem>>, vector<1x256x256xbf16>
    %9 = vector.shape_cast %8 : vector<1x256x256xbf16> to vector<256x256xbf16>
    %cst_12 = arith.constant dense<0.000000e+00> : vector<8x256xf32>
    %10 = tpu.matmul %7, %9, %cst_12 {dimension_numbers = #tpu.dot_dimension_numbers<[1], [0], [0], [1], [0, 0, 1, 1], [], []>} : vector<8x256xbf16>, vector<256x256xbf16>, vector<8x256xf32> -> vector<8x256xf32>
    %11 = arith.addf %5, %10 : vector<8x256xf32>
    %c0_13 = arith.constant 0 : index
    %c2 = arith.constant 2 : index
    %c0_14 = arith.constant 0 : index
    %12 = vector.load %arg1[%c0_13, %c2, %c0_14] : memref<2x24x256xbf16, #tpu.memory_space<vmem>>, vector<1x8x256xbf16>
    %13 = vector.shape_cast %12 : vector<1x8x256xbf16> to vector<8x256xbf16>
    %c2_15 = arith.constant 2 : index
    %c0_16 = arith.constant 0 : index
    %c0_17 = arith.constant 0 : index
    %14 = vector.load %arg2[%c2_15, %c0_16, %c0_17] : memref<13x256x256xbf16, #tpu.memory_space<vmem>>, vector<1x256x256xbf16>
    %15 = vector.shape_cast %14 : vector<1x256x256xbf16> to vector<256x256xbf16>
    %cst_18 = arith.constant dense<0.000000e+00> : vector<8x256xf32>
    %16 = tpu.matmul %13, %15, %cst_18 {dimension_numbers = #tpu.dot_dimension_numbers<[1], [0], [0], [1], [0, 0, 1, 1], [], []>} : vector<8x256xbf16>, vector<256x256xbf16>, vector<8x256xf32> -> vector<8x256xf32>
    %17 = arith.addf %11, %16 : vector<8x256xf32>
    %c0_19 = arith.constant 0 : index
    %c3 = arith.constant 3 : index
    %c0_20 = arith.constant 0 : index
    %18 = vector.load %arg1[%c0_19, %c3, %c0_20] : memref<2x24x256xbf16, #tpu.memory_space<vmem>>, vector<1x8x256xbf16>
    %19 = vector.shape_cast %18 : vector<1x8x256xbf16> to vector<8x256xbf16>
    %c3_21 = arith.constant 3 : index
    %c0_22 = arith.constant 0 : index
    %c0_23 = arith.constant 0 : index
    %20 = vector.load %arg2[%c3_21, %c0_22, %c0_23] : memref<13x256x256xbf16, #tpu.memory_space<vmem>>, vector<1x256x256xbf16>
    %21 = vector.shape_cast %20 : vector<1x256x256xbf16> to vector<256x256xbf16>
    %cst_24 = arith.constant dense<0.000000e+00> : vector<8x256xf32>
    %22 = tpu.matmul %19, %21, %cst_24 {dimension_numbers = #tpu.dot_dimension_numbers<[1], [0], [0], [1], [0, 0, 1, 1], [], []>} : vector<8x256xbf16>, vector<256x256xbf16>, vector<8x256xf32> -> vector<8x256xf32>
    %23 = arith.addf %17, %22 : vector<8x256xf32>
    %c0_25 = arith.constant 0 : index
    %c4 = arith.constant 4 : index
    %c0_26 = arith.constant 0 : index
    %24 = vector.load %arg1[%c0_25, %c4, %c0_26] : memref<2x24x256xbf16, #tpu.memory_space<vmem>>, vector<1x8x256xbf16>
    %25 = vector.shape_cast %24 : vector<1x8x256xbf16> to vector<8x256xbf16>
    %c4_27 = arith.constant 4 : index
    %c0_28 = arith.constant 0 : index
    %c0_29 = arith.constant 0 : index
    %26 = vector.load %arg2[%c4_27, %c0_28, %c0_29] : memref<13x256x256xbf16, #tpu.memory_space<vmem>>, vector<1x256x256xbf16>
    %27 = vector.shape_cast %26 : vector<1x256x256xbf16> to vector<256x256xbf16>
    %cst_30 = arith.constant dense<0.000000e+00> : vector<8x256xf32>
    %28 = tpu.matmul %25, %27, %cst_30 {dimension_numbers = #tpu.dot_dimension_numbers<[1], [0], [0], [1], [0, 0, 1, 1], [], []>} : vector<8x256xbf16>, vector<256x256xbf16>, vector<8x256xf32> -> vector<8x256xf32>
    %29 = arith.addf %23, %28 : vector<8x256xf32>
    %c0_31 = arith.constant 0 : index
    %c5 = arith.constant 5 : index
    %c0_32 = arith.constant 0 : index
    %30 = vector.load %arg1[%c0_31, %c5, %c0_32] : memref<2x24x256xbf16, #tpu.memory_space<vmem>>, vector<1x8x256xbf16>
    %31 = vector.shape_cast %30 : vector<1x8x256xbf16> to vector<8x256xbf16>
    %c5_33 = arith.constant 5 : index
    %c0_34 = arith.constant 0 : index
    %c0_35 = arith.constant 0 : index
    %32 = vector.load %arg2[%c5_33, %c0_34, %c0_35] : memref<13x256x256xbf16, #tpu.memory_space<vmem>>, vector<1x256x256xbf16>
    %33 = vector.shape_cast %32 : vector<1x256x256xbf16> to vector<256x256xbf16>
    %cst_36 = arith.constant dense<0.000000e+00> : vector<8x256xf32>
    %34 = tpu.matmul %31, %33, %cst_36 {dimension_numbers = #tpu.dot_dimension_numbers<[1], [0], [0], [1], [0, 0, 1, 1], [], []>} : vector<8x256xbf16>, vector<256x256xbf16>, vector<8x256xf32> -> vector<8x256xf32>
    %35 = arith.addf %29, %34 : vector<8x256xf32>
    %c0_37 = arith.constant 0 : index
    %c6 = arith.constant 6 : index
    %c0_38 = arith.constant 0 : index
    %36 = vector.load %arg1[%c0_37, %c6, %c0_38] : memref<2x24x256xbf16, #tpu.memory_space<vmem>>, vector<1x8x256xbf16>
    %37 = vector.shape_cast %36 : vector<1x8x256xbf16> to vector<8x256xbf16>
    %c6_39 = arith.constant 6 : index
    %c0_40 = arith.constant 0 : index
    %c0_41 = arith.constant 0 : index
    %38 = vector.load %arg2[%c6_39, %c0_40, %c0_41] : memref<13x256x256xbf16, #tpu.memory_space<vmem>>, vector<1x256x256xbf16>
    %39 = vector.shape_cast %38 : vector<1x256x256xbf16> to vector<256x256xbf16>
    %cst_42 = arith.constant dense<0.000000e+00> : vector<8x256xf32>
    %40 = tpu.matmul %37, %39, %cst_42 {dimension_numbers = #tpu.dot_dimension_numbers<[1], [0], [0], [1], [0, 0, 1, 1], [], []>} : vector<8x256xbf16>, vector<256x256xbf16>, vector<8x256xf32> -> vector<8x256xf32>
    %41 = arith.addf %35, %40 : vector<8x256xf32>
    %c0_43 = arith.constant 0 : index
    %c7 = arith.constant 7 : index
    %c0_44 = arith.constant 0 : index
    %42 = vector.load %arg1[%c0_43, %c7, %c0_44] : memref<2x24x256xbf16, #tpu.memory_space<vmem>>, vector<1x8x256xbf16>
    %43 = vector.shape_cast %42 : vector<1x8x256xbf16> to vector<8x256xbf16>
    %c7_45 = arith.constant 7 : index
    %c0_46 = arith.constant 0 : index
    %c0_47 = arith.constant 0 : index
    %44 = vector.load %arg2[%c7_45, %c0_46, %c0_47] : memref<13x256x256xbf16, #tpu.memory_space<vmem>>, vector<1x256x256xbf16>
    %45 = vector.shape_cast %44 : vector<1x256x256xbf16> to vector<256x256xbf16>
    %cst_48 = arith.constant dense<0.000000e+00> : vector<8x256xf32>
    %46 = tpu.matmul %43, %45, %cst_48 {dimension_numbers = #tpu.dot_dimension_numbers<[1], [0], [0], [1], [0, 0, 1, 1], [], []>} : vector<8x256xbf16>, vector<256x256xbf16>, vector<8x256xf32> -> vector<8x256xf32>
    %47 = arith.addf %41, %46 : vector<8x256xf32>
    %c0_49 = arith.constant 0 : index
    %c8 = arith.constant 8 : index
    %c0_50 = arith.constant 0 : index
    %48 = vector.load %arg1[%c0_49, %c8, %c0_50] : memref<2x24x256xbf16, #tpu.memory_space<vmem>>, vector<1x8x256xbf16>
    %49 = vector.shape_cast %48 : vector<1x8x256xbf16> to vector<8x256xbf16>
    %c8_51 = arith.constant 8 : index
    %c0_52 = arith.constant 0 : index
    %c0_53 = arith.constant 0 : index
    %50 = vector.load %arg2[%c8_51, %c0_52, %c0_53] : memref<13x256x256xbf16, #tpu.memory_space<vmem>>, vector<1x256x256xbf16>
    %51 = vector.shape_cast %50 : vector<1x256x256xbf16> to vector<256x256xbf16>
    %cst_54 = arith.constant dense<0.000000e+00> : vector<8x256xf32>
    %52 = tpu.matmul %49, %51, %cst_54 {dimension_numbers = #tpu.dot_dimension_numbers<[1], [0], [0], [1], [0, 0, 1, 1], [], []>} : vector<8x256xbf16>, vector<256x256xbf16>, vector<8x256xf32> -> vector<8x256xf32>
    %53 = arith.addf %47, %52 : vector<8x256xf32>
    %c0_55 = arith.constant 0 : index
    %c9 = arith.constant 9 : index
    %c0_56 = arith.constant 0 : index
    %54 = vector.load %arg1[%c0_55, %c9, %c0_56] : memref<2x24x256xbf16, #tpu.memory_space<vmem>>, vector<1x8x256xbf16>
    %55 = vector.shape_cast %54 : vector<1x8x256xbf16> to vector<8x256xbf16>
    %c9_57 = arith.constant 9 : index
    %c0_58 = arith.constant 0 : index
    %c0_59 = arith.constant 0 : index
    %56 = vector.load %arg2[%c9_57, %c0_58, %c0_59] : memref<13x256x256xbf16, #tpu.memory_space<vmem>>, vector<1x256x256xbf16>
    %57 = vector.shape_cast %56 : vector<1x256x256xbf16> to vector<256x256xbf16>
    %cst_60 = arith.constant dense<0.000000e+00> : vector<8x256xf32>
    %58 = tpu.matmul %55, %57, %cst_60 {dimension_numbers = #tpu.dot_dimension_numbers<[1], [0], [0], [1], [0, 0, 1, 1], [], []>} : vector<8x256xbf16>, vector<256x256xbf16>, vector<8x256xf32> -> vector<8x256xf32>
    %59 = arith.addf %53, %58 : vector<8x256xf32>
    %c0_61 = arith.constant 0 : index
    %c10 = arith.constant 10 : index
    %c0_62 = arith.constant 0 : index
    %60 = vector.load %arg1[%c0_61, %c10, %c0_62] : memref<2x24x256xbf16, #tpu.memory_space<vmem>>, vector<1x8x256xbf16>
    %61 = vector.shape_cast %60 : vector<1x8x256xbf16> to vector<8x256xbf16>
    %c10_63 = arith.constant 10 : index
    %c0_64 = arith.constant 0 : index
    %c0_65 = arith.constant 0 : index
    %62 = vector.load %arg2[%c10_63, %c0_64, %c0_65] : memref<13x256x256xbf16, #tpu.memory_space<vmem>>, vector<1x256x256xbf16>
    %63 = vector.shape_cast %62 : vector<1x256x256xbf16> to vector<256x256xbf16>
    %cst_66 = arith.constant dense<0.000000e+00> : vector<8x256xf32>
    %64 = tpu.matmul %61, %63, %cst_66 {dimension_numbers = #tpu.dot_dimension_numbers<[1], [0], [0], [1], [0, 0, 1, 1], [], []>} : vector<8x256xbf16>, vector<256x256xbf16>, vector<8x256xf32> -> vector<8x256xf32>
    %65 = arith.addf %59, %64 : vector<8x256xf32>
    %c0_67 = arith.constant 0 : index
    %c11 = arith.constant 11 : index
    %c0_68 = arith.constant 0 : index
    %66 = vector.load %arg1[%c0_67, %c11, %c0_68] : memref<2x24x256xbf16, #tpu.memory_space<vmem>>, vector<1x8x256xbf16>
    %67 = vector.shape_cast %66 : vector<1x8x256xbf16> to vector<8x256xbf16>
    %c11_69 = arith.constant 11 : index
    %c0_70 = arith.constant 0 : index
    %c0_71 = arith.constant 0 : index
    %68 = vector.load %arg2[%c11_69, %c0_70, %c0_71] : memref<13x256x256xbf16, #tpu.memory_space<vmem>>, vector<1x256x256xbf16>
    %69 = vector.shape_cast %68 : vector<1x256x256xbf16> to vector<256x256xbf16>
    %cst_72 = arith.constant dense<0.000000e+00> : vector<8x256xf32>
    %70 = tpu.matmul %67, %69, %cst_72 {dimension_numbers = #tpu.dot_dimension_numbers<[1], [0], [0], [1], [0, 0, 1, 1], [], []>} : vector<8x256xbf16>, vector<256x256xbf16>, vector<8x256xf32> -> vector<8x256xf32>
    %71 = arith.addf %65, %70 : vector<8x256xf32>
    %c0_73 = arith.constant 0 : index
    %c12 = arith.constant 12 : index
    %c0_74 = arith.constant 0 : index
    %72 = vector.load %arg1[%c0_73, %c12, %c0_74] : memref<2x24x256xbf16, #tpu.memory_space<vmem>>, vector<1x8x256xbf16>
    %73 = vector.shape_cast %72 : vector<1x8x256xbf16> to vector<8x256xbf16>
    %c12_75 = arith.constant 12 : index
    %c0_76 = arith.constant 0 : index
    %c0_77 = arith.constant 0 : index
    %74 = vector.load %arg2[%c12_75, %c0_76, %c0_77] : memref<13x256x256xbf16, #tpu.memory_space<vmem>>, vector<1x256x256xbf16>
    %75 = vector.shape_cast %74 : vector<1x256x256xbf16> to vector<256x256xbf16>
    %cst_78 = arith.constant dense<0.000000e+00> : vector<8x256xf32>
    %76 = tpu.matmul %73, %75, %cst_78 {dimension_numbers = #tpu.dot_dimension_numbers<[1], [0], [0], [1], [0, 0, 1, 1], [], []>} : vector<8x256xbf16>, vector<256x256xbf16>, vector<8x256xf32> -> vector<8x256xf32>
    %77 = arith.addf %71, %76 : vector<8x256xf32>
    %78 = vector.broadcast %0 : vector<1x256xf32> to vector<8x256xf32>
    %79 = arith.addf %77, %78 : vector<8x256xf32>
    %c0_79 = arith.constant 0 : index
    %c0_80 = arith.constant 0 : index
    %c0_81 = arith.constant 0 : index
    %80 = vector.load %arg4[%c0_79, %c0_80, %c0_81] : memref<2x8x256xf32, #tpu.memory_space<vmem>>, vector<1x8x256xf32>
    %81 = vector.shape_cast %80 : vector<1x8x256xf32> to vector<8x256xf32>
    %82 = vector.shape_cast %79 : vector<8x256xf32> to vector<1x8x256xf32>
    tpu.vector_store %arg4[%c0_79, %c0_80, %c0_81], %82 {strides = array<i32>} : memref<2x8x256xf32, #tpu.memory_space<vmem>>, vector<1x8x256xf32>,
    %c1_82 = arith.constant 1 : index
    %c0_83 = arith.constant 0 : index
    %c0_84 = arith.constant 0 : index
    %83 = vector.load %arg1[%c1_82, %c0_83, %c0_84] : memref<2x24x256xbf16, #tpu.memory_space<vmem>>, vector<1x8x256xbf16>
    %84 = vector.shape_cast %83 : vector<1x8x256xbf16> to vector<8x256xbf16>
    %c0_85 = arith.constant 0 : index
    %c0_86 = arith.constant 0 : index
    %c0_87 = arith.constant 0 : index
    %85 = vector.load %arg2[%c0_85, %c0_86, %c0_87] : memref<13x256x256xbf16, #tpu.memory_space<vmem>>, vector<1x256x256xbf16>
    %86 = vector.shape_cast %85 : vector<1x256x256xbf16> to vector<256x256xbf16>
    %cst_88 = arith.constant dense<0.000000e+00> : vector<8x256xf32>
    %87 = tpu.matmul %84, %86, %cst_88 {dimension_numbers = #tpu.dot_dimension_numbers<[1], [0], [0], [1], [0, 0, 1, 1], [], []>} : vector<8x256xbf16>, vector<256x256xbf16>, vector<8x256xf32> -> vector<8x256xf32>
    %c1_89 = arith.constant 1 : index
    %c1_90 = arith.constant 1 : index
    %c0_91 = arith.constant 0 : index
    %88 = vector.load %arg1[%c1_89, %c1_90, %c0_91] : memref<2x24x256xbf16, #tpu.memory_space<vmem>>, vector<1x8x256xbf16>
    %89 = vector.shape_cast %88 : vector<1x8x256xbf16> to vector<8x256xbf16>
    %c1_92 = arith.constant 1 : index
    %c0_93 = arith.constant 0 : index
    %c0_94 = arith.constant 0 : index
    %90 = vector.load %arg2[%c1_92, %c0_93, %c0_94] : memref<13x256x256xbf16, #tpu.memory_space<vmem>>, vector<1x256x256xbf16>
    %91 = vector.shape_cast %90 : vector<1x256x256xbf16> to vector<256x256xbf16>
    %cst_95 = arith.constant dense<0.000000e+00> : vector<8x256xf32>
    %92 = tpu.matmul %89, %91, %cst_95 {dimension_numbers = #tpu.dot_dimension_numbers<[1], [0], [0], [1], [0, 0, 1, 1], [], []>} : vector<8x256xbf16>, vector<256x256xbf16>, vector<8x256xf32> -> vector<8x256xf32>
    %93 = arith.addf %87, %92 : vector<8x256xf32>
    %c1_96 = arith.constant 1 : index
    %c2_97 = arith.constant 2 : index
    %c0_98 = arith.constant 0 : index
    %94 = vector.load %arg1[%c1_96, %c2_97, %c0_98] : memref<2x24x256xbf16, #tpu.memory_space<vmem>>, vector<1x8x256xbf16>
    %95 = vector.shape_cast %94 : vector<1x8x256xbf16> to vector<8x256xbf16>
    %c2_99 = arith.constant 2 : index
    %c0_100 = arith.constant 0 : index
    %c0_101 = arith.constant 0 : index
    %96 = vector.load %arg2[%c2_99, %c0_100, %c0_101] : memref<13x256x256xbf16, #tpu.memory_space<vmem>>, vector<1x256x256xbf16>
    %97 = vector.shape_cast %96 : vector<1x256x256xbf16> to vector<256x256xbf16>
    %cst_102 = arith.constant dense<0.000000e+00> : vector<8x256xf32>
    %98 = tpu.matmul %95, %97, %cst_102 {dimension_numbers = #tpu.dot_dimension_numbers<[1], [0], [0], [1], [0, 0, 1, 1], [], []>} : vector<8x256xbf16>, vector<256x256xbf16>, vector<8x256xf32> -> vector<8x256xf32>
    %99 = arith.addf %93, %98 : vector<8x256xf32>
    %c1_103 = arith.constant 1 : index
    %c3_104 = arith.constant 3 : index
    %c0_105 = arith.constant 0 : index
    %100 = vector.load %arg1[%c1_103, %c3_104, %c0_105] : memref<2x24x256xbf16, #tpu.memory_space<vmem>>, vector<1x8x256xbf16>
    %101 = vector.shape_cast %100 : vector<1x8x256xbf16> to vector<8x256xbf16>
    %c3_106 = arith.constant 3 : index
    %c0_107 = arith.constant 0 : index
    %c0_108 = arith.constant 0 : index
    %102 = vector.load %arg2[%c3_106, %c0_107, %c0_108] : memref<13x256x256xbf16, #tpu.memory_space<vmem>>, vector<1x256x256xbf16>
    %103 = vector.shape_cast %102 : vector<1x256x256xbf16> to vector<256x256xbf16>
    %cst_109 = arith.constant dense<0.000000e+00> : vector<8x256xf32>
    %104 = tpu.matmul %101, %103, %cst_109 {dimension_numbers = #tpu.dot_dimension_numbers<[1], [0], [0], [1], [0, 0, 1, 1], [], []>} : vector<8x256xbf16>, vector<256x256xbf16>, vector<8x256xf32> -> vector<8x256xf32>
    %105 = arith.addf %99, %104 : vector<8x256xf32>
    %c1_110 = arith.constant 1 : index
    %c4_111 = arith.constant 4 : index
    %c0_112 = arith.constant 0 : index
    %106 = vector.load %arg1[%c1_110, %c4_111, %c0_112] : memref<2x24x256xbf16, #tpu.memory_space<vmem>>, vector<1x8x256xbf16>
    %107 = vector.shape_cast %106 : vector<1x8x256xbf16> to vector<8x256xbf16>
    %c4_113 = arith.constant 4 : index
    %c0_114 = arith.constant 0 : index
    %c0_115 = arith.constant 0 : index
    %108 = vector.load %arg2[%c4_113, %c0_114, %c0_115] : memref<13x256x256xbf16, #tpu.memory_space<vmem>>, vector<1x256x256xbf16>
    %109 = vector.shape_cast %108 : vector<1x256x256xbf16> to vector<256x256xbf16>
    %cst_116 = arith.constant dense<0.000000e+00> : vector<8x256xf32>
    %110 = tpu.matmul %107, %109, %cst_116 {dimension_numbers = #tpu.dot_dimension_numbers<[1], [0], [0], [1], [0, 0, 1, 1], [], []>} : vector<8x256xbf16>, vector<256x256xbf16>, vector<8x256xf32> -> vector<8x256xf32>
    %111 = arith.addf %105, %110 : vector<8x256xf32>
    %c1_117 = arith.constant 1 : index
    %c5_118 = arith.constant 5 : index
    %c0_119 = arith.constant 0 : index
    %112 = vector.load %arg1[%c1_117, %c5_118, %c0_119] : memref<2x24x256xbf16, #tpu.memory_space<vmem>>, vector<1x8x256xbf16>
    %113 = vector.shape_cast %112 : vector<1x8x256xbf16> to vector<8x256xbf16>
    %c5_120 = arith.constant 5 : index
    %c0_121 = arith.constant 0 : index
    %c0_122 = arith.constant 0 : index
    %114 = vector.load %arg2[%c5_120, %c0_121, %c0_122] : memref<13x256x256xbf16, #tpu.memory_space<vmem>>, vector<1x256x256xbf16>
    %115 = vector.shape_cast %114 : vector<1x256x256xbf16> to vector<256x256xbf16>
    %cst_123 = arith.constant dense<0.000000e+00> : vector<8x256xf32>
    %116 = tpu.matmul %113, %115, %cst_123 {dimension_numbers = #tpu.dot_dimension_numbers<[1], [0], [0], [1], [0, 0, 1, 1], [], []>} : vector<8x256xbf16>, vector<256x256xbf16>, vector<8x256xf32> -> vector<8x256xf32>
    %117 = arith.addf %111, %116 : vector<8x256xf32>
    %c1_124 = arith.constant 1 : index
    %c6_125 = arith.constant 6 : index
    %c0_126 = arith.constant 0 : index
    %118 = vector.load %arg1[%c1_124, %c6_125, %c0_126] : memref<2x24x256xbf16, #tpu.memory_space<vmem>>, vector<1x8x256xbf16>
    %119 = vector.shape_cast %118 : vector<1x8x256xbf16> to vector<8x256xbf16>
    %c6_127 = arith.constant 6 : index
    %c0_128 = arith.constant 0 : index
    %c0_129 = arith.constant 0 : index
    %120 = vector.load %arg2[%c6_127, %c0_128, %c0_129] : memref<13x256x256xbf16, #tpu.memory_space<vmem>>, vector<1x256x256xbf16>
    %121 = vector.shape_cast %120 : vector<1x256x256xbf16> to vector<256x256xbf16>
    %cst_130 = arith.constant dense<0.000000e+00> : vector<8x256xf32>
    %122 = tpu.matmul %119, %121, %cst_130 {dimension_numbers = #tpu.dot_dimension_numbers<[1], [0], [0], [1], [0, 0, 1, 1], [], []>} : vector<8x256xbf16>, vector<256x256xbf16>, vector<8x256xf32> -> vector<8x256xf32>
    %123 = arith.addf %117, %122 : vector<8x256xf32>
    %c1_131 = arith.constant 1 : index
    %c7_132 = arith.constant 7 : index
    %c0_133 = arith.constant 0 : index
    %124 = vector.load %arg1[%c1_131, %c7_132, %c0_133] : memref<2x24x256xbf16, #tpu.memory_space<vmem>>, vector<1x8x256xbf16>
    %125 = vector.shape_cast %124 : vector<1x8x256xbf16> to vector<8x256xbf16>
    %c7_134 = arith.constant 7 : index
    %c0_135 = arith.constant 0 : index
    %c0_136 = arith.constant 0 : index
    %126 = vector.load %arg2[%c7_134, %c0_135, %c0_136] : memref<13x256x256xbf16, #tpu.memory_space<vmem>>, vector<1x256x256xbf16>
    %127 = vector.shape_cast %126 : vector<1x256x256xbf16> to vector<256x256xbf16>
    %cst_137 = arith.constant dense<0.000000e+00> : vector<8x256xf32>
    %128 = tpu.matmul %125, %127, %cst_137 {dimension_numbers = #tpu.dot_dimension_numbers<[1], [0], [0], [1], [0, 0, 1, 1], [], []>} : vector<8x256xbf16>, vector<256x256xbf16>, vector<8x256xf32> -> vector<8x256xf32>
    %129 = arith.addf %123, %128 : vector<8x256xf32>
    %c1_138 = arith.constant 1 : index
    %c8_139 = arith.constant 8 : index
    %c0_140 = arith.constant 0 : index
    %130 = vector.load %arg1[%c1_138, %c8_139, %c0_140] : memref<2x24x256xbf16, #tpu.memory_space<vmem>>, vector<1x8x256xbf16>
    %131 = vector.shape_cast %130 : vector<1x8x256xbf16> to vector<8x256xbf16>
    %c8_141 = arith.constant 8 : index
    %c0_142 = arith.constant 0 : index
    %c0_143 = arith.constant 0 : index
    %132 = vector.load %arg2[%c8_141, %c0_142, %c0_143] : memref<13x256x256xbf16, #tpu.memory_space<vmem>>, vector<1x256x256xbf16>
    %133 = vector.shape_cast %132 : vector<1x256x256xbf16> to vector<256x256xbf16>
    %cst_144 = arith.constant dense<0.000000e+00> : vector<8x256xf32>
    %134 = tpu.matmul %131, %133, %cst_144 {dimension_numbers = #tpu.dot_dimension_numbers<[1], [0], [0], [1], [0, 0, 1, 1], [], []>} : vector<8x256xbf16>, vector<256x256xbf16>, vector<8x256xf32> -> vector<8x256xf32>
    %135 = arith.addf %129, %134 : vector<8x256xf32>
    %c1_145 = arith.constant 1 : index
    %c9_146 = arith.constant 9 : index
    %c0_147 = arith.constant 0 : index
    %136 = vector.load %arg1[%c1_145, %c9_146, %c0_147] : memref<2x24x256xbf16, #tpu.memory_space<vmem>>, vector<1x8x256xbf16>
    %137 = vector.shape_cast %136 : vector<1x8x256xbf16> to vector<8x256xbf16>
    %c9_148 = arith.constant 9 : index
    %c0_149 = arith.constant 0 : index
    %c0_150 = arith.constant 0 : index
    %138 = vector.load %arg2[%c9_148, %c0_149, %c0_150] : memref<13x256x256xbf16, #tpu.memory_space<vmem>>, vector<1x256x256xbf16>
    %139 = vector.shape_cast %138 : vector<1x256x256xbf16> to vector<256x256xbf16>
    %cst_151 = arith.constant dense<0.000000e+00> : vector<8x256xf32>
    %140 = tpu.matmul %137, %139, %cst_151 {dimension_numbers = #tpu.dot_dimension_numbers<[1], [0], [0], [1], [0, 0, 1, 1], [], []>} : vector<8x256xbf16>, vector<256x256xbf16>, vector<8x256xf32> -> vector<8x256xf32>
    %141 = arith.addf %135, %140 : vector<8x256xf32>
    %c1_152 = arith.constant 1 : index
    %c10_153 = arith.constant 10 : index
    %c0_154 = arith.constant 0 : index
    %142 = vector.load %arg1[%c1_152, %c10_153, %c0_154] : memref<2x24x256xbf16, #tpu.memory_space<vmem>>, vector<1x8x256xbf16>
    %143 = vector.shape_cast %142 : vector<1x8x256xbf16> to vector<8x256xbf16>
    %c10_155 = arith.constant 10 : index
    %c0_156 = arith.constant 0 : index
    %c0_157 = arith.constant 0 : index
    %144 = vector.load %arg2[%c10_155, %c0_156, %c0_157] : memref<13x256x256xbf16, #tpu.memory_space<vmem>>, vector<1x256x256xbf16>
    %145 = vector.shape_cast %144 : vector<1x256x256xbf16> to vector<256x256xbf16>
    %cst_158 = arith.constant dense<0.000000e+00> : vector<8x256xf32>
    %146 = tpu.matmul %143, %145, %cst_158 {dimension_numbers = #tpu.dot_dimension_numbers<[1], [0], [0], [1], [0, 0, 1, 1], [], []>} : vector<8x256xbf16>, vector<256x256xbf16>, vector<8x256xf32> -> vector<8x256xf32>
    %147 = arith.addf %141, %146 : vector<8x256xf32>
    %c1_159 = arith.constant 1 : index
    %c11_160 = arith.constant 11 : index
    %c0_161 = arith.constant 0 : index
    %148 = vector.load %arg1[%c1_159, %c11_160, %c0_161] : memref<2x24x256xbf16, #tpu.memory_space<vmem>>, vector<1x8x256xbf16>
    %149 = vector.shape_cast %148 : vector<1x8x256xbf16> to vector<8x256xbf16>
    %c11_162 = arith.constant 11 : index
    %c0_163 = arith.constant 0 : index
    %c0_164 = arith.constant 0 : index
    %150 = vector.load %arg2[%c11_162, %c0_163, %c0_164] : memref<13x256x256xbf16, #tpu.memory_space<vmem>>, vector<1x256x256xbf16>
    %151 = vector.shape_cast %150 : vector<1x256x256xbf16> to vector<256x256xbf16>
    %cst_165 = arith.constant dense<0.000000e+00> : vector<8x256xf32>
    %152 = tpu.matmul %149, %151, %cst_165 {dimension_numbers = #tpu.dot_dimension_numbers<[1], [0], [0], [1], [0, 0, 1, 1], [], []>} : vector<8x256xbf16>, vector<256x256xbf16>, vector<8x256xf32> -> vector<8x256xf32>
    %153 = arith.addf %147, %152 : vector<8x256xf32>
    %c1_166 = arith.constant 1 : index
    %c12_167 = arith.constant 12 : index
    %c0_168 = arith.constant 0 : index
    %154 = vector.load %arg1[%c1_166, %c12_167, %c0_168] : memref<2x24x256xbf16, #tpu.memory_space<vmem>>, vector<1x8x256xbf16>
    %155 = vector.shape_cast %154 : vector<1x8x256xbf16> to vector<8x256xbf16>
    %c12_169 = arith.constant 12 : index
    %c0_170 = arith.constant 0 : index
    %c0_171 = arith.constant 0 : index
    %156 = vector.load %arg2[%c12_169, %c0_170, %c0_171] : memref<13x256x256xbf16, #tpu.memory_space<vmem>>, vector<1x256x256xbf16>
    %157 = vector.shape_cast %156 : vector<1x256x256xbf16> to vector<256x256xbf16>
    %cst_172 = arith.constant dense<0.000000e+00> : vector<8x256xf32>
    %158 = tpu.matmul %155, %157, %cst_172 {dimension_numbers = #tpu.dot_dimension_numbers<[1], [0], [0], [1], [0, 0, 1, 1], [], []>} : vector<8x256xbf16>, vector<256x256xbf16>, vector<8x256xf32> -> vector<8x256xf32>
    %159 = arith.addf %153, %158 : vector<8x256xf32>
    %160 = vector.broadcast %0 : vector<1x256xf32> to vector<8x256xf32>
    %161 = arith.addf %159, %160 : vector<8x256xf32>
    %c1_173 = arith.constant 1 : index
    %c0_174 = arith.constant 0 : index
    %c0_175 = arith.constant 0 : index
    %162 = vector.load %arg4[%c1_173, %c0_174, %c0_175] : memref<2x8x256xf32, #tpu.memory_space<vmem>>, vector<1x8x256xf32>
    %163 = vector.shape_cast %162 : vector<1x8x256xf32> to vector<8x256xf32>
    %164 = vector.shape_cast %161 : vector<8x256xf32> to vector<1x8x256xf32>
    tpu.vector_store %arg4[%c1_173, %c0_174, %c0_175], %164 {strides = array<i32>} : memref<2x8x256xf32, #tpu.memory_space<vmem>>, vector<1x8x256xf32>,
    return
  }
  func.func @transform_0(%arg0: i32) -> (i32, i32, i32) {
    %c0_i32 = arith.constant 0 : i32
    %c0_i32_0 = arith.constant 0 : i32
    %c0_i32_1 = arith.constant 0 : i32
    return %arg0, %c0_i32, %c0_i32_0 : i32, i32, i32
  }
  func.func @transform_1(%arg0: i32) -> (i32, i32, i32) {
    %c0_i32 = arith.constant 0 : i32
    %c0_i32_0 = arith.constant 0 : i32
    %c0_i32_1 = arith.constant 0 : i32
    %c0_i32_2 = arith.constant 0 : i32
    return %c0_i32, %c0_i32_0, %c0_i32_1 : i32, i32, i32
  }
  func.func @transform_2(%arg0: i32) -> (i32, i32) {
    %c0_i32 = arith.constant 0 : i32
    %c0_i32_0 = arith.constant 0 : i32
    %c0_i32_1 = arith.constant 0 : i32
    return %c0_i32, %c0_i32_0 : i32, i32
  }
  func.func @transform_3(%arg0: i32) -> (i32, i32, i32) {
    %c0_i32 = arith.constant 0 : i32
    %c0_i32_0 = arith.constant 0 : i32
    %c0_i32_1 = arith.constant 0 : i32
    return %arg0, %c0_i32, %c0_i32_0 : i32, i32, i32
  }
}

</mosaic_0001>

<llo_original>
// kernel: conv_decoder_single.1
$region0: #{conv_decoder_single.1}
  #allocation0 [shape = 'u32[]', space=smem, size = 0x4, offset = 0x4, fixed_abs, tag = 'smem constant byte address 0x4 - core index']
  #allocation1 [shape = 'u32[144,128]{1,0:T(1,128)}', space=vmem, size = 0x12000, scoped, tag = 'internal scratch']
  %s0 = inlined_call_operand.vmem [shape: bf16[2,24,256], index: 0, kind: input, shape index: {}]
  %s1 = inlined_call_operand.vmem [shape: bf16[13,256,256], index: 1, kind: input, shape index: {}]
  %s2 = inlined_call_operand.vmem [shape: f32[1,256], index: 2, kind: input, shape index: {}]
  %s3 = inlined_call_operand.vmem [shape: f32[2,8,256], index: 3, kind: output, shape index: {}]
  %s4 = sld [smem:[#allocation0]]
  $region22: #{conv_decoder_single.1} parent=0
    _
  %s6 = ssub.s32 1, %s4
  %s7 = scalar_select 0, %s6, %s4
  // Predicated region
  $region2: #{conv_decoder_single.1} parent=0 // pred_check
    _
  $region3: #{conv_decoder_single.1} parent=0 // pred_check_branch
    %9 = sbr.rel (0) target = $region5
  $region4: #{conv_decoder_single.1} parent=0 // pred_region
    _
  $region5: #{conv_decoder_single.1} parent=0 // pred_fallthru
    _
  // Predicated region
  $region6: #{conv_decoder_single.1} parent=0 // pred_check
    _
  $region7: #{conv_decoder_single.1} parent=0 // pred_check_branch
    %11 = sbr.rel (0) target = $region9
  $region8: #{conv_decoder_single.1} parent=0 // pred_region
    _
  $region9: #{conv_decoder_single.1} parent=0 // pred_fallthru
    _
  // Predicated region
  $region10: #{conv_decoder_single.1} parent=0 // pred_check
    _
  $region11: #{conv_decoder_single.1} parent=0 // pred_check_branch
    %13 = sbr.rel (0) target = $region13
  $region12: #{conv_decoder_single.1} parent=0 // pred_region
    _
  $region13: #{conv_decoder_single.1} parent=0 // pred_fallthru
    _
  %v14 = vld [vmem:[%s2] sm:$0x3]
  %v15 = vld [vmem:[%s0] sm:$0xff]
  %v16 = vld [vmem:[%s1] sm:$0xff]
  %v17 = vld [vmem:[%s1 + $0x8] sm:$0xff]
  %v18 = vld [vmem:[%s1 + $0x10] sm:$0xff]
  %v19 = vld [vmem:[%s1 + $0x18] sm:$0xff]
  %v20 = vld [vmem:[%s1 + $0x20] sm:$0xff]
  %v21 = vld [vmem:[%s1 + $0x28] sm:$0xff]
  %v22 = vld [vmem:[%s1 + $0x30] sm:$0xff]
  %v23 = vld [vmem:[%s1 + $0x38] sm:$0xff]
  %v24 = vld [vmem:[%s1 + $0x40] sm:$0xff]
  %v25 = vld [vmem:[%s1 + $0x48] sm:$0xff]
  %v26 = vld [vmem:[%s1 + $0x50] sm:$0xff]
  %v27 = vld [vmem:[%s1 + $0x58] sm:$0xff]
  %v28 = vld [vmem:[%s1 + $0x60] sm:$0xff]
  %v29 = vld [vmem:[%s1 + $0x68] sm:$0xff]
  %v30 = vld [vmem:[%s1 + $0x70] sm:$0xff]
  %v31 = vld [vmem:[%s1 + $0x78] sm:$0xff]
  %v32 = vld [vmem:[%s1 + $0x80] sm:$0xff]
  %v33 = vld [vmem:[%s1 + $0x88] sm:$0xff]
  %v34 = vld [vmem:[%s1 + $0x90] sm:$0xff]
  %v35 = vld [vmem:[%s1 + $0x98] sm:$0xff]
  %v36 = vld [vmem:[%s1 + $0xa0] sm:$0xff]
  %v37 = vld [vmem:[%s1 + $0xa8] sm:$0xff]
  %v38 = vld [vmem:[%s1 + $0xb0] sm:$0xff]
  %v39 = vld [vmem:[%s1 + $0xb8] sm:$0xff]
  %v40 = vld [vmem:[%s1 + $0xc0] sm:$0xff]
  %v41 = vld [vmem:[%s1 + $0xc8] sm:$0xff]
  %v42 = vld [vmem:[%s1 + $0xd0] sm:$0xff]
  %v43 = vld [vmem:[%s1 + $0xd8] sm:$0xff]
  %v44 = vld [vmem:[%s1 + $0xe0] sm:$0xff]
  %v45 = vld [vmem:[%s1 + $0xe8] sm:$0xff]
  %v46 = vld [vmem:[%s1 + $0xf0] sm:$0xff]
  %v47 = vld [vmem:[%s1 + $0xf8] sm:$0xff]
  %v48 = vld [vmem:[%s0 + $0x8] sm:$0x11]
  %s49 = scalar_lea.vmem %s1, 256
  %v50 = vld [vmem:[%s49] sm:$0xff]
  %v51 = vld [vmem:[%s49 + $0x8] sm:$0xff]
  %v52 = vld [vmem:[%s49 + $0x10] sm:$0xff]
  %v53 = vld [vmem:[%s49 + $0x18] sm:$0xff]
  %v54 = vld [vmem:[%s49 + $0x20] sm:$0xff]
  %v55 = vld [vmem:[%s49 + $0x28] sm:$0xff]
  %v56 = vld [vmem:[%s49 + $0x30] sm:$0xff]
  %v57 = vld [vmem:[%s49 + $0x38] sm:$0xff]
  %v58 = vld [vmem:[%s49 + $0x40] sm:$0xff]
  %v59 = vld [vmem:[%s49 + $0x48] sm:$0xff]
  %v60 = vld [vmem:[%s49 + $0x50] sm:$0xff]
  %v61 = vld [vmem:[%s49 + $0x58] sm:$0xff]
  %v62 = vld [vmem:[%s49 + $0x60] sm:$0xff]
  %v63 = vld [vmem:[%s49 + $0x68] sm:$0xff]
  %v64 = vld [vmem:[%s49 + $0x70] sm:$0xff]
  %v65 = vld [vmem:[%s49 + $0x78] sm:$0xff]
  %v66 = vld [vmem:[%s49 + $0x80] sm:$0xff]
  %v67 = vld [vmem:[%s49 + $0x88] sm:$0xff]
  %v68 = vld [vmem:[%s49 + $0x90] sm:$0xff]
  %v69 = vld [vmem:[%s49 + $0x98] sm:$0xff]
  %v70 = vld [vmem:[%s49 + $0xa0] sm:$0xff]
  %v71 = vld [vmem:[%s49 + $0xa8] sm:$0xff]
  %v72 = vld [vmem:[%s49 + $0xb0] sm:$0xff]
  %v73 = vld [vmem:[%s49 + $0xb8] sm:$0xff]
  %v74 = vld [vmem:[%s49 + $0xc0] sm:$0xff]
  %v75 = vld [vmem:[%s49 + $0xc8] sm:$0xff]
  %v76 = vld [vmem:[%s49 + $0xd0] sm:$0xff]
  %v77 = vld [vmem:[%s49 + $0xd8] sm:$0xff]
  %v78 = vld [vmem:[%s49 + $0xe0] sm:$0xff]
  %v79 = vld [vmem:[%s49 + $0xe8] sm:$0xff]
  %v80 = vld [vmem:[%s49 + $0xf0] sm:$0xff]
  %v81 = vld [vmem:[%s49 + $0xf8] sm:$0xff]
  %v84 = vunpack.c.l.b16 %v15
  %v85 = vunpack.c.h.b16 %v15
  %v86 = vunpack.c.l.b16 %v48
  %v87 = vunpack.c.h.b16 %v48
  %v88 = vpack.c.b16 %v86, %v84
  %v89 = vpack.c.b16 %v87, %v85
  %v91 = vshrl.u32 %v88, 16
  %v93 = vshll.u32 %v88, 16
  %v95 = vrot.slane %v93, 1
  %v96 = vor.u32 %v91, %v95
  %v98 = vshrl.u32 %v89, 16
  %v100 = vshll.u32 %v89, 16
  %v102 = vrot.slane %v100, 1
  %v103 = vor.u32 %v98, %v102
  %v138 = vunpack.c.l.b16 %v50
  %v139 = vunpack.c.h.b16 %v50
  %v140 = vunpack.c.l.b16 %v51
  %v141 = vunpack.c.h.b16 %v51
  %v142 = vunpack.c.l.b16 %v52
  %v143 = vunpack.c.h.b16 %v52
  %v144 = vunpack.c.l.b16 %v53
  %v145 = vunpack.c.h.b16 %v53
  %v146 = vunpack.c.l.b16 %v54
  %v147 = vunpack.c.h.b16 %v54
  %v148 = vunpack.c.l.b16 %v55
  %v149 = vunpack.c.h.b16 %v55
  %v150 = vunpack.c.l.b16 %v56
  %v151 = vunpack.c.h.b16 %v56
  %v152 = vunpack.c.l.b16 %v57
  %v153 = vunpack.c.h.b16 %v57
  %v154 = vunpack.c.l.b16 %v58
  %v155 = vunpack.c.h.b16 %v58
  %v156 = vunpack.c.l.b16 %v59
  %v157 = vunpack.c.h.b16 %v59
  %v158 = vunpack.c.l.b16 %v60
  %v159 = vunpack.c.h.b16 %v60
  %v160 = vunpack.c.l.b16 %v61
  %v161 = vunpack.c.h.b16 %v61
  %v162 = vunpack.c.l.b16 %v62
  %v163 = vunpack.c.h.b16 %v62
  %v164 = vunpack.c.l.b16 %v63
  %v165 = vunpack.c.h.b16 %v63
  %v166 = vunpack.c.l.b16 %v64
  %v167 = vunpack.c.h.b16 %v64
  %v168 = vunpack.c.l.b16 %v65
  %v169 = vunpack.c.h.b16 %v65
  %v170 = vunpack.c.l.b16 %v66
  %v171 = vunpack.c.h.b16 %v66
  %v172 = vunpack.c.l.b16 %v67
  %v173 = vunpack.c.h.b16 %v67
  %v174 = vunpack.c.l.b16 %v68
  %v175 = vunpack.c.h.b16 %v68
  %v176 = vunpack.c.l.b16 %v69
  %v177 = vunpack.c.h.b16 %v69
  %v178 = vunpack.c.l.b16 %v70
  %v179 = vunpack.c.h.b16 %v70
  %v180 = vunpack.c.l.b16 %v71
  %v181 = vunpack.c.h.b16 %v71
  %v182 = vunpack.c.l.b16 %v72
  %v183 = vunpack.c.h.b16 %v72
  %v184 = vunpack.c.l.b16 %v73
  %v185 = vunpack.c.h.b16 %v73
  %v186 = vunpack.c.l.b16 %v74
  %v187 = vunpack.c.h.b16 %v74
  %v188 = vunpack.c.l.b16 %v75
  %v189 = vunpack.c.h.b16 %v75
  %v190 = vunpack.c.l.b16 %v76
  %v191 = vunpack.c.h.b16 %v76
  %v192 = vunpack.c.l.b16 %v77
  %v193 = vunpack.c.h.b16 %v77
  %v194 = vunpack.c.l.b16 %v78
  %v195 = vunpack.c.h.b16 %v78
  %v196 = vunpack.c.l.b16 %v79
  %v197 = vunpack.c.h.b16 %v79
  %v198 = vunpack.c.l.b16 %v80
  %v199 = vunpack.c.h.b16 %v80
  %v200 = vunpack.c.l.b16 %v81
  %v201 = vunpack.c.h.b16 %v81
  %v202 = vpack.c.b16 %v140, %v138
  %v203 = vpack.c.b16 %v141, %v139
  %v204 = vpack.c.b16 %v144, %v142
  %v205 = vpack.c.b16 %v145, %v143
  %v206 = vpack.c.b16 %v148, %v146
  %v207 = vpack.c.b16 %v149, %v147
  %v208 = vpack.c.b16 %v152, %v150
  %v209 = vpack.c.b16 %v153, %v151
  %v210 = vpack.c.b16 %v156, %v154
  %v211 = vpack.c.b16 %v157, %v155
  %v212 = vpack.c.b16 %v160, %v158
  %v213 = vpack.c.b16 %v161, %v159
  %v214 = vpack.c.b16 %v164, %v162
  %v215 = vpack.c.b16 %v165, %v163
  %v216 = vpack.c.b16 %v168, %v166
  %v217 = vpack.c.b16 %v169, %v167
  %v218 = vpack.c.b16 %v172, %v170
  %v219 = vpack.c.b16 %v173, %v171
  %v220 = vpack.c.b16 %v176, %v174
  %v221 = vpack.c.b16 %v177, %v175
  %v222 = vpack.c.b16 %v180, %v178
  %v223 = vpack.c.b16 %v181, %v179
  %v224 = vpack.c.b16 %v184, %v182
  %v225 = vpack.c.b16 %v185, %v183
  %v226 = vpack.c.b16 %v188, %v186
  %v227 = vpack.c.b16 %v189, %v187
  %v228 = vpack.c.b16 %v192, %v190
  %v229 = vpack.c.b16 %v193, %v191
  %v230 = vpack.c.b16 %v196, %v194
  %v231 = vpack.c.b16 %v197, %v195
  %v232 = vpack.c.b16 %v200, %v198
  %v233 = vpack.c.b16 %v201, %v199
  %266 = vmatprep.subr.bf16.mxu0 %v203
  %267 = vmatpush1.bf16.msra.mxu0 %v202
  %268 = vmatprep.subr.bf16.mxu0 %v205
  %269 = vmatpush1.bf16.msra.mxu0 %v204
  %270 = vmatprep.subr.bf16.mxu0 %v207
  %271 = vmatpush1.bf16.msra.mxu0 %v206
  %272 = vmatprep.subr.bf16.mxu0 %v209
  %273 = vmatpush1.bf16.msra.mxu0 %v208
  %274 = vmatprep.subr.bf16.mxu0 %v211
  %275 = vmatpush1.bf16.msra.mxu0 %v210
  %276 = vmatprep.subr.bf16.mxu0 %v213
  %277 = vmatpush1.bf16.msra.mxu0 %v212
  %278 = vmatprep.subr.bf16.mxu0 %v215
  %279 = vmatpush1.bf16.msra.mxu0 %v214
  %280 = vmatprep.subr.bf16.mxu0 %v217
  %281 = vmatpush1.bf16.msra.mxu0 %v216
  %282 = vmatprep.subr.bf16.mxu0 %v219
  %283 = vmatpush1.bf16.msra.mxu0 %v218
  %284 = vmatprep.subr.bf16.mxu0 %v221
  %285 = vmatpush1.bf16.msra.mxu0 %v220
  %286 = vmatprep.subr.bf16.mxu0 %v223
  %287 = vmatpush1.bf16.msra.mxu0 %v222
  %288 = vmatprep.subr.bf16.mxu0 %v225
  %289 = vmatpush1.bf16.msra.mxu0 %v224
  %290 = vmatprep.subr.bf16.mxu0 %v227
  %291 = vmatpush1.bf16.msra.mxu0 %v226
  %292 = vmatprep.subr.bf16.mxu0 %v229
  %293 = vmatpush1.bf16.msra.mxu0 %v228
  %294 = vmatprep.subr.bf16.mxu0 %v231
  %295 = vmatpush1.bf16.msra.mxu0 %v230
  %296 = vmatprep.subr.bf16.mxu0 %v233
  %297 = vmatpush1.bf16.msra.mxu0 %v232
  %298 = vmatprep.mubr.bf16.mxu0 %v103
  %299 = vmatmul.mubr.bf16.gmra.mrb[0].mxu0 %v96
  %v300 = vpop.f32.mrb[0].mxu0
  %v301 = vadd.f32 0.0, %v300
  %v302 = vpop.f32.mrb[0].mxu0
  %v303 = vadd.f32 0.0, %v302
  %v304 = vpop.f32.mrb[0].mxu0
  %v305 = vpop.f32.mrb[0].mxu0
  %306 = vdwg.mxu0
  %v307 = vpack.c.b16 %v84, %v84
  %v308 = vpack.c.b16 %v85, %v85
  %v343 = vunpack.c.l.b16 %v16
  %v344 = vunpack.c.h.b16 %v16
  %v345 = vunpack.c.l.b16 %v17
  %v346 = vunpack.c.h.b16 %v17
  %v347 = vunpack.c.l.b16 %v18
  %v348 = vunpack.c.h.b16 %v18
  %v349 = vunpack.c.l.b16 %v19
  %v350 = vunpack.c.h.b16 %v19
  %v351 = vunpack.c.l.b16 %v20
  %v352 = vunpack.c.h.b16 %v20
  %v353 = vunpack.c.l.b16 %v21
  %v354 = vunpack.c.h.b16 %v21
  %v355 = vunpack.c.l.b16 %v22
  %v356 = vunpack.c.h.b16 %v22
  %v357 = vunpack.c.l.b16 %v23
  %v358 = vunpack.c.h.b16 %v23
  %v359 = vunpack.c.l.b16 %v24
  %v360 = vunpack.c.h.b16 %v24
  %v361 = vunpack.c.l.b16 %v25
  %v362 = vunpack.c.h.b16 %v25
  %v363 = vunpack.c.l.b16 %v26
  %v364 = vunpack.c.h.b16 %v26
  %v365 = vunpack.c.l.b16 %v27
  %v366 = vunpack.c.h.b16 %v27
  %v367 = vunpack.c.l.b16 %v28
  %v368 = vunpack.c.h.b16 %v28
  %v369 = vunpack.c.l.b16 %v29
  %v370 = vunpack.c.h.b16 %v29
  %v371 = vunpack.c.l.b16 %v30
  %v372 = vunpack.c.h.b16 %v30
  %v373 = vunpack.c.l.b16 %v31
  %v374 = vunpack.c.h.b16 %v31
  %v375 = vunpack.c.l.b16 %v32
  %v376 = vunpack.c.h.b16 %v32
  %v377 = vunpack.c.l.b16 %v33
  %v378 = vunpack.c.h.b16 %v33
  %v379 = vunpack.c.l.b16 %v34
  %v380 = vunpack.c.h.b16 %v34
  %v381 = vunpack.c.l.b16 %v35
  %v382 = vunpack.c.h.b16 %v35
  %v383 = vunpack.c.l.b16 %v36
  %v384 = vunpack.c.h.b16 %v36
  %v385 = vunpack.c.l.b16 %v37
  %v386 = vunpack.c.h.b16 %v37
  %v387 = vunpack.c.l.b16 %v38
  %v388 = vunpack.c.h.b16 %v38
  %v389 = vunpack.c.l.b16 %v39
  %v390 = vunpack.c.h.b16 %v39
  %v391 = vunpack.c.l.b16 %v40
  %v392 = vunpack.c.h.b16 %v40
  %v393 = vunpack.c.l.b16 %v41
  %v394 = vunpack.c.h.b16 %v41
  %v395 = vunpack.c.l.b16 %v42
  %v396 = vunpack.c.h.b16 %v42
  %v397 = vunpack.c.l.b16 %v43
  %v398 = vunpack.c.h.b16 %v43
  %v399 = vunpack.c.l.b16 %v44
  %v400 = vunpack.c.h.b16 %v44
  %v401 = vunpack.c.l.b16 %v45
  %v402 = vunpack.c.h.b16 %v45
  %v403 = vunpack.c.l.b16 %v46
  %v404 = vunpack.c.h.b16 %v46
  %v405 = vunpack.c.l.b16 %v47
  %v406 = vunpack.c.h.b16 %v47
  %v407 = vpack.c.b16 %v345, %v343
  %v408 = vpack.c.b16 %v346, %v344
  %v409 = vpack.c.b16 %v349, %v347
  %v410 = vpack.c.b16 %v350, %v348
  %v411 = vpack.c.b16 %v353, %v351
  %v412 = vpack.c.b16 %v354, %v352
  %v413 = vpack.c.b16 %v357, %v355
  %v414 = vpack.c.b16 %v358, %v356
  %v415 = vpack.c.b16 %v361, %v359
  %v416 = vpack.c.b16 %v362, %v360
  %v417 = vpack.c.b16 %v365, %v363
  %v418 = vpack.c.b16 %v366, %v364
  %v419 = vpack.c.b16 %v369, %v367
  %v420 = vpack.c.b16 %v370, %v368
  %v421 = vpack.c.b16 %v373, %v371
  %v422 = vpack.c.b16 %v374, %v372
  %v423 = vpack.c.b16 %v377, %v375
  %v424 = vpack.c.b16 %v378, %v376
  %v425 = vpack.c.b16 %v381, %v379
  %v426 = vpack.c.b16 %v382, %v380
  %v427 = vpack.c.b16 %v385, %v383
  %v428 = vpack.c.b16 %v386, %v384
  %v429 = vpack.c.b16 %v389, %v387
  %v430 = vpack.c.b16 %v390, %v388
  %v431 = vpack.c.b16 %v393, %v391
  %v432 = vpack.c.b16 %v394, %v392
  %v433 = vpack.c.b16 %v397, %v395
  %v434 = vpack.c.b16 %v398, %v396
  %v435 = vpack.c.b16 %v401, %v399
  %v436 = vpack.c.b16 %v402, %v400
  %v437 = vpack.c.b16 %v405, %v403
  %v438 = vpack.c.b16 %v406, %v404
  %471 = vmatprep.subr.bf16.mxu0 %v408
  %472 = vmatpush1.bf16.msra.mxu0 %v407
  %473 = vmatprep.subr.bf16.mxu0 %v410
  %474 = vmatpush1.bf16.msra.mxu0 %v409
  %475 = vmatprep.subr.bf16.mxu0 %v412
  %476 = vmatpush1.bf16.msra.mxu0 %v411
  %477 = vmatprep.subr.bf16.mxu0 %v414
  %478 = vmatpush1.bf16.msra.mxu0 %v413
  %479 = vmatprep.subr.bf16.mxu0 %v416
  %480 = vmatpush1.bf16.msra.mxu0 %v415
  %481 = vmatprep.subr.bf16.mxu0 %v418
  %482 = vmatpush1.bf16.msra.mxu0 %v417
  %483 = vmatprep.subr.bf16.mxu0 %v420
  %484 = vmatpush1.bf16.msra.mxu0 %v419
  %485 = vmatprep.subr.bf16.mxu0 %v422
  %486 = vmatpush1.bf16.msra.mxu0 %v421
  %487 = vmatprep.subr.bf16.mxu0 %v424
  %488 = vmatpush1.bf16.msra.mxu0 %v423
  %489 = vmatprep.subr.bf16.mxu0 %v426
  %490 = vmatpush1.bf16.msra.mxu0 %v425
  %491 = vmatprep.subr.bf16.mxu0 %v428
  %492 = vmatpush1.bf16.msra.mxu0 %v427
  %493 = vmatprep.subr.bf16.mxu0 %v430
  %494 = vmatpush1.bf16.msra.mxu0 %v429
  %495 = vmatprep.subr.bf16.mxu0 %v432
  %496 = vmatpush1.bf16.msra.mxu0 %v431
  %497 = vmatprep.subr.bf16.mxu0 %v434
  %498 = vmatpush1.bf16.msra.mxu0 %v433
  %499 = vmatprep.subr.bf16.mxu0 %v436
  %500 = vmatpush1.bf16.msra.mxu0 %v435
  %501 = vmatprep.subr.bf16.mxu0 %v438
  %502 = vmatpush1.bf16.msra.mxu0 %v437
  %503 = vmatprep.mubr.bf16.mxu0 %v308
  %504 = vmatmul.mubr.bf16.gmra.mrb[0].mxu0 %v307
  %v505 = vpop.f32.mrb[0].mxu0
  %v506 = vadd.f32 %v301, %v505
  %v507 = vpop.f32.mrb[0].mxu0
  %v508 = vadd.f32 %v303, %v507
  %v509 = vpop.f32.mrb[0].mxu0
  %v510 = vpop.f32.mrb[0].mxu0
  %511 = vdwg.mxu0
  %v512 = vld [vmem:[%s0] sm:$0xee]
  %s513 = scalar_lea.vmem %s1, 512
  %v514 = vld [vmem:[%s513] sm:$0xff]
  %v515 = vld [vmem:[%s513 + $0x8] sm:$0xff]
  %v516 = vld [vmem:[%s513 + $0x10] sm:$0xff]
  %v517 = vld [vmem:[%s513 + $0x18] sm:$0xff]
  %v518 = vld [vmem:[%s513 + $0x20] sm:$0xff]
  %v519 = vld [vmem:[%s513 + $0x28] sm:$0xff]
  %v520 = vld [vmem:[%s513 + $0x30] sm:$0xff]
  %v521 = vld [vmem:[%s513 + $0x38] sm:$0xff]
  %v522 = vld [vmem:[%s513 + $0x40] sm:$0xff]
  %v523 = vld [vmem:[%s513 + $0x48] sm:$0xff]
  %v524 = vld [vmem:[%s513 + $0x50] sm:$0xff]
  %v525 = vld [vmem:[%s513 + $0x58] sm:$0xff]
  %v526 = vld [vmem:[%s513 + $0x60] sm:$0xff]
  %v527 = vld [vmem:[%s513 + $0x68] sm:$0xff]
  %v528 = vld [vmem:[%s513 + $0x70] sm:$0xff]
  %v529 = vld [vmem:[%s513 + $0x78] sm:$0xff]
  %v530 = vld [vmem:[%s513 + $0x80] sm:$0xff]
  %v531 = vld [vmem:[%s513 + $0x88] sm:$0xff]
  %v532 = vld [vmem:[%s513 + $0x90] sm:$0xff]
  %v533 = vld [vmem:[%s513 + $0x98] sm:$0xff]
  %v534 = vld [vmem:[%s513 + $0xa0] sm:$0xff]
  %v535 = vld [vmem:[%s513 + $0xa8] sm:$0xff]
  %v536 = vld [vmem:[%s513 + $0xb0] sm:$0xff]
  %v537 = vld [vmem:[%s513 + $0xb8] sm:$0xff]
  %v538 = vld [vmem:[%s513 + $0xc0] sm:$0xff]
  %v539 = vld [vmem:[%s513 + $0xc8] sm:$0xff]
  %v540 = vld [vmem:[%s513 + $0xd0] sm:$0xff]
  %v541 = vld [vmem:[%s513 + $0xd8] sm:$0xff]
  %v542 = vld [vmem:[%s513 + $0xe0] sm:$0xff]
  %v543 = vld [vmem:[%s513 + $0xe8] sm:$0xff]
  %v544 = vld [vmem:[%s513 + $0xf0] sm:$0xff]
  %v545 = vld [vmem:[%s513 + $0xf8] sm:$0xff]
  %v547 = vunpack.c.l.b16 %v512
  %v548 = vunpack.c.h.b16 %v512
  %v549 = vpack.c.b16 %v86, %v547
  %v550 = vpack.c.b16 %v87, %v548
  %v551 = vrot.slane %v549, 1
  %v552 = vrot.slane %v550, 1
  %v587 = vunpack.c.l.b16 %v514
  %v588 = vunpack.c.h.b16 %v514
  %v589 = vunpack.c.l.b16 %v515
  %v590 = vunpack.c.h.b16 %v515
  %v591 = vunpack.c.l.b16 %v516
  %v592 = vunpack.c.h.b16 %v516
  %v593 = vunpack.c.l.b16 %v517
  %v594 = vunpack.c.h.b16 %v517
  %v595 = vunpack.c.l.b16 %v518
  %v596 = vunpack.c.h.b16 %v518
  %v597 = vunpack.c.l.b16 %v519
  %v598 = vunpack.c.h.b16 %v519
  %v599 = vunpack.c.l.b16 %v520
  %v600 = vunpack.c.h.b16 %v520
  %v601 = vunpack.c.l.b16 %v521
  %v602 = vunpack.c.h.b16 %v521
  %v603 = vunpack.c.l.b16 %v522
  %v604 = vunpack.c.h.b16 %v522
  %v605 = vunpack.c.l.b16 %v523
  %v606 = vunpack.c.h.b16 %v523
  %v607 = vunpack.c.l.b16 %v524
  %v608 = vunpack.c.h.b16 %v524
  %v609 = vunpack.c.l.b16 %v525
  %v610 = vunpack.c.h.b16 %v525
  %v611 = vunpack.c.l.b16 %v526
  %v612 = vunpack.c.h.b16 %v526
  %v613 = vunpack.c.l.b16 %v527
  %v614 = vunpack.c.h.b16 %v527
  %v615 = vunpack.c.l.b16 %v528
  %v616 = vunpack.c.h.b16 %v528
  %v617 = vunpack.c.l.b16 %v529
  %v618 = vunpack.c.h.b16 %v529
  %v619 = vunpack.c.l.b16 %v530
  %v620 = vunpack.c.h.b16 %v530
  %v621 = vunpack.c.l.b16 %v531
  %v622 = vunpack.c.h.b16 %v531
  %v623 = vunpack.c.l.b16 %v532
  %v624 = vunpack.c.h.b16 %v532
  %v625 = vunpack.c.l.b16 %v533
  %v626 = vunpack.c.h.b16 %v533
  %v627 = vunpack.c.l.b16 %v534
  %v628 = vunpack.c.h.b16 %v534
  %v629 = vunpack.c.l.b16 %v535
  %v630 = vunpack.c.h.b16 %v535
  %v631 = vunpack.c.l.b16 %v536
  %v632 = vunpack.c.h.b16 %v536
  %v633 = vunpack.c.l.b16 %v537
  %v634 = vunpack.c.h.b16 %v537
  %v635 = vunpack.c.l.b16 %v538
  %v636 = vunpack.c.h.b16 %v538
  %v637 = vunpack.c.l.b16 %v539
  %v638 = vunpack.c.h.b16 %v539
  %v639 = vunpack.c.l.b16 %v540
  %v640 = vunpack.c.h.b16 %v540
  %v641 = vunpack.c.l.b16 %v541
  %v642 = vunpack.c.h.b16 %v541
  %v643 = vunpack.c.l.b16 %v542
  %v644 = vunpack.c.h.b16 %v542
  %v645 = vunpack.c.l.b16 %v543
  %v646 = vunpack.c.h.b16 %v543
  %v647 = vunpack.c.l.b16 %v544
  %v648 = vunpack.c.h.b16 %v544
  %v649 = vunpack.c.l.b16 %v545
  %v650 = vunpack.c.h.b16 %v545
  %v651 = vpack.c.b16 %v589, %v587
  %v652 = vpack.c.b16 %v590, %v588
  %v653 = vpack.c.b16 %v593, %v591
  %v654 = vpack.c.b16 %v594, %v592
  %v655 = vpack.c.b16 %v597, %v595
  %v656 = vpack.c.b16 %v598, %v596
  %v657 = vpack.c.b16 %v601, %v599
  %v658 = vpack.c.b16 %v602, %v600
  %v659 = vpack.c.b16 %v605, %v603
  %v660 = vpack.c.b16 %v606, %v604
  %v661 = vpack.c.b16 %v609, %v607
  %v662 = vpack.c.b16 %v610, %v608
  %v663 = vpack.c.b16 %v613, %v611
  %v664 = vpack.c.b16 %v614, %v612
  %v665 = vpack.c.b16 %v617, %v615
  %v666 = vpack.c.b16 %v618, %v616
  %v667 = vpack.c.b16 %v621, %v619
  %v668 = vpack.c.b16 %v622, %v620
  %v669 = vpack.c.b16 %v625, %v623
  %v670 = vpack.c.b16 %v626, %v624
  %v671 = vpack.c.b16 %v629, %v627
  %v672 = vpack.c.b16 %v630, %v628
  %v673 = vpack.c.b16 %v633, %v631
  %v674 = vpack.c.b16 %v634, %v632
  %v675 = vpack.c.b16 %v637, %v635
  %v676 = vpack.c.b16 %v638, %v636
  %v677 = vpack.c.b16 %v641, %v639
  %v678 = vpack.c.b16 %v642, %v640
  %v679 = vpack.c.b16 %v645, %v643
  %v680 = vpack.c.b16 %v646, %v644
  %v681 = vpack.c.b16 %v649, %v647
  %v682 = vpack.c.b16 %v650, %v648
  %715 = vmatprep.subr.bf16.mxu0 %v652
  %716 = vmatpush1.bf16.msra.mxu0 %v651
  %717 = vmatprep.subr.bf16.mxu0 %v654
  %718 = vmatpush1.bf16.msra.mxu0 %v653
  %719 = vmatprep.subr.bf16.mxu0 %v656
  %720 = vmatpush1.bf16.msra.mxu0 %v655
  %721 = vmatprep.subr.bf16.mxu0 %v658
  %722 = vmatpush1.bf16.msra.mxu0 %v657
  %723 = vmatprep.subr.bf16.mxu0 %v660
  %724 = vmatpush1.bf16.msra.mxu0 %v659
  %725 = vmatprep.subr.bf16.mxu0 %v662
  %726 = vmatpush1.bf16.msra.mxu0 %v661
  %727 = vmatprep.subr.bf16.mxu0 %v664
  %728 = vmatpush1.bf16.msra.mxu0 %v663
  %729 = vmatprep.subr.bf16.mxu0 %v666
  %730 = vmatpush1.bf16.msra.mxu0 %v665
  %731 = vmatprep.subr.bf16.mxu0 %v668
  %732 = vmatpush1.bf16.msra.mxu0 %v667
  %733 = vmatprep.subr.bf16.mxu0 %v670
  %734 = vmatpush1.bf16.msra.mxu0 %v669
  %735 = vmatprep.subr.bf16.mxu0 %v672
  %736 = vmatpush1.bf16.msra.mxu0 %v671
  %737 = vmatprep.subr.bf16.mxu0 %v674
  %738 = vmatpush1.bf16.msra.mxu0 %v673
  %739 = vmatprep.subr.bf16.mxu0 %v676
  %740 = vmatpush1.bf16.msra.mxu0 %v675
  %741 = vmatprep.subr.bf16.mxu0 %v678
  %742 = vmatpush1.bf16.msra.mxu0 %v677
  %743 = vmatprep.subr.bf16.mxu0 %v680
  %744 = vmatpush1.bf16.msra.mxu0 %v679
  %745 = vmatprep.subr.bf16.mxu0 %v682
  %746 = vmatpush1.bf16.msra.mxu0 %v681
  %747 = vmatprep.mubr.bf16.mxu0 %v552
  %748 = vmatmul.mubr.bf16.gmra.mrb[0].mxu0 %v551
  %v749 = vpop.f32.mrb[0].mxu0
  %v750 = vadd.f32 0.0, %v749
  %v751 = vpop.f32.mrb[0].mxu0
  %v752 = vadd.f32 0.0, %v751
  %v753 = vpop.f32.mrb[0].mxu0
  %v754 = vpop.f32.mrb[0].mxu0
  %755 = vdwg.mxu0
  %v756 = vadd.f32 %v506, %v750
  %v757 = vadd.f32 %v508, %v752
  %v758 = vld [vmem:[%s0 + $0x8] sm:$0x33]
  %s759 = scalar_lea.vmem %s1, 768
  %v760 = vld [vmem:[%s759] sm:$0xff]
  %v761 = vld [vmem:[%s759 + $0x8] sm:$0xff]
  %v762 = vld [vmem:[%s759 + $0x10] sm:$0xff]
  %v763 = vld [vmem:[%s759 + $0x18] sm:$0xff]
  %v764 = vld [vmem:[%s759 + $0x20] sm:$0xff]
  %v765 = vld [vmem:[%s759 + $0x28] sm:$0xff]
  %v766 = vld [vmem:[%s759 + $0x30] sm:$0xff]
  %v767 = vld [vmem:[%s759 + $0x38] sm:$0xff]
  %v768 = vld [vmem:[%s759 + $0x40] sm:$0xff]
  %v769 = vld [vmem:[%s759 + $0x48] sm:$0xff]
  %v770 = vld [vmem:[%s759 + $0x50] sm:$0xff]
  %v771 = vld [vmem:[%s759 + $0x58] sm:$0xff]
  %v772 = vld [vmem:[%s759 + $0x60] sm:$0xff]
  %v773 = vld [vmem:[%s759 + $0x68] sm:$0xff]
  %v774 = vld [vmem:[%s759 + $0x70] sm:$0xff]
  %v775 = vld [vmem:[%s759 + $0x78] sm:$0xff]
  %v776 = vld [vmem:[%s759 + $0x80] sm:$0xff]
  %v777 = vld [vmem:[%s759 + $0x88] sm:$0xff]
  %v778 = vld [vmem:[%s759 + $0x90] sm:$0xff]
  %v779 = vld [vmem:[%s759 + $0x98] sm:$0xff]
  %v780 = vld [vmem:[%s759 + $0xa0] sm:$0xff]
  %v781 = vld [vmem:[%s759 + $0xa8] sm:$0xff]
  %v782 = vld [vmem:[%s759 + $0xb0] sm:$0xff]
  %v783 = vld [vmem:[%s759 + $0xb8] sm:$0xff]
  %v784 = vld [vmem:[%s759 + $0xc0] sm:$0xff]
  %v785 = vld [vmem:[%s759 + $0xc8] sm:$0xff]
  %v786 = vld [vmem:[%s759 + $0xd0] sm:$0xff]
  %v787 = vld [vmem:[%s759 + $0xd8] sm:$0xff]
  %v788 = vld [vmem:[%s759 + $0xe0] sm:$0xff]
  %v789 = vld [vmem:[%s759 + $0xe8] sm:$0xff]
  %v790 = vld [vmem:[%s759 + $0xf0] sm:$0xff]
  %v791 = vld [vmem:[%s759 + $0xf8] sm:$0xff]
  %v793 = vunpack.c.l.b16 %v758
  %v794 = vunpack.c.h.b16 %v758
  %v795 = vpack.c.b16 %v793, %v547
  %v796 = vpack.c.b16 %v794, %v548
  %v798 = vshrl.u32 %v795, 16
  %v800 = vrot.slane %v798, 1
  %v801 = vshll.u32 %v795, 16
  %v803 = vrot.slane %v801, 2
  %v804 = vor.u32 %v800, %v803
  %v806 = vshrl.u32 %v796, 16
  %v808 = vrot.slane %v806, 1
  %v809 = vshll.u32 %v796, 16
  %v811 = vrot.slane %v809, 2
  %v812 = vor.u32 %v808, %v811
  %v847 = vunpack.c.l.b16 %v760
  %v848 = vunpack.c.h.b16 %v760
  %v849 = vunpack.c.l.b16 %v761
  %v850 = vunpack.c.h.b16 %v761
  %v851 = vunpack.c.l.b16 %v762
  %v852 = vunpack.c.h.b16 %v762
  %v853 = vunpack.c.l.b16 %v763
  %v854 = vunpack.c.h.b16 %v763
  %v855 = vunpack.c.l.b16 %v764
  %v856 = vunpack.c.h.b16 %v764
  %v857 = vunpack.c.l.b16 %v765
  %v858 = vunpack.c.h.b16 %v765
  %v859 = vunpack.c.l.b16 %v766
  %v860 = vunpack.c.h.b16 %v766
  %v861 = vunpack.c.l.b16 %v767
  %v862 = vunpack.c.h.b16 %v767
  %v863 = vunpack.c.l.b16 %v768
  %v864 = vunpack.c.h.b16 %v768
  %v865 = vunpack.c.l.b16 %v769
  %v866 = vunpack.c.h.b16 %v769
  %v867 = vunpack.c.l.b16 %v770
  %v868 = vunpack.c.h.b16 %v770
  %v869 = vunpack.c.l.b16 %v771
  %v870 = vunpack.c.h.b16 %v771
  %v871 = vunpack.c.l.b16 %v772
  %v872 = vunpack.c.h.b16 %v772
  %v873 = vunpack.c.l.b16 %v773
  %v874 = vunpack.c.h.b16 %v773
  %v875 = vunpack.c.l.b16 %v774
  %v876 = vunpack.c.h.b16 %v774
  %v877 = vunpack.c.l.b16 %v775
  %v878 = vunpack.c.h.b16 %v775
  %v879 = vunpack.c.l.b16 %v776
  %v880 = vunpack.c.h.b16 %v776
  %v881 = vunpack.c.l.b16 %v777
  %v882 = vunpack.c.h.b16 %v777
  %v883 = vunpack.c.l.b16 %v778
  %v884 = vunpack.c.h.b16 %v778
  %v885 = vunpack.c.l.b16 %v779
  %v886 = vunpack.c.h.b16 %v779
  %v887 = vunpack.c.l.b16 %v780
  %v888 = vunpack.c.h.b16 %v780
  %v889 = vunpack.c.l.b16 %v781
  %v890 = vunpack.c.h.b16 %v781
  %v891 = vunpack.c.l.b16 %v782
  %v892 = vunpack.c.h.b16 %v782
  %v893 = vunpack.c.l.b16 %v783
  %v894 = vunpack.c.h.b16 %v783
  %v895 = vunpack.c.l.b16 %v784
  %v896 = vunpack.c.h.b16 %v784
  %v897 = vunpack.c.l.b16 %v785
  %v898 = vunpack.c.h.b16 %v785
  %v899 = vunpack.c.l.b16 %v786
  %v900 = vunpack.c.h.b16 %v786
  %v901 = vunpack.c.l.b16 %v787
  %v902 = vunpack.c.h.b16 %v787
  %v903 = vunpack.c.l.b16 %v788
  %v904 = vunpack.c.h.b16 %v788
  %v905 = vunpack.c.l.b16 %v789
  %v906 = vunpack.c.h.b16 %v789
  %v907 = vunpack.c.l.b16 %v790
  %v908 = vunpack.c.h.b16 %v790
  %v909 = vunpack.c.l.b16 %v791
  %v910 = vunpack.c.h.b16 %v791
  %v911 = vpack.c.b16 %v849, %v847
  %v912 = vpack.c.b16 %v850, %v848
  %v913 = vpack.c.b16 %v853, %v851
  %v914 = vpack.c.b16 %v854, %v852
  %v915 = vpack.c.b16 %v857, %v855
  %v916 = vpack.c.b16 %v858, %v856
  %v917 = vpack.c.b16 %v861, %v859
  %v918 = vpack.c.b16 %v862, %v860
  %v919 = vpack.c.b16 %v865, %v863
  %v920 = vpack.c.b16 %v866, %v864
  %v921 = vpack.c.b16 %v869, %v867
  %v922 = vpack.c.b16 %v870, %v868
  %v923 = vpack.c.b16 %v873, %v871
  %v924 = vpack.c.b16 %v874, %v872
  %v925 = vpack.c.b16 %v877, %v875
  %v926 = vpack.c.b16 %v878, %v876
  %v927 = vpack.c.b16 %v881, %v879
  %v928 = vpack.c.b16 %v882, %v880
  %v929 = vpack.c.b16 %v885, %v883
  %v930 = vpack.c.b16 %v886, %v884
  %v931 = vpack.c.b16 %v889, %v887
  %v932 = vpack.c.b16 %v890, %v888
  %v933 = vpack.c.b16 %v893, %v891
  %v934 = vpack.c.b16 %v894, %v892
  %v935 = vpack.c.b16 %v897, %v895
  %v936 = vpack.c.b16 %v898, %v896
  %v937 = vpack.c.b16 %v901, %v899
  %v938 = vpack.c.b16 %v902, %v900
  %v939 = vpack.c.b16 %v905, %v903
  %v940 = vpack.c.b16 %v906, %v904
  %v941 = vpack.c.b16 %v909, %v907
  %v942 = vpack.c.b16 %v910, %v908
  %975 = vmatprep.subr.bf16.mxu0 %v912
  %976 = vmatpush1.bf16.msra.mxu0 %v911
  %977 = vmatprep.subr.bf16.mxu0 %v914
  %978 = vmatpush1.bf16.msra.mxu0 %v913
  %979 = vmatprep.subr.bf16.mxu0 %v916
  %980 = vmatpush1.bf16.msra.mxu0 %v915
  %981 = vmatprep.subr.bf16.mxu0 %v918
  %982 = vmatpush1.bf16.msra.mxu0 %v917
  %983 = vmatprep.subr.bf16.mxu0 %v920
  %984 = vmatpush1.bf16.msra.mxu0 %v919
  %985 = vmatprep.subr.bf16.mxu0 %v922
  %986 = vmatpush1.bf16.msra.mxu0 %v921
  %987 = vmatprep.subr.bf16.mxu0 %v924
  %988 = vmatpush1.bf16.msra.mxu0 %v923
  %989 = vmatprep.subr.bf16.mxu0 %v926
  %990 = vmatpush1.bf16.msra.mxu0 %v925
  %991 = vmatprep.subr.bf16.mxu0 %v928
  %992 = vmatpush1.bf16.msra.mxu0 %v927
  %993 = vmatprep.subr.bf16.mxu0 %v930
  %994 = vmatpush1.bf16.msra.mxu0 %v929
  %995 = vmatprep.subr.bf16.mxu0 %v932
  %996 = vmatpush1.bf16.msra.mxu0 %v931
  %997 = vmatprep.subr.bf16.mxu0 %v934
  %998 = vmatpush1.bf16.msra.mxu0 %v933
  %999 = vmatprep.subr.bf16.mxu0 %v936
  %1000 = vmatpush1.bf16.msra.mxu0 %v935
  %1001 = vmatprep.subr.bf16.mxu0 %v938
  %1002 = vmatpush1.bf16.msra.mxu0 %v937
  %1003 = vmatprep.subr.bf16.mxu0 %v940
  %1004 = vmatpush1.bf16.msra.mxu0 %v939
  %1005 = vmatprep.subr.bf16.mxu0 %v942
  %1006 = vmatpush1.bf16.msra.mxu0 %v941
  %1007 = vmatprep.mubr.bf16.mxu0 %v812
  %1008 = vmatmul.mubr.bf16.gmra.mrb[0].mxu0 %v804
  %v1009 = vpop.f32.mrb[0].mxu0
  %v1010 = vadd.f32 0.0, %v1009
  %v1011 = vpop.f32.mrb[0].mxu0
  %v1012 = vadd.f32 0.0, %v1011
  %v1013 = vpop.f32.mrb[0].mxu0
  %v1014 = vpop.f32.mrb[0].mxu0
  %1015 = vdwg.mxu0
  %v1016 = vadd.f32 %v756, %v1010
  %v1017 = vadd.f32 %v757, %v1012
  %v1018 = vld [vmem:[%s0] sm:$0xcc]
  %s1019 = scalar_lea.vmem %s1, 1024
  %v1020 = vld [vmem:[%s1019] sm:$0xff]
  %v1021 = vld [vmem:[%s1019 + $0x8] sm:$0xff]
  %v1022 = vld [vmem:[%s1019 + $0x10] sm:$0xff]
  %v1023 = vld [vmem:[%s1019 + $0x18] sm:$0xff]
  %v1024 = vld [vmem:[%s1019 + $0x20] sm:$0xff]
  %v1025 = vld [vmem:[%s1019 + $0x28] sm:$0xff]
  %v1026 = vld [vmem:[%s1019 + $0x30] sm:$0xff]
  %v1027 = vld [vmem:[%s1019 + $0x38] sm:$0xff]
  %v1028 = vld [vmem:[%s1019 + $0x40] sm:$0xff]
  %v1029 = vld [vmem:[%s1019 + $0x48] sm:$0xff]
  %v1030 = vld [vmem:[%s1019 + $0x50] sm:$0xff]
  %v1031 = vld [vmem:[%s1019 + $0x58] sm:$0xff]
  %v1032 = vld [vmem:[%s1019 + $0x60] sm:$0xff]
  %v1033 = vld [vmem:[%s1019 + $0x68] sm:$0xff]
  %v1034 = vld [vmem:[%s1019 + $0x70] sm:$0xff]
  %v1035 = vld [vmem:[%s1019 + $0x78] sm:$0xff]
  %v1036 = vld [vmem:[%s1019 + $0x80] sm:$0xff]
  %v1037 = vld [vmem:[%s1019 + $0x88] sm:$0xff]
  %v1038 = vld [vmem:[%s1019 + $0x90] sm:$0xff]
  %v1039 = vld [vmem:[%s1019 + $0x98] sm:$0xff]
  %v1040 = vld [vmem:[%s1019 + $0xa0] sm:$0xff]
  %v1041 = vld [vmem:[%s1019 + $0xa8] sm:$0xff]
  %v1042 = vld [vmem:[%s1019 + $0xb0] sm:$0xff]
  %v1043 = vld [vmem:[%s1019 + $0xb8] sm:$0xff]
  %v1044 = vld [vmem:[%s1019 + $0xc0] sm:$0xff]
  %v1045 = vld [vmem:[%s1019 + $0xc8] sm:$0xff]
  %v1046 = vld [vmem:[%s1019 + $0xd0] sm:$0xff]
  %v1047 = vld [vmem:[%s1019 + $0xd8] sm:$0xff]
  %v1048 = vld [vmem:[%s1019 + $0xe0] sm:$0xff]
  %v1049 = vld [vmem:[%s1019 + $0xe8] sm:$0xff]
  %v1050 = vld [vmem:[%s1019 + $0xf0] sm:$0xff]
  %v1051 = vld [vmem:[%s1019 + $0xf8] sm:$0xff]
  %v1053 = vunpack.c.l.b16 %v1018
  %v1054 = vunpack.c.h.b16 %v1018
  %v1055 = vpack.c.b16 %v793, %v1053
  %v1056 = vpack.c.b16 %v794, %v1054
  %v1057 = vrot.slane %v1055, 2
  %v1058 = vrot.slane %v1056, 2
  %v1093 = vunpack.c.l.b16 %v1020
  %v1094 = vunpack.c.h.b16 %v1020
  %v1095 = vunpack.c.l.b16 %v1021
  %v1096 = vunpack.c.h.b16 %v1021
  %v1097 = vunpack.c.l.b16 %v1022
  %v1098 = vunpack.c.h.b16 %v1022
  %v1099 = vunpack.c.l.b16 %v1023
  %v1100 = vunpack.c.h.b16 %v1023
  %v1101 = vunpack.c.l.b16 %v1024
  %v1102 = vunpack.c.h.b16 %v1024
  %v1103 = vunpack.c.l.b16 %v1025
  %v1104 = vunpack.c.h.b16 %v1025
  %v1105 = vunpack.c.l.b16 %v1026
  %v1106 = vunpack.c.h.b16 %v1026
  %v1107 = vunpack.c.l.b16 %v1027
  %v1108 = vunpack.c.h.b16 %v1027
  %v1109 = vunpack.c.l.b16 %v1028
  %v1110 = vunpack.c.h.b16 %v1028
  %v1111 = vunpack.c.l.b16 %v1029
  %v1112 = vunpack.c.h.b16 %v1029
  %v1113 = vunpack.c.l.b16 %v1030
  %v1114 = vunpack.c.h.b16 %v1030
  %v1115 = vunpack.c.l.b16 %v1031
  %v1116 = vunpack.c.h.b16 %v1031
  %v1117 = vunpack.c.l.b16 %v1032
  %v1118 = vunpack.c.h.b16 %v1032
  %v1119 = vunpack.c.l.b16 %v1033
  %v1120 = vunpack.c.h.b16 %v1033
  %v1121 = vunpack.c.l.b16 %v1034
  %v1122 = vunpack.c.h.b16 %v1034
  %v1123 = vunpack.c.l.b16 %v1035
  %v1124 = vunpack.c.h.b16 %v1035
  %v1125 = vunpack.c.l.b16 %v1036
  %v1126 = vunpack.c.h.b16 %v1036
  %v1127 = vunpack.c.l.b16 %v1037
  %v1128 = vunpack.c.h.b16 %v1037
  %v1129 = vunpack.c.l.b16 %v1038
  %v1130 = vunpack.c.h.b16 %v1038
  %v1131 = vunpack.c.l.b16 %v1039
  %v1132 = vunpack.c.h.b16 %v1039
  %v1133 = vunpack.c.l.b16 %v1040
  %v1134 = vunpack.c.h.b16 %v1040
  %v1135 = vunpack.c.l.b16 %v1041
  %v1136 = vunpack.c.h.b16 %v1041
  %v1137 = vunpack.c.l.b16 %v1042
  %v1138 = vunpack.c.h.b16 %v1042
  %v1139 = vunpack.c.l.b16 %v1043
  %v1140 = vunpack.c.h.b16 %v1043
  %v1141 = vunpack.c.l.b16 %v1044
  %v1142 = vunpack.c.h.b16 %v1044
  %v1143 = vunpack.c.l.b16 %v1045
  %v1144 = vunpack.c.h.b16 %v1045
  %v1145 = vunpack.c.l.b16 %v1046
  %v1146 = vunpack.c.h.b16 %v1046
  %v1147 = vunpack.c.l.b16 %v1047
  %v1148 = vunpack.c.h.b16 %v1047
  %v1149 = vunpack.c.l.b16 %v1048
  %v1150 = vunpack.c.h.b16 %v1048
  %v1151 = vunpack.c.l.b16 %v1049
  %v1152 = vunpack.c.h.b16 %v1049
  %v1153 = vunpack.c.l.b16 %v1050
  %v1154 = vunpack.c.h.b16 %v1050
  %v1155 = vunpack.c.l.b16 %v1051
  %v1156 = vunpack.c.h.b16 %v1051
  %v1157 = vpack.c.b16 %v1095, %v1093
  %v1158 = vpack.c.b16 %v1096, %v1094
  %v1159 = vpack.c.b16 %v1099, %v1097
  %v1160 = vpack.c.b16 %v1100, %v1098
  %v1161 = vpack.c.b16 %v1103, %v1101
  %v1162 = vpack.c.b16 %v1104, %v1102
  %v1163 = vpack.c.b16 %v1107, %v1105
  %v1164 = vpack.c.b16 %v1108, %v1106
  %v1165 = vpack.c.b16 %v1111, %v1109
  %v1166 = vpack.c.b16 %v1112, %v1110
  %v1167 = vpack.c.b16 %v1115, %v1113
  %v1168 = vpack.c.b16 %v1116, %v1114
  %v1169 = vpack.c.b16 %v1119, %v1117
  %v1170 = vpack.c.b16 %v1120, %v1118
  %v1171 = vpack.c.b16 %v1123, %v1121
  %v1172 = vpack.c.b16 %v1124, %v1122
  %v1173 = vpack.c.b16 %v1127, %v1125
  %v1174 = vpack.c.b16 %v1128, %v1126
  %v1175 = vpack.c.b16 %v1131, %v1129
  %v1176 = vpack.c.b16 %v1132, %v1130
  %v1177 = vpack.c.b16 %v1135, %v1133
  %v1178 = vpack.c.b16 %v1136, %v1134
  %v1179 = vpack.c.b16 %v1139, %v1137
  %v1180 = vpack.c.b16 %v1140, %v1138
  %v1181 = vpack.c.b16 %v1143, %v1141
  %v1182 = vpack.c.b16 %v1144, %v1142
  %v1183 = vpack.c.b16 %v1147, %v1145
  %v1184 = vpack.c.b16 %v1148, %v1146
  %v1185 = vpack.c.b16 %v1151, %v1149
  %v1186 = vpack.c.b16 %v1152, %v1150
  %v1187 = vpack.c.b16 %v1155, %v1153
  %v1188 = vpack.c.b16 %v1156, %v1154
  %1221 = vmatprep.subr.bf16.mxu0 %v1158
  %1222 = vmatpush1.bf16.msra.mxu0 %v1157
  %1223 = vmatprep.subr.bf16.mxu0 %v1160
  %1224 = vmatpush1.bf16.msra.mxu0 %v1159
  %1225 = vmatprep.subr.bf16.mxu0 %v1162
  %1226 = vmatpush1.bf16.msra.mxu0 %v1161
  %1227 = vmatprep.subr.bf16.mxu0 %v1164
  %1228 = vmatpush1.bf16.msra.mxu0 %v1163
  %1229 = vmatprep.subr.bf16.mxu0 %v1166
  %1230 = vmatpush1.bf16.msra.mxu0 %v1165
  %1231 = vmatprep.subr.bf16.mxu0 %v1168
  %1232 = vmatpush1.bf16.msra.mxu0 %v1167
  %1233 = vmatprep.subr.bf16.mxu0 %v1170
  %1234 = vmatpush1.bf16.msra.mxu0 %v1169
  %1235 = vmatprep.subr.bf16.mxu0 %v1172
  %1236 = vmatpush1.bf16.msra.mxu0 %v1171
  %1237 = vmatprep.subr.bf16.mxu0 %v1174
  %1238 = vmatpush1.bf16.msra.mxu0 %v1173
  %1239 = vmatprep.subr.bf16.mxu0 %v1176
  %1240 = vmatpush1.bf16.msra.mxu0 %v1175
  %1241 = vmatprep.subr.bf16.mxu0 %v1178
  %1242 = vmatpush1.bf16.msra.mxu0 %v1177
  %1243 = vmatprep.subr.bf16.mxu0 %v1180
  %1244 = vmatpush1.bf16.msra.mxu0 %v1179
  %1245 = vmatprep.subr.bf16.mxu0 %v1182
  %1246 = vmatpush1.bf16.msra.mxu0 %v1181
  %1247 = vmatprep.subr.bf16.mxu0 %v1184
  %1248 = vmatpush1.bf16.msra.mxu0 %v1183
  %1249 = vmatprep.subr.bf16.mxu0 %v1186
  %1250 = vmatpush1.bf16.msra.mxu0 %v1185
  %1251 = vmatprep.subr.bf16.mxu0 %v1188
  %1252 = vmatpush1.bf16.msra.mxu0 %v1187
  %1253 = vmatprep.mubr.bf16.mxu0 %v1058
  %1254 = vmatmul.mubr.bf16.gmra.mrb[0].mxu0 %v1057
  %v1255 = vpop.f32.mrb[0].mxu0
  %v1256 = vadd.f32 0.0, %v1255
  %v1257 = vpop.f32.mrb[0].mxu0
  %v1258 = vadd.f32 0.0, %v1257
  %v1259 = vpop.f32.mrb[0].mxu0
  %v1260 = vpop.f32.mrb[0].mxu0
  %1261 = vdwg.mxu0
  %v1262 = vadd.f32 %v1016, %v1256
  %v1263 = vadd.f32 %v1017, %v1258
  %v1264 = vld [vmem:[%s0 + $0x8] sm:$0x77]
  %s1265 = scalar_lea.vmem %s1, 1280
  %v1266 = vld [vmem:[%s1265] sm:$0xff]
  %v1267 = vld [vmem:[%s1265 + $0x8] sm:$0xff]
  %v1268 = vld [vmem:[%s1265 + $0x10] sm:$0xff]
  %v1269 = vld [vmem:[%s1265 + $0x18] sm:$0xff]
  %v1270 = vld [vmem:[%s1265 + $0x20] sm:$0xff]
  %v1271 = vld [vmem:[%s1265 + $0x28] sm:$0xff]
  %v1272 = vld [vmem:[%s1265 + $0x30] sm:$0xff]
  %v1273 = vld [vmem:[%s1265 + $0x38] sm:$0xff]
  %v1274 = vld [vmem:[%s1265 + $0x40] sm:$0xff]
  %v1275 = vld [vmem:[%s1265 + $0x48] sm:$0xff]
  %v1276 = vld [vmem:[%s1265 + $0x50] sm:$0xff]
  %v1277 = vld [vmem:[%s1265 + $0x58] sm:$0xff]
  %v1278 = vld [vmem:[%s1265 + $0x60] sm:$0xff]
  %v1279 = vld [vmem:[%s1265 + $0x68] sm:$0xff]
  %v1280 = vld [vmem:[%s1265 + $0x70] sm:$0xff]
  %v1281 = vld [vmem:[%s1265 + $0x78] sm:$0xff]
  %v1282 = vld [vmem:[%s1265 + $0x80] sm:$0xff]
  %v1283 = vld [vmem:[%s1265 + $0x88] sm:$0xff]
  %v1284 = vld [vmem:[%s1265 + $0x90] sm:$0xff]
  %v1285 = vld [vmem:[%s1265 + $0x98] sm:$0xff]
  %v1286 = vld [vmem:[%s1265 + $0xa0] sm:$0xff]
  %v1287 = vld [vmem:[%s1265 + $0xa8] sm:$0xff]
  %v1288 = vld [vmem:[%s1265 + $0xb0] sm:$0xff]
  %v1289 = vld [vmem:[%s1265 + $0xb8] sm:$0xff]
  %v1290 = vld [vmem:[%s1265 + $0xc0] sm:$0xff]
  %v1291 = vld [vmem:[%s1265 + $0xc8] sm:$0xff]
  %v1292 = vld [vmem:[%s1265 + $0xd0] sm:$0xff]
  %v1293 = vld [vmem:[%s1265 + $0xd8] sm:$0xff]
  %v1294 = vld [vmem:[%s1265 + $0xe0] sm:$0xff]
  %v1295 = vld [vmem:[%s1265 + $0xe8] sm:$0xff]
  %v1296 = vld [vmem:[%s1265 + $0xf0] sm:$0xff]
  %v1297 = vld [vmem:[%s1265 + $0xf8] sm:$0xff]
  %v1299 = vunpack.c.l.b16 %v1264
  %v1300 = vunpack.c.h.b16 %v1264
  %v1301 = vpack.c.b16 %v1299, %v1053
  %v1302 = vpack.c.b16 %v1300, %v1054
  %v1304 = vshrl.u32 %v1301, 16
  %v1306 = vrot.slane %v1304, 2
  %v1307 = vshll.u32 %v1301, 16
  %v1309 = vrot.slane %v1307, 3
  %v1310 = vor.u32 %v1306, %v1309
  %v1312 = vshrl.u32 %v1302, 16
  %v1314 = vrot.slane %v1312, 2
  %v1315 = vshll.u32 %v1302, 16
  %v1317 = vrot.slane %v1315, 3
  %v1318 = vor.u32 %v1314, %v1317
  %v1353 = vunpack.c.l.b16 %v1266
  %v1354 = vunpack.c.h.b16 %v1266
  %v1355 = vunpack.c.l.b16 %v1267
  %v1356 = vunpack.c.h.b16 %v1267
  %v1357 = vunpack.c.l.b16 %v1268
  %v1358 = vunpack.c.h.b16 %v1268
  %v1359 = vunpack.c.l.b16 %v1269
  %v1360 = vunpack.c.h.b16 %v1269
  %v1361 = vunpack.c.l.b16 %v1270
  %v1362 = vunpack.c.h.b16 %v1270
  %v1363 = vunpack.c.l.b16 %v1271
  %v1364 = vunpack.c.h.b16 %v1271
  %v1365 = vunpack.c.l.b16 %v1272
  %v1366 = vunpack.c.h.b16 %v1272
  %v1367 = vunpack.c.l.b16 %v1273
  %v1368 = vunpack.c.h.b16 %v1273
  %v1369 = vunpack.c.l.b16 %v1274
  %v1370 = vunpack.c.h.b16 %v1274
  %v1371 = vunpack.c.l.b16 %v1275
  %v1372 = vunpack.c.h.b16 %v1275
  %v1373 = vunpack.c.l.b16 %v1276
  %v1374 = vunpack.c.h.b16 %v1276
  %v1375 = vunpack.c.l.b16 %v1277
  %v1376 = vunpack.c.h.b16 %v1277
  %v1377 = vunpack.c.l.b16 %v1278
  %v1378 = vunpack.c.h.b16 %v1278
  %v1379 = vunpack.c.l.b16 %v1279
  %v1380 = vunpack.c.h.b16 %v1279
  %v1381 = vunpack.c.l.b16 %v1280
  %v1382 = vunpack.c.h.b16 %v1280
  %v1383 = vunpack.c.l.b16 %v1281
  %v1384 = vunpack.c.h.b16 %v1281
  %v1385 = vunpack.c.l.b16 %v1282
  %v1386 = vunpack.c.h.b16 %v1282
  %v1387 = vunpack.c.l.b16 %v1283
  %v1388 = vunpack.c.h.b16 %v1283
  %v1389 = vunpack.c.l.b16 %v1284
  %v1390 = vunpack.c.h.b16 %v1284
  %v1391 = vunpack.c.l.b16 %v1285
  %v1392 = vunpack.c.h.b16 %v1285
  %v1393 = vunpack.c.l.b16 %v1286
  %v1394 = vunpack.c.h.b16 %v1286
  %v1395 = vunpack.c.l.b16 %v1287
  %v1396 = vunpack.c.h.b16 %v1287
  %v1397 = vunpack.c.l.b16 %v1288
  %v1398 = vunpack.c.h.b16 %v1288
  %v1399 = vunpack.c.l.b16 %v1289
  %v1400 = vunpack.c.h.b16 %v1289
  %v1401 = vunpack.c.l.b16 %v1290
  %v1402 = vunpack.c.h.b16 %v1290
  %v1403 = vunpack.c.l.b16 %v1291
  %v1404 = vunpack.c.h.b16 %v1291
  %v1405 = vunpack.c.l.b16 %v1292
  %v1406 = vunpack.c.h.b16 %v1292
  %v1407 = vunpack.c.l.b16 %v1293
  %v1408 = vunpack.c.h.b16 %v1293
  %v1409 = vunpack.c.l.b16 %v1294
  %v1410 = vunpack.c.h.b16 %v1294
  %v1411 = vunpack.c.l.b16 %v1295
  %v1412 = vunpack.c.h.b16 %v1295
  %v1413 = vunpack.c.l.b16 %v1296
  %v1414 = vunpack.c.h.b16 %v1296
  %v1415 = vunpack.c.l.b16 %v1297
  %v1416 = vunpack.c.h.b16 %v1297
  %v1417 = vpack.c.b16 %v1355, %v1353
  %v1418 = vpack.c.b16 %v1356, %v1354
  %v1419 = vpack.c.b16 %v1359, %v1357
  %v1420 = vpack.c.b16 %v1360, %v1358
  %v1421 = vpack.c.b16 %v1363, %v1361
  %v1422 = vpack.c.b16 %v1364, %v1362
  %v1423 = vpack.c.b16 %v1367, %v1365
  %v1424 = vpack.c.b16 %v1368, %v1366
  %v1425 = vpack.c.b16 %v1371, %v1369
  %v1426 = vpack.c.b16 %v1372, %v1370
  %v1427 = vpack.c.b16 %v1375, %v1373
  %v1428 = vpack.c.b16 %v1376, %v1374
  %v1429 = vpack.c.b16 %v1379, %v1377
  %v1430 = vpack.c.b16 %v1380, %v1378
  %v1431 = vpack.c.b16 %v1383, %v1381
  %v1432 = vpack.c.b16 %v1384, %v1382
  %v1433 = vpack.c.b16 %v1387, %v1385
  %v1434 = vpack.c.b16 %v1388, %v1386
  %v1435 = vpack.c.b16 %v1391, %v1389
  %v1436 = vpack.c.b16 %v1392, %v1390
  %v1437 = vpack.c.b16 %v1395, %v1393
  %v1438 = vpack.c.b16 %v1396, %v1394
  %v1439 = vpack.c.b16 %v1399, %v1397
  %v1440 = vpack.c.b16 %v1400, %v1398
  %v1441 = vpack.c.b16 %v1403, %v1401
  %v1442 = vpack.c.b16 %v1404, %v1402
  %v1443 = vpack.c.b16 %v1407, %v1405
  %v1444 = vpack.c.b16 %v1408, %v1406
  %v1445 = vpack.c.b16 %v1411, %v1409
  %v1446 = vpack.c.b16 %v1412, %v1410
  %v1447 = vpack.c.b16 %v1415, %v1413
  %v1448 = vpack.c.b16 %v1416, %v1414
  %1481 = vmatprep.subr.bf16.mxu0 %v1418
  %1482 = vmatpush1.bf16.msra.mxu0 %v1417
  %1483 = vmatprep.subr.bf16.mxu0 %v1420
  %1484 = vmatpush1.bf16.msra.mxu0 %v1419
  %1485 = vmatprep.subr.bf16.mxu0 %v1422
  %1486 = vmatpush1.bf16.msra.mxu0 %v1421
  %1487 = vmatprep.subr.bf16.mxu0 %v1424
  %1488 = vmatpush1.bf16.msra.mxu0 %v1423
  %1489 = vmatprep.subr.bf16.mxu0 %v1426
  %1490 = vmatpush1.bf16.msra.mxu0 %v1425
  %1491 = vmatprep.subr.bf16.mxu0 %v1428
  %1492 = vmatpush1.bf16.msra.mxu0 %v1427
  %1493 = vmatprep.subr.bf16.mxu0 %v1430
  %1494 = vmatpush1.bf16.msra.mxu0 %v1429
  %1495 = vmatprep.subr.bf16.mxu0 %v1432
  %1496 = vmatpush1.bf16.msra.mxu0 %v1431
  %1497 = vmatprep.subr.bf16.mxu0 %v1434
  %1498 = vmatpush1.bf16.msra.mxu0 %v1433
  %1499 = vmatprep.subr.bf16.mxu0 %v1436
  %1500 = vmatpush1.bf16.msra.mxu0 %v1435
  %1501 = vmatprep.subr.bf16.mxu0 %v1438
  %1502 = vmatpush1.bf16.msra.mxu0 %v1437
  %1503 = vmatprep.subr.bf16.mxu0 %v1440
  %1504 = vmatpush1.bf16.msra.mxu0 %v1439
  %1505 = vmatprep.subr.bf16.mxu0 %v1442
  %1506 = vmatpush1.bf16.msra.mxu0 %v1441
  %1507 = vmatprep.subr.bf16.mxu0 %v1444
  %1508 = vmatpush1.bf16.msra.mxu0 %v1443
  %1509 = vmatprep.subr.bf16.mxu0 %v1446
  %1510 = vmatpush1.bf16.msra.mxu0 %v1445
  %1511 = vmatprep.subr.bf16.mxu0 %v1448
  %1512 = vmatpush1.bf16.msra.mxu0 %v1447
  %1513 = vmatprep.mubr.bf16.mxu0 %v1318
  %1514 = vmatmul.mubr.bf16.gmra.mrb[0].mxu0 %v1310
  %v1515 = vpop.f32.mrb[0].mxu0
  %v1516 = vadd.f32 0.0, %v1515
  %v1517 = vpop.f32.mrb[0].mxu0
  %v1518 = vadd.f32 0.0, %v1517
  %v1519 = vpop.f32.mrb[0].mxu0
  %v1520 = vpop.f32.mrb[0].mxu0
  %1521 = vdwg.mxu0
  %v1522 = vadd.f32 %v1262, %v1516
  %v1523 = vadd.f32 %v1263, %v1518
  %v1524 = vld [vmem:[%s0] sm:$0x88]
  %s1525 = scalar_lea.vmem %s1, 1536
  %v1526 = vld [vmem:[%s1525] sm:$0xff]
  %v1527 = vld [vmem:[%s1525 + $0x8] sm:$0xff]
  %v1528 = vld [vmem:[%s1525 + $0x10] sm:$0xff]
  %v1529 = vld [vmem:[%s1525 + $0x18] sm:$0xff]
  %v1530 = vld [vmem:[%s1525 + $0x20] sm:$0xff]
  %v1531 = vld [vmem:[%s1525 + $0x28] sm:$0xff]
  %v1532 = vld [vmem:[%s1525 + $0x30] sm:$0xff]
  %v1533 = vld [vmem:[%s1525 + $0x38] sm:$0xff]
  %v1534 = vld [vmem:[%s1525 + $0x40] sm:$0xff]
  %v1535 = vld [vmem:[%s1525 + $0x48] sm:$0xff]
  %v1536 = vld [vmem:[%s1525 + $0x50] sm:$0xff]
  %v1537 = vld [vmem:[%s1525 + $0x58] sm:$0xff]
  %v1538 = vld [vmem:[%s1525 + $0x60] sm:$0xff]
  %v1539 = vld [vmem:[%s1525 + $0x68] sm:$0xff]
  %v1540 = vld [vmem:[%s1525 + $0x70] sm:$0xff]
  %v1541 = vld [vmem:[%s1525 + $0x78] sm:$0xff]
  %v1542 = vld [vmem:[%s1525 + $0x80] sm:$0xff]
  %v1543 = vld [vmem:[%s1525 + $0x88] sm:$0xff]
  %v1544 = vld [vmem:[%s1525 + $0x90] sm:$0xff]
  %v1545 = vld [vmem:[%s1525 + $0x98] sm:$0xff]
  %v1546 = vld [vmem:[%s1525 + $0xa0] sm:$0xff]
  %v1547 = vld [vmem:[%s1525 + $0xa8] sm:$0xff]
  %v1548 = vld [vmem:[%s1525 + $0xb0] sm:$0xff]
  %v1549 = vld [vmem:[%s1525 + $0xb8] sm:$0xff]
  %v1550 = vld [vmem:[%s1525 + $0xc0] sm:$0xff]
  %v1551 = vld [vmem:[%s1525 + $0xc8] sm:$0xff]
  %v1552 = vld [vmem:[%s1525 + $0xd0] sm:$0xff]
  %v1553 = vld [vmem:[%s1525 + $0xd8] sm:$0xff]
  %v1554 = vld [vmem:[%s1525 + $0xe0] sm:$0xff]
  %v1555 = vld [vmem:[%s1525 + $0xe8] sm:$0xff]
  %v1556 = vld [vmem:[%s1525 + $0xf0] sm:$0xff]
  %v1557 = vld [vmem:[%s1525 + $0xf8] sm:$0xff]
  %v1559 = vunpack.c.l.b16 %v1524
  %v1560 = vunpack.c.h.b16 %v1524
  %v1561 = vpack.c.b16 %v1299, %v1559
  %v1562 = vpack.c.b16 %v1300, %v1560
  %v1563 = vrot.slane %v1561, 3
  %v1564 = vrot.slane %v1562, 3
  %v1599 = vunpack.c.l.b16 %v1526
  %v1600 = vunpack.c.h.b16 %v1526
  %v1601 = vunpack.c.l.b16 %v1527
  %v1602 = vunpack.c.h.b16 %v1527
  %v1603 = vunpack.c.l.b16 %v1528
  %v1604 = vunpack.c.h.b16 %v1528
  %v1605 = vunpack.c.l.b16 %v1529
  %v1606 = vunpack.c.h.b16 %v1529
  %v1607 = vunpack.c.l.b16 %v1530
  %v1608 = vunpack.c.h.b16 %v1530
  %v1609 = vunpack.c.l.b16 %v1531
  %v1610 = vunpack.c.h.b16 %v1531
  %v1611 = vunpack.c.l.b16 %v1532
  %v1612 = vunpack.c.h.b16 %v1532
  %v1613 = vunpack.c.l.b16 %v1533
  %v1614 = vunpack.c.h.b16 %v1533
  %v1615 = vunpack.c.l.b16 %v1534
  %v1616 = vunpack.c.h.b16 %v1534
  %v1617 = vunpack.c.l.b16 %v1535
  %v1618 = vunpack.c.h.b16 %v1535
  %v1619 = vunpack.c.l.b16 %v1536
  %v1620 = vunpack.c.h.b16 %v1536
  %v1621 = vunpack.c.l.b16 %v1537
  %v1622 = vunpack.c.h.b16 %v1537
  %v1623 = vunpack.c.l.b16 %v1538
  %v1624 = vunpack.c.h.b16 %v1538
  %v1625 = vunpack.c.l.b16 %v1539
  %v1626 = vunpack.c.h.b16 %v1539
  %v1627 = vunpack.c.l.b16 %v1540
  %v1628 = vunpack.c.h.b16 %v1540
  %v1629 = vunpack.c.l.b16 %v1541
  %v1630 = vunpack.c.h.b16 %v1541
  %v1631 = vunpack.c.l.b16 %v1542
  %v1632 = vunpack.c.h.b16 %v1542
  %v1633 = vunpack.c.l.b16 %v1543
  %v1634 = vunpack.c.h.b16 %v1543
  %v1635 = vunpack.c.l.b16 %v1544
  %v1636 = vunpack.c.h.b16 %v1544
  %v1637 = vunpack.c.l.b16 %v1545
  %v1638 = vunpack.c.h.b16 %v1545
  %v1639 = vunpack.c.l.b16 %v1546
  %v1640 = vunpack.c.h.b16 %v1546
  %v1641 = vunpack.c.l.b16 %v1547
  %v1642 = vunpack.c.h.b16 %v1547
  %v1643 = vunpack.c.l.b16 %v1548
  %v1644 = vunpack.c.h.b16 %v1548
  %v1645 = vunpack.c.l.b16 %v1549
  %v1646 = vunpack.c.h.b16 %v1549
  %v1647 = vunpack.c.l.b16 %v1550
  %v1648 = vunpack.c.h.b16 %v1550
  %v1649 = vunpack.c.l.b16 %v1551
  %v1650 = vunpack.c.h.b16 %v1551
  %v1651 = vunpack.c.l.b16 %v1552
  %v1652 = vunpack.c.h.b16 %v1552
  %v1653 = vunpack.c.l.b16 %v1553
  %v1654 = vunpack.c.h.b16 %v1553
  %v1655 = vunpack.c.l.b16 %v1554
  %v1656 = vunpack.c.h.b16 %v1554
  %v1657 = vunpack.c.l.b16 %v1555
  %v1658 = vunpack.c.h.b16 %v1555
  %v1659 = vunpack.c.l.b16 %v1556
  %v1660 = vunpack.c.h.b16 %v1556
  %v1661 = vunpack.c.l.b16 %v1557
  %v1662 = vunpack.c.h.b16 %v1557
  %v1663 = vpack.c.b16 %v1601, %v1599
  %v1664 = vpack.c.b16 %v1602, %v1600
  %v1665 = vpack.c.b16 %v1605, %v1603
  %v1666 = vpack.c.b16 %v1606, %v1604
  %v1667 = vpack.c.b16 %v1609, %v1607
  %v1668 = vpack.c.b16 %v1610, %v1608
  %v1669 = vpack.c.b16 %v1613, %v1611
  %v1670 = vpack.c.b16 %v1614, %v1612
  %v1671 = vpack.c.b16 %v1617, %v1615
  %v1672 = vpack.c.b16 %v1618, %v1616
  %v1673 = vpack.c.b16 %v1621, %v1619
  %v1674 = vpack.c.b16 %v1622, %v1620
  %v1675 = vpack.c.b16 %v1625, %v1623
  %v1676 = vpack.c.b16 %v1626, %v1624
  %v1677 = vpack.c.b16 %v1629, %v1627
  %v1678 = vpack.c.b16 %v1630, %v1628
  %v1679 = vpack.c.b16 %v1633, %v1631
  %v1680 = vpack.c.b16 %v1634, %v1632
  %v1681 = vpack.c.b16 %v1637, %v1635
  %v1682 = vpack.c.b16 %v1638, %v1636
  %v1683 = vpack.c.b16 %v1641, %v1639
  %v1684 = vpack.c.b16 %v1642, %v1640
  %v1685 = vpack.c.b16 %v1645, %v1643
  %v1686 = vpack.c.b16 %v1646, %v1644
  %v1687 = vpack.c.b16 %v1649, %v1647
  %v1688 = vpack.c.b16 %v1650, %v1648
  %v1689 = vpack.c.b16 %v1653, %v1651
  %v1690 = vpack.c.b16 %v1654, %v1652
  %v1691 = vpack.c.b16 %v1657, %v1655
  %v1692 = vpack.c.b16 %v1658, %v1656
  %v1693 = vpack.c.b16 %v1661, %v1659
  %v1694 = vpack.c.b16 %v1662, %v1660
  %1727 = vmatprep.subr.bf16.mxu0 %v1664
  %1728 = vmatpush1.bf16.msra.mxu0 %v1663
  %1729 = vmatprep.subr.bf16.mxu0 %v1666
  %1730 = vmatpush1.bf16.msra.mxu0 %v1665
  %1731 = vmatprep.subr.bf16.mxu0 %v1668
  %1732 = vmatpush1.bf16.msra.mxu0 %v1667
  %1733 = vmatprep.subr.bf16.mxu0 %v1670
  %1734 = vmatpush1.bf16.msra.mxu0 %v1669
  %1735 = vmatprep.subr.bf16.mxu0 %v1672
  %1736 = vmatpush1.bf16.msra.mxu0 %v1671
  %1737 = vmatprep.subr.bf16.mxu0 %v1674
  %1738 = vmatpush1.bf16.msra.mxu0 %v1673
  %1739 = vmatprep.subr.bf16.mxu0 %v1676
  %1740 = vmatpush1.bf16.msra.mxu0 %v1675
  %1741 = vmatprep.subr.bf16.mxu0 %v1678
  %1742 = vmatpush1.bf16.msra.mxu0 %v1677
  %1743 = vmatprep.subr.bf16.mxu0 %v1680
  %1744 = vmatpush1.bf16.msra.mxu0 %v1679
  %1745 = vmatprep.subr.bf16.mxu0 %v1682
  %1746 = vmatpush1.bf16.msra.mxu0 %v1681
  %1747 = vmatprep.subr.bf16.mxu0 %v1684
  %1748 = vmatpush1.bf16.msra.mxu0 %v1683
  %1749 = vmatprep.subr.bf16.mxu0 %v1686
  %1750 = vmatpush1.bf16.msra.mxu0 %v1685
  %1751 = vmatprep.subr.bf16.mxu0 %v1688
  %1752 = vmatpush1.bf16.msra.mxu0 %v1687
  %1753 = vmatprep.subr.bf16.mxu0 %v1690
  %1754 = vmatpush1.bf16.msra.mxu0 %v1689
  %1755 = vmatprep.subr.bf16.mxu0 %v1692
  %1756 = vmatpush1.bf16.msra.mxu0 %v1691
  %1757 = vmatprep.subr.bf16.mxu0 %v1694
  %1758 = vmatpush1.bf16.msra.mxu0 %v1693
  %1759 = vmatprep.mubr.bf16.mxu0 %v1564
  %1760 = vmatmul.mubr.bf16.gmra.mrb[0].mxu0 %v1563
  %v1761 = vpop.f32.mrb[0].mxu0
  %v1762 = vadd.f32 0.0, %v1761
  %v1763 = vpop.f32.mrb[0].mxu0
  %v1764 = vadd.f32 0.0, %v1763
  %v1765 = vpop.f32.mrb[0].mxu0
  %v1766 = vpop.f32.mrb[0].mxu0
  %1767 = vdwg.mxu0
  %v1768 = vadd.f32 %v1522, %v1762
  %v1769 = vadd.f32 %v1523, %v1764
  %v1770 = vld [vmem:[%s0 + $0x8] sm:$0xff]
  %s1771 = scalar_lea.vmem %s1, 1792
  %v1772 = vld [vmem:[%s1771] sm:$0xff]
  %v1773 = vld [vmem:[%s1771 + $0x8] sm:$0xff]
  %v1774 = vld [vmem:[%s1771 + $0x10] sm:$0xff]
  %v1775 = vld [vmem:[%s1771 + $0x18] sm:$0xff]
  %v1776 = vld [vmem:[%s1771 + $0x20] sm:$0xff]
  %v1777 = vld [vmem:[%s1771 + $0x28] sm:$0xff]
  %v1778 = vld [vmem:[%s1771 + $0x30] sm:$0xff]
  %v1779 = vld [vmem:[%s1771 + $0x38] sm:$0xff]
  %v1780 = vld [vmem:[%s1771 + $0x40] sm:$0xff]
  %v1781 = vld [vmem:[%s1771 + $0x48] sm:$0xff]
  %v1782 = vld [vmem:[%s1771 + $0x50] sm:$0xff]
  %v1783 = vld [vmem:[%s1771 + $0x58] sm:$0xff]
  %v1784 = vld [vmem:[%s1771 + $0x60] sm:$0xff]
  %v1785 = vld [vmem:[%s1771 + $0x68] sm:$0xff]
  %v1786 = vld [vmem:[%s1771 + $0x70] sm:$0xff]
  %v1787 = vld [vmem:[%s1771 + $0x78] sm:$0xff]
  %v1788 = vld [vmem:[%s1771 + $0x80] sm:$0xff]
  %v1789 = vld [vmem:[%s1771 + $0x88] sm:$0xff]
  %v1790 = vld [vmem:[%s1771 + $0x90] sm:$0xff]
  %v1791 = vld [vmem:[%s1771 + $0x98] sm:$0xff]
  %v1792 = vld [vmem:[%s1771 + $0xa0] sm:$0xff]
  %v1793 = vld [vmem:[%s1771 + $0xa8] sm:$0xff]
  %v1794 = vld [vmem:[%s1771 + $0xb0] sm:$0xff]
  %v1795 = vld [vmem:[%s1771 + $0xb8] sm:$0xff]
  %v1796 = vld [vmem:[%s1771 + $0xc0] sm:$0xff]
  %v1797 = vld [vmem:[%s1771 + $0xc8] sm:$0xff]
  %v1798 = vld [vmem:[%s1771 + $0xd0] sm:$0xff]
  %v1799 = vld [vmem:[%s1771 + $0xd8] sm:$0xff]
  %v1800 = vld [vmem:[%s1771 + $0xe0] sm:$0xff]
  %v1801 = vld [vmem:[%s1771 + $0xe8] sm:$0xff]
  %v1802 = vld [vmem:[%s1771 + $0xf0] sm:$0xff]
  %v1803 = vld [vmem:[%s1771 + $0xf8] sm:$0xff]
  %v1805 = vunpack.c.l.b16 %v1770
  %v1806 = vunpack.c.h.b16 %v1770
  %v1807 = vpack.c.b16 %v1805, %v1559
  %v1808 = vpack.c.b16 %v1806, %v1560
  %v1810 = vshrl.u32 %v1807, 16
  %v1812 = vrot.slane %v1810, 3
  %v1813 = vshll.u32 %v1807, 16
  %v1815 = vrot.slane %v1813, 4
  %v1816 = vor.u32 %v1812, %v1815
  %v1818 = vshrl.u32 %v1808, 16
  %v1820 = vrot.slane %v1818, 3
  %v1821 = vshll.u32 %v1808, 16
  %v1823 = vrot.slane %v1821, 4
  %v1824 = vor.u32 %v1820, %v1823
  %v1859 = vunpack.c.l.b16 %v1772
  %v1860 = vunpack.c.h.b16 %v1772
  %v1861 = vunpack.c.l.b16 %v1773
  %v1862 = vunpack.c.h.b16 %v1773
  %v1863 = vunpack.c.l.b16 %v1774
  %v1864 = vunpack.c.h.b16 %v1774
  %v1865 = vunpack.c.l.b16 %v1775
  %v1866 = vunpack.c.h.b16 %v1775
  %v1867 = vunpack.c.l.b16 %v1776
  %v1868 = vunpack.c.h.b16 %v1776
  %v1869 = vunpack.c.l.b16 %v1777
  %v1870 = vunpack.c.h.b16 %v1777
  %v1871 = vunpack.c.l.b16 %v1778
  %v1872 = vunpack.c.h.b16 %v1778
  %v1873 = vunpack.c.l.b16 %v1779
  %v1874 = vunpack.c.h.b16 %v1779
  %v1875 = vunpack.c.l.b16 %v1780
  %v1876 = vunpack.c.h.b16 %v1780
  %v1877 = vunpack.c.l.b16 %v1781
  %v1878 = vunpack.c.h.b16 %v1781
  %v1879 = vunpack.c.l.b16 %v1782
  %v1880 = vunpack.c.h.b16 %v1782
  %v1881 = vunpack.c.l.b16 %v1783
  %v1882 = vunpack.c.h.b16 %v1783
  %v1883 = vunpack.c.l.b16 %v1784
  %v1884 = vunpack.c.h.b16 %v1784
  %v1885 = vunpack.c.l.b16 %v1785
  %v1886 = vunpack.c.h.b16 %v1785
  %v1887 = vunpack.c.l.b16 %v1786
  %v1888 = vunpack.c.h.b16 %v1786
  %v1889 = vunpack.c.l.b16 %v1787
  %v1890 = vunpack.c.h.b16 %v1787
  %v1891 = vunpack.c.l.b16 %v1788
  %v1892 = vunpack.c.h.b16 %v1788
  %v1893 = vunpack.c.l.b16 %v1789
  %v1894 = vunpack.c.h.b16 %v1789
  %v1895 = vunpack.c.l.b16 %v1790
  %v1896 = vunpack.c.h.b16 %v1790
  %v1897 = vunpack.c.l.b16 %v1791
  %v1898 = vunpack.c.h.b16 %v1791
  %v1899 = vunpack.c.l.b16 %v1792
  %v1900 = vunpack.c.h.b16 %v1792
  %v1901 = vunpack.c.l.b16 %v1793
  %v1902 = vunpack.c.h.b16 %v1793
  %v1903 = vunpack.c.l.b16 %v1794
  %v1904 = vunpack.c.h.b16 %v1794
  %v1905 = vunpack.c.l.b16 %v1795
  %v1906 = vunpack.c.h.b16 %v1795
  %v1907 = vunpack.c.l.b16 %v1796
  %v1908 = vunpack.c.h.b16 %v1796
  %v1909 = vunpack.c.l.b16 %v1797
  %v1910 = vunpack.c.h.b16 %v1797
  %v1911 = vunpack.c.l.b16 %v1798
  %v1912 = vunpack.c.h.b16 %v1798
  %v1913 = vunpack.c.l.b16 %v1799
  %v1914 = vunpack.c.h.b16 %v1799
  %v1915 = vunpack.c.l.b16 %v1800
  %v1916 = vunpack.c.h.b16 %v1800
  %v1917 = vunpack.c.l.b16 %v1801
  %v1918 = vunpack.c.h.b16 %v1801
  %v1919 = vunpack.c.l.b16 %v1802
  %v1920 = vunpack.c.h.b16 %v1802
  %v1921 = vunpack.c.l.b16 %v1803
  %v1922 = vunpack.c.h.b16 %v1803
  %v1923 = vpack.c.b16 %v1861, %v1859
  %v1924 = vpack.c.b16 %v1862, %v1860
  %v1925 = vpack.c.b16 %v1865, %v1863
  %v1926 = vpack.c.b16 %v1866, %v1864
  %v1927 = vpack.c.b16 %v1869, %v1867
  %v1928 = vpack.c.b16 %v1870, %v1868
  %v1929 = vpack.c.b16 %v1873, %v1871
  %v1930 = vpack.c.b16 %v1874, %v1872
  %v1931 = vpack.c.b16 %v1877, %v1875
  %v1932 = vpack.c.b16 %v1878, %v1876
  %v1933 = vpack.c.b16 %v1881, %v1879
  %v1934 = vpack.c.b16 %v1882, %v1880
  %v1935 = vpack.c.b16 %v1885, %v1883
  %v1936 = vpack.c.b16 %v1886, %v1884
  %v1937 = vpack.c.b16 %v1889, %v1887
  %v1938 = vpack.c.b16 %v1890, %v1888
  %v1939 = vpack.c.b16 %v1893, %v1891
  %v1940 = vpack.c.b16 %v1894, %v1892
  %v1941 = vpack.c.b16 %v1897, %v1895
  %v1942 = vpack.c.b16 %v1898, %v1896
  %v1943 = vpack.c.b16 %v1901, %v1899
  %v1944 = vpack.c.b16 %v1902, %v1900
  %v1945 = vpack.c.b16 %v1905, %v1903
  %v1946 = vpack.c.b16 %v1906, %v1904
  %v1947 = vpack.c.b16 %v1909, %v1907
  %v1948 = vpack.c.b16 %v1910, %v1908
  %v1949 = vpack.c.b16 %v1913, %v1911
  %v1950 = vpack.c.b16 %v1914, %v1912
  %v1951 = vpack.c.b16 %v1917, %v1915
  %v1952 = vpack.c.b16 %v1918, %v1916
  %v1953 = vpack.c.b16 %v1921, %v1919
  %v1954 = vpack.c.b16 %v1922, %v1920
  %1987 = vmatprep.subr.bf16.mxu0 %v1924
  %1988 = vmatpush1.bf16.msra.mxu0 %v1923
  %1989 = vmatprep.subr.bf16.mxu0 %v1926
  %1990 = vmatpush1.bf16.msra.mxu0 %v1925
  %1991 = vmatprep.subr.bf16.mxu0 %v1928
  %1992 = vmatpush1.bf16.msra.mxu0 %v1927
  %1993 = vmatprep.subr.bf16.mxu0 %v1930
  %1994 = vmatpush1.bf16.msra.mxu0 %v1929
  %1995 = vmatprep.subr.bf16.mxu0 %v1932
  %1996 = vmatpush1.bf16.msra.mxu0 %v1931
  %1997 = vmatprep.subr.bf16.mxu0 %v1934
  %1998 = vmatpush1.bf16.msra.mxu0 %v1933
  %1999 = vmatprep.subr.bf16.mxu0 %v1936
  %2000 = vmatpush1.bf16.msra.mxu0 %v1935
  %2001 = vmatprep.subr.bf16.mxu0 %v1938
  %2002 = vmatpush1.bf16.msra.mxu0 %v1937
  %2003 = vmatprep.subr.bf16.mxu0 %v1940
  %2004 = vmatpush1.bf16.msra.mxu0 %v1939
  %2005 = vmatprep.subr.bf16.mxu0 %v1942
  %2006 = vmatpush1.bf16.msra.mxu0 %v1941
  %2007 = vmatprep.subr.bf16.mxu0 %v1944
  %2008 = vmatpush1.bf16.msra.mxu0 %v1943
  %2009 = vmatprep.subr.bf16.mxu0 %v1946
  %2010 = vmatpush1.bf16.msra.mxu0 %v1945
  %2011 = vmatprep.subr.bf16.mxu0 %v1948
  %2012 = vmatpush1.bf16.msra.mxu0 %v1947
  %2013 = vmatprep.subr.bf16.mxu0 %v1950
  %2014 = vmatpush1.bf16.msra.mxu0 %v1949
  %2015 = vmatprep.subr.bf16.mxu0 %v1952
  %2016 = vmatpush1.bf16.msra.mxu0 %v1951
  %2017 = vmatprep.subr.bf16.mxu0 %v1954
  %2018 = vmatpush1.bf16.msra.mxu0 %v1953
  %2019 = vmatprep.mubr.bf16.mxu0 %v1824
  %2020 = vmatmul.mubr.bf16.gmra.mrb[0].mxu0 %v1816
  %v2021 = vpop.f32.mrb[0].mxu0
  %v2022 = vadd.f32 0.0, %v2021
  %v2023 = vpop.f32.mrb[0].mxu0
  %v2024 = vadd.f32 0.0, %v2023
  %v2025 = vpop.f32.mrb[0].mxu0
  %v2026 = vpop.f32.mrb[0].mxu0
  %2027 = vdwg.mxu0
  %v2028 = vadd.f32 %v1768, %v2022
  %v2029 = vadd.f32 %v1769, %v2024
  %s2030 = scalar_lea.vmem %s1, 2048
  %v2031 = vld [vmem:[%s2030] sm:$0xff]
  %v2032 = vld [vmem:[%s2030 + $0x8] sm:$0xff]
  %v2033 = vld [vmem:[%s2030 + $0x10] sm:$0xff]
  %v2034 = vld [vmem:[%s2030 + $0x18] sm:$0xff]
  %v2035 = vld [vmem:[%s2030 + $0x20] sm:$0xff]
  %v2036 = vld [vmem:[%s2030 + $0x28] sm:$0xff]
  %v2037 = vld [vmem:[%s2030 + $0x30] sm:$0xff]
  %v2038 = vld [vmem:[%s2030 + $0x38] sm:$0xff]
  %v2039 = vld [vmem:[%s2030 + $0x40] sm:$0xff]
  %v2040 = vld [vmem:[%s2030 + $0x48] sm:$0xff]
  %v2041 = vld [vmem:[%s2030 + $0x50] sm:$0xff]
  %v2042 = vld [vmem:[%s2030 + $0x58] sm:$0xff]
  %v2043 = vld [vmem:[%s2030 + $0x60] sm:$0xff]
  %v2044 = vld [vmem:[%s2030 + $0x68] sm:$0xff]
  %v2045 = vld [vmem:[%s2030 + $0x70] sm:$0xff]
  %v2046 = vld [vmem:[%s2030 + $0x78] sm:$0xff]
  %v2047 = vld [vmem:[%s2030 + $0x80] sm:$0xff]
  %v2048 = vld [vmem:[%s2030 + $0x88] sm:$0xff]
  %v2049 = vld [vmem:[%s2030 + $0x90] sm:$0xff]
  %v2050 = vld [vmem:[%s2030 + $0x98] sm:$0xff]
  %v2051 = vld [vmem:[%s2030 + $0xa0] sm:$0xff]
  %v2052 = vld [vmem:[%s2030 + $0xa8] sm:$0xff]
  %v2053 = vld [vmem:[%s2030 + $0xb0] sm:$0xff]
  %v2054 = vld [vmem:[%s2030 + $0xb8] sm:$0xff]
  %v2055 = vld [vmem:[%s2030 + $0xc0] sm:$0xff]
  %v2056 = vld [vmem:[%s2030 + $0xc8] sm:$0xff]
  %v2057 = vld [vmem:[%s2030 + $0xd0] sm:$0xff]
  %v2058 = vld [vmem:[%s2030 + $0xd8] sm:$0xff]
  %v2059 = vld [vmem:[%s2030 + $0xe0] sm:$0xff]
  %v2060 = vld [vmem:[%s2030 + $0xe8] sm:$0xff]
  %v2061 = vld [vmem:[%s2030 + $0xf0] sm:$0xff]
  %v2062 = vld [vmem:[%s2030 + $0xf8] sm:$0xff]
  %v2063 = vpack.c.b16 %v1805, %v1805
  %v2064 = vpack.c.b16 %v1806, %v1806
  %v2099 = vunpack.c.l.b16 %v2031
  %v2100 = vunpack.c.h.b16 %v2031
  %v2101 = vunpack.c.l.b16 %v2032
  %v2102 = vunpack.c.h.b16 %v2032
  %v2103 = vunpack.c.l.b16 %v2033
  %v2104 = vunpack.c.h.b16 %v2033
  %v2105 = vunpack.c.l.b16 %v2034
  %v2106 = vunpack.c.h.b16 %v2034
  %v2107 = vunpack.c.l.b16 %v2035
  %v2108 = vunpack.c.h.b16 %v2035
  %v2109 = vunpack.c.l.b16 %v2036
  %v2110 = vunpack.c.h.b16 %v2036
  %v2111 = vunpack.c.l.b16 %v2037
  %v2112 = vunpack.c.h.b16 %v2037
  %v2113 = vunpack.c.l.b16 %v2038
  %v2114 = vunpack.c.h.b16 %v2038
  %v2115 = vunpack.c.l.b16 %v2039
  %v2116 = vunpack.c.h.b16 %v2039
  %v2117 = vunpack.c.l.b16 %v2040
  %v2118 = vunpack.c.h.b16 %v2040
  %v2119 = vunpack.c.l.b16 %v2041
  %v2120 = vunpack.c.h.b16 %v2041
  %v2121 = vunpack.c.l.b16 %v2042
  %v2122 = vunpack.c.h.b16 %v2042
  %v2123 = vunpack.c.l.b16 %v2043
  %v2124 = vunpack.c.h.b16 %v2043
  %v2125 = vunpack.c.l.b16 %v2044
  %v2126 = vunpack.c.h.b16 %v2044
  %v2127 = vunpack.c.l.b16 %v2045
  %v2128 = vunpack.c.h.b16 %v2045
  %v2129 = vunpack.c.l.b16 %v2046
  %v2130 = vunpack.c.h.b16 %v2046
  %v2131 = vunpack.c.l.b16 %v2047
  %v2132 = vunpack.c.h.b16 %v2047
  %v2133 = vunpack.c.l.b16 %v2048
  %v2134 = vunpack.c.h.b16 %v2048
  %v2135 = vunpack.c.l.b16 %v2049
  %v2136 = vunpack.c.h.b16 %v2049
  %v2137 = vunpack.c.l.b16 %v2050
  %v2138 = vunpack.c.h.b16 %v2050
  %v2139 = vunpack.c.l.b16 %v2051
  %v2140 = vunpack.c.h.b16 %v2051
  %v2141 = vunpack.c.l.b16 %v2052
  %v2142 = vunpack.c.h.b16 %v2052
  %v2143 = vunpack.c.l.b16 %v2053
  %v2144 = vunpack.c.h.b16 %v2053
  %v2145 = vunpack.c.l.b16 %v2054
  %v2146 = vunpack.c.h.b16 %v2054
  %v2147 = vunpack.c.l.b16 %v2055
  %v2148 = vunpack.c.h.b16 %v2055
  %v2149 = vunpack.c.l.b16 %v2056
  %v2150 = vunpack.c.h.b16 %v2056
  %v2151 = vunpack.c.l.b16 %v2057
  %v2152 = vunpack.c.h.b16 %v2057
  %v2153 = vunpack.c.l.b16 %v2058
  %v2154 = vunpack.c.h.b16 %v2058
  %v2155 = vunpack.c.l.b16 %v2059
  %v2156 = vunpack.c.h.b16 %v2059
  %v2157 = vunpack.c.l.b16 %v2060
  %v2158 = vunpack.c.h.b16 %v2060
  %v2159 = vunpack.c.l.b16 %v2061
  %v2160 = vunpack.c.h.b16 %v2061
  %v2161 = vunpack.c.l.b16 %v2062
  %v2162 = vunpack.c.h.b16 %v2062
  %v2163 = vpack.c.b16 %v2101, %v2099
  %v2164 = vpack.c.b16 %v2102, %v2100
  %v2165 = vpack.c.b16 %v2105, %v2103
  %v2166 = vpack.c.b16 %v2106, %v2104
  %v2167 = vpack.c.b16 %v2109, %v2107
  %v2168 = vpack.c.b16 %v2110, %v2108
  %v2169 = vpack.c.b16 %v2113, %v2111
  %v2170 = vpack.c.b16 %v2114, %v2112
  %v2171 = vpack.c.b16 %v2117, %v2115
  %v2172 = vpack.c.b16 %v2118, %v2116
  %v2173 = vpack.c.b16 %v2121, %v2119
  %v2174 = vpack.c.b16 %v2122, %v2120
  %v2175 = vpack.c.b16 %v2125, %v2123
  %v2176 = vpack.c.b16 %v2126, %v2124
  %v2177 = vpack.c.b16 %v2129, %v2127
  %v2178 = vpack.c.b16 %v2130, %v2128
  %v2179 = vpack.c.b16 %v2133, %v2131
  %v2180 = vpack.c.b16 %v2134, %v2132
  %v2181 = vpack.c.b16 %v2137, %v2135
  %v2182 = vpack.c.b16 %v2138, %v2136
  %v2183 = vpack.c.b16 %v2141, %v2139
  %v2184 = vpack.c.b16 %v2142, %v2140
  %v2185 = vpack.c.b16 %v2145, %v2143
  %v2186 = vpack.c.b16 %v2146, %v2144
  %v2187 = vpack.c.b16 %v2149, %v2147
  %v2188 = vpack.c.b16 %v2150, %v2148
  %v2189 = vpack.c.b16 %v2153, %v2151
  %v2190 = vpack.c.b16 %v2154, %v2152
  %v2191 = vpack.c.b16 %v2157, %v2155
  %v2192 = vpack.c.b16 %v2158, %v2156
  %v2193 = vpack.c.b16 %v2161, %v2159
  %v2194 = vpack.c.b16 %v2162, %v2160
  %2227 = vmatprep.subr.bf16.mxu0 %v2164
  %2228 = vmatpush1.bf16.msra.mxu0 %v2163
  %2229 = vmatprep.subr.bf16.mxu0 %v2166
  %2230 = vmatpush1.bf16.msra.mxu0 %v2165
  %2231 = vmatprep.subr.bf16.mxu0 %v2168
  %2232 = vmatpush1.bf16.msra.mxu0 %v2167
  %2233 = vmatprep.subr.bf16.mxu0 %v2170
  %2234 = vmatpush1.bf16.msra.mxu0 %v2169
  %2235 = vmatprep.subr.bf16.mxu0 %v2172
  %2236 = vmatpush1.bf16.msra.mxu0 %v2171
  %2237 = vmatprep.subr.bf16.mxu0 %v2174
  %2238 = vmatpush1.bf16.msra.mxu0 %v2173
  %2239 = vmatprep.subr.bf16.mxu0 %v2176
  %2240 = vmatpush1.bf16.msra.mxu0 %v2175
  %2241 = vmatprep.subr.bf16.mxu0 %v2178
  %2242 = vmatpush1.bf16.msra.mxu0 %v2177
  %2243 = vmatprep.subr.bf16.mxu0 %v2180
  %2244 = vmatpush1.bf16.msra.mxu0 %v2179
  %2245 = vmatprep.subr.bf16.mxu0 %v2182
  %2246 = vmatpush1.bf16.msra.mxu0 %v2181
  %2247 = vmatprep.subr.bf16.mxu0 %v2184
  %2248 = vmatpush1.bf16.msra.mxu0 %v2183
  %2249 = vmatprep.subr.bf16.mxu0 %v2186
  %2250 = vmatpush1.bf16.msra.mxu0 %v2185
  %2251 = vmatprep.subr.bf16.mxu0 %v2188
  %2252 = vmatpush1.bf16.msra.mxu0 %v2187
  %2253 = vmatprep.subr.bf16.mxu0 %v2190
  %2254 = vmatpush1.bf16.msra.mxu0 %v2189
  %2255 = vmatprep.subr.bf16.mxu0 %v2192
  %2256 = vmatpush1.bf16.msra.mxu0 %v2191
  %2257 = vmatprep.subr.bf16.mxu0 %v2194
  %2258 = vmatpush1.bf16.msra.mxu0 %v2193
  %2259 = vmatprep.mubr.bf16.mxu0 %v2064
  %2260 = vmatmul.mubr.bf16.gmra.mrb[0].mxu0 %v2063
  %v2261 = vpop.f32.mrb[0].mxu0
  %v2262 = vadd.f32 0.0, %v2261
  %v2263 = vpop.f32.mrb[0].mxu0
  %v2264 = vadd.f32 0.0, %v2263
  %v2265 = vpop.f32.mrb[0].mxu0
  %v2266 = vpop.f32.mrb[0].mxu0
  %2267 = vdwg.mxu0
  %v2268 = vadd.f32 %v2028, %v2262
  %v2269 = vadd.f32 %v2029, %v2264
  %v2270 = vld [vmem:[%s0 + $0x8] sm:$0xff]
  %v2271 = vld [vmem:[%s0 + $0x10] sm:$0x11]
  %s2272 = scalar_lea.vmem %s1, 2304
  %v2273 = vld [vmem:[%s2272] sm:$0xff]
  %v2274 = vld [vmem:[%s2272 + $0x8] sm:$0xff]
  %v2275 = vld [vmem:[%s2272 + $0x10] sm:$0xff]
  %v2276 = vld [vmem:[%s2272 + $0x18] sm:$0xff]
  %v2277 = vld [vmem:[%s2272 + $0x20] sm:$0xff]
  %v2278 = vld [vmem:[%s2272 + $0x28] sm:$0xff]
  %v2279 = vld [vmem:[%s2272 + $0x30] sm:$0xff]
  %v2280 = vld [vmem:[%s2272 + $0x38] sm:$0xff]
  %v2281 = vld [vmem:[%s2272 + $0x40] sm:$0xff]
  %v2282 = vld [vmem:[%s2272 + $0x48] sm:$0xff]
  %v2283 = vld [vmem:[%s2272 + $0x50] sm:$0xff]
  %v2284 = vld [vmem:[%s2272 + $0x58] sm:$0xff]
  %v2285 = vld [vmem:[%s2272 + $0x60] sm:$0xff]
  %v2286 = vld [vmem:[%s2272 + $0x68] sm:$0xff]
  %v2287 = vld [vmem:[%s2272 + $0x70] sm:$0xff]
  %v2288 = vld [vmem:[%s2272 + $0x78] sm:$0xff]
  %v2289 = vld [vmem:[%s2272 + $0x80] sm:$0xff]
  %v2290 = vld [vmem:[%s2272 + $0x88] sm:$0xff]
  %v2291 = vld [vmem:[%s2272 + $0x90] sm:$0xff]
  %v2292 = vld [vmem:[%s2272 + $0x98] sm:$0xff]
  %v2293 = vld [vmem:[%s2272 + $0xa0] sm:$0xff]
  %v2294 = vld [vmem:[%s2272 + $0xa8] sm:$0xff]
  %v2295 = vld [vmem:[%s2272 + $0xb0] sm:$0xff]
  %v2296 = vld [vmem:[%s2272 + $0xb8] sm:$0xff]
  %v2297 = vld [vmem:[%s2272 + $0xc0] sm:$0xff]
  %v2298 = vld [vmem:[%s2272 + $0xc8] sm:$0xff]
  %v2299 = vld [vmem:[%s2272 + $0xd0] sm:$0xff]
  %v2300 = vld [vmem:[%s2272 + $0xd8] sm:$0xff]
  %v2301 = vld [vmem:[%s2272 + $0xe0] sm:$0xff]
  %v2302 = vld [vmem:[%s2272 + $0xe8] sm:$0xff]
  %v2303 = vld [vmem:[%s2272 + $0xf0] sm:$0xff]
  %v2304 = vld [vmem:[%s2272 + $0xf8] sm:$0xff]
  %v2307 = vunpack.c.l.b16 %v2270
  %v2308 = vunpack.c.h.b16 %v2270
  %v2309 = vunpack.c.l.b16 %v2271
  %v2310 = vunpack.c.h.b16 %v2271
  %v2311 = vpack.c.b16 %v2309, %v2307
  %v2312 = vpack.c.b16 %v2310, %v2308
  %v2314 = vshrl.u32 %v2311, 16
  %v2316 = vshll.u32 %v2311, 16
  %v2318 = vrot.slane %v2316, 1
  %v2319 = vor.u32 %v2314, %v2318
  %v2321 = vshrl.u32 %v2312, 16
  %v2323 = vshll.u32 %v2312, 16
  %v2325 = vrot.slane %v2323, 1
  %v2326 = vor.u32 %v2321, %v2325
  %v2361 = vunpack.c.l.b16 %v2273
  %v2362 = vunpack.c.h.b16 %v2273
  %v2363 = vunpack.c.l.b16 %v2274
  %v2364 = vunpack.c.h.b16 %v2274
  %v2365 = vunpack.c.l.b16 %v2275
  %v2366 = vunpack.c.h.b16 %v2275
  %v2367 = vunpack.c.l.b16 %v2276
  %v2368 = vunpack.c.h.b16 %v2276
  %v2369 = vunpack.c.l.b16 %v2277
  %v2370 = vunpack.c.h.b16 %v2277
  %v2371 = vunpack.c.l.b16 %v2278
  %v2372 = vunpack.c.h.b16 %v2278
  %v2373 = vunpack.c.l.b16 %v2279
  %v2374 = vunpack.c.h.b16 %v2279
  %v2375 = vunpack.c.l.b16 %v2280
  %v2376 = vunpack.c.h.b16 %v2280
  %v2377 = vunpack.c.l.b16 %v2281
  %v2378 = vunpack.c.h.b16 %v2281
  %v2379 = vunpack.c.l.b16 %v2282
  %v2380 = vunpack.c.h.b16 %v2282
  %v2381 = vunpack.c.l.b16 %v2283
  %v2382 = vunpack.c.h.b16 %v2283
  %v2383 = vunpack.c.l.b16 %v2284
  %v2384 = vunpack.c.h.b16 %v2284
  %v2385 = vunpack.c.l.b16 %v2285
  %v2386 = vunpack.c.h.b16 %v2285
  %v2387 = vunpack.c.l.b16 %v2286
  %v2388 = vunpack.c.h.b16 %v2286
  %v2389 = vunpack.c.l.b16 %v2287
  %v2390 = vunpack.c.h.b16 %v2287
  %v2391 = vunpack.c.l.b16 %v2288
  %v2392 = vunpack.c.h.b16 %v2288
  %v2393 = vunpack.c.l.b16 %v2289
  %v2394 = vunpack.c.h.b16 %v2289
  %v2395 = vunpack.c.l.b16 %v2290
  %v2396 = vunpack.c.h.b16 %v2290
  %v2397 = vunpack.c.l.b16 %v2291
  %v2398 = vunpack.c.h.b16 %v2291
  %v2399 = vunpack.c.l.b16 %v2292
  %v2400 = vunpack.c.h.b16 %v2292
  %v2401 = vunpack.c.l.b16 %v2293
  %v2402 = vunpack.c.h.b16 %v2293
  %v2403 = vunpack.c.l.b16 %v2294
  %v2404 = vunpack.c.h.b16 %v2294
  %v2405 = vunpack.c.l.b16 %v2295
  %v2406 = vunpack.c.h.b16 %v2295
  %v2407 = vunpack.c.l.b16 %v2296
  %v2408 = vunpack.c.h.b16 %v2296
  %v2409 = vunpack.c.l.b16 %v2297
  %v2410 = vunpack.c.h.b16 %v2297
  %v2411 = vunpack.c.l.b16 %v2298
  %v2412 = vunpack.c.h.b16 %v2298
  %v2413 = vunpack.c.l.b16 %v2299
  %v2414 = vunpack.c.h.b16 %v2299
  %v2415 = vunpack.c.l.b16 %v2300
  %v2416 = vunpack.c.h.b16 %v2300
  %v2417 = vunpack.c.l.b16 %v2301
  %v2418 = vunpack.c.h.b16 %v2301
  %v2419 = vunpack.c.l.b16 %v2302
  %v2420 = vunpack.c.h.b16 %v2302
  %v2421 = vunpack.c.l.b16 %v2303
  %v2422 = vunpack.c.h.b16 %v2303
  %v2423 = vunpack.c.l.b16 %v2304
  %v2424 = vunpack.c.h.b16 %v2304
  %v2425 = vpack.c.b16 %v2363, %v2361
  %v2426 = vpack.c.b16 %v2364, %v2362
  %v2427 = vpack.c.b16 %v2367, %v2365
  %v2428 = vpack.c.b16 %v2368, %v2366
  %v2429 = vpack.c.b16 %v2371, %v2369
  %v2430 = vpack.c.b16 %v2372, %v2370
  %v2431 = vpack.c.b16 %v2375, %v2373
  %v2432 = vpack.c.b16 %v2376, %v2374
  %v2433 = vpack.c.b16 %v2379, %v2377
  %v2434 = vpack.c.b16 %v2380, %v2378
  %v2435 = vpack.c.b16 %v2383, %v2381
  %v2436 = vpack.c.b16 %v2384, %v2382
  %v2437 = vpack.c.b16 %v2387, %v2385
  %v2438 = vpack.c.b16 %v2388, %v2386
  %v2439 = vpack.c.b16 %v2391, %v2389
  %v2440 = vpack.c.b16 %v2392, %v2390
  %v2441 = vpack.c.b16 %v2395, %v2393
  %v2442 = vpack.c.b16 %v2396, %v2394
  %v2443 = vpack.c.b16 %v2399, %v2397
  %v2444 = vpack.c.b16 %v2400, %v2398
  %v2445 = vpack.c.b16 %v2403, %v2401
  %v2446 = vpack.c.b16 %v2404, %v2402
  %v2447 = vpack.c.b16 %v2407, %v2405
  %v2448 = vpack.c.b16 %v2408, %v2406
  %v2449 = vpack.c.b16 %v2411, %v2409
  %v2450 = vpack.c.b16 %v2412, %v2410
  %v2451 = vpack.c.b16 %v2415, %v2413
  %v2452 = vpack.c.b16 %v2416, %v2414
  %v2453 = vpack.c.b16 %v2419, %v2417
  %v2454 = vpack.c.b16 %v2420, %v2418
  %v2455 = vpack.c.b16 %v2423, %v2421
  %v2456 = vpack.c.b16 %v2424, %v2422
  %2489 = vmatprep.subr.bf16.mxu0 %v2426
  %2490 = vmatpush1.bf16.msra.mxu0 %v2425
  %2491 = vmatprep.subr.bf16.mxu0 %v2428
  %2492 = vmatpush1.bf16.msra.mxu0 %v2427
  %2493 = vmatprep.subr.bf16.mxu0 %v2430
  %2494 = vmatpush1.bf16.msra.mxu0 %v2429
  %2495 = vmatprep.subr.bf16.mxu0 %v2432
  %2496 = vmatpush1.bf16.msra.mxu0 %v2431
  %2497 = vmatprep.subr.bf16.mxu0 %v2434
  %2498 = vmatpush1.bf16.msra.mxu0 %v2433
  %2499 = vmatprep.subr.bf16.mxu0 %v2436
  %2500 = vmatpush1.bf16.msra.mxu0 %v2435
  %2501 = vmatprep.subr.bf16.mxu0 %v2438
  %2502 = vmatpush1.bf16.msra.mxu0 %v2437
  %2503 = vmatprep.subr.bf16.mxu0 %v2440
  %2504 = vmatpush1.bf16.msra.mxu0 %v2439
  %2505 = vmatprep.subr.bf16.mxu0 %v2442
  %2506 = vmatpush1.bf16.msra.mxu0 %v2441
  %2507 = vmatprep.subr.bf16.mxu0 %v2444
  %2508 = vmatpush1.bf16.msra.mxu0 %v2443
  %2509 = vmatprep.subr.bf16.mxu0 %v2446
  %2510 = vmatpush1.bf16.msra.mxu0 %v2445
  %2511 = vmatprep.subr.bf16.mxu0 %v2448
  %2512 = vmatpush1.bf16.msra.mxu0 %v2447
  %2513 = vmatprep.subr.bf16.mxu0 %v2450
  %2514 = vmatpush1.bf16.msra.mxu0 %v2449
  %2515 = vmatprep.subr.bf16.mxu0 %v2452
  %2516 = vmatpush1.bf16.msra.mxu0 %v2451
  %2517 = vmatprep.subr.bf16.mxu0 %v2454
  %2518 = vmatpush1.bf16.msra.mxu0 %v2453
  %2519 = vmatprep.subr.bf16.mxu0 %v2456
  %2520 = vmatpush1.bf16.msra.mxu0 %v2455
  %2521 = vmatprep.mubr.bf16.mxu0 %v2326
  %2522 = vmatmul.mubr.bf16.gmra.mrb[0].mxu0 %v2319
  %v2523 = vpop.f32.mrb[0].mxu0
  %v2524 = vadd.f32 0.0, %v2523
  %v2525 = vpop.f32.mrb[0].mxu0
  %v2526 = vadd.f32 0.0, %v2525
  %v2527 = vpop.f32.mrb[0].mxu0
  %v2528 = vpop.f32.mrb[0].mxu0
  %2529 = vdwg.mxu0
  %v2530 = vadd.f32 %v2268, %v2524
  %v2531 = vadd.f32 %v2269, %v2526
  %v2532 = vld [vmem:[%s0 + $0x8] sm:$0xee]
  %s2533 = scalar_lea.vmem %s1, 2560
  %v2534 = vld [vmem:[%s2533] sm:$0xff]
  %v2535 = vld [vmem:[%s2533 + $0x8] sm:$0xff]
  %v2536 = vld [vmem:[%s2533 + $0x10] sm:$0xff]
  %v2537 = vld [vmem:[%s2533 + $0x18] sm:$0xff]
  %v2538 = vld [vmem:[%s2533 + $0x20] sm:$0xff]
  %v2539 = vld [vmem:[%s2533 + $0x28] sm:$0xff]
  %v2540 = vld [vmem:[%s2533 + $0x30] sm:$0xff]
  %v2541 = vld [vmem:[%s2533 + $0x38] sm:$0xff]
  %v2542 = vld [vmem:[%s2533 + $0x40] sm:$0xff]
  %v2543 = vld [vmem:[%s2533 + $0x48] sm:$0xff]
  %v2544 = vld [vmem:[%s2533 + $0x50] sm:$0xff]
  %v2545 = vld [vmem:[%s2533 + $0x58] sm:$0xff]
  %v2546 = vld [vmem:[%s2533 + $0x60] sm:$0xff]
  %v2547 = vld [vmem:[%s2533 + $0x68] sm:$0xff]
  %v2548 = vld [vmem:[%s2533 + $0x70] sm:$0xff]
  %v2549 = vld [vmem:[%s2533 + $0x78] sm:$0xff]
  %v2550 = vld [vmem:[%s2533 + $0x80] sm:$0xff]
  %v2551 = vld [vmem:[%s2533 + $0x88] sm:$0xff]
  %v2552 = vld [vmem:[%s2533 + $0x90] sm:$0xff]
  %v2553 = vld [vmem:[%s2533 + $0x98] sm:$0xff]
  %v2554 = vld [vmem:[%s2533 + $0xa0] sm:$0xff]
  %v2555 = vld [vmem:[%s2533 + $0xa8] sm:$0xff]
  %v2556 = vld [vmem:[%s2533 + $0xb0] sm:$0xff]
  %v2557 = vld [vmem:[%s2533 + $0xb8] sm:$0xff]
  %v2558 = vld [vmem:[%s2533 + $0xc0] sm:$0xff]
  %v2559 = vld [vmem:[%s2533 + $0xc8] sm:$0xff]
  %v2560 = vld [vmem:[%s2533 + $0xd0] sm:$0xff]
  %v2561 = vld [vmem:[%s2533 + $0xd8] sm:$0xff]
  %v2562 = vld [vmem:[%s2533 + $0xe0] sm:$0xff]
  %v2563 = vld [vmem:[%s2533 + $0xe8] sm:$0xff]
  %v2564 = vld [vmem:[%s2533 + $0xf0] sm:$0xff]
  %v2565 = vld [vmem:[%s2533 + $0xf8] sm:$0xff]
  %v2567 = vunpack.c.l.b16 %v2532
  %v2568 = vunpack.c.h.b16 %v2532
  %v2569 = vpack.c.b16 %v2309, %v2567
  %v2570 = vpack.c.b16 %v2310, %v2568
  %v2571 = vrot.slane %v2569, 1
  %v2572 = vrot.slane %v2570, 1
  %v2607 = vunpack.c.l.b16 %v2534
  %v2608 = vunpack.c.h.b16 %v2534
  %v2609 = vunpack.c.l.b16 %v2535
  %v2610 = vunpack.c.h.b16 %v2535
  %v2611 = vunpack.c.l.b16 %v2536
  %v2612 = vunpack.c.h.b16 %v2536
  %v2613 = vunpack.c.l.b16 %v2537
  %v2614 = vunpack.c.h.b16 %v2537
  %v2615 = vunpack.c.l.b16 %v2538
  %v2616 = vunpack.c.h.b16 %v2538
  %v2617 = vunpack.c.l.b16 %v2539
  %v2618 = vunpack.c.h.b16 %v2539
  %v2619 = vunpack.c.l.b16 %v2540
  %v2620 = vunpack.c.h.b16 %v2540
  %v2621 = vunpack.c.l.b16 %v2541
  %v2622 = vunpack.c.h.b16 %v2541
  %v2623 = vunpack.c.l.b16 %v2542
  %v2624 = vunpack.c.h.b16 %v2542
  %v2625 = vunpack.c.l.b16 %v2543
  %v2626 = vunpack.c.h.b16 %v2543
  %v2627 = vunpack.c.l.b16 %v2544
  %v2628 = vunpack.c.h.b16 %v2544
  %v2629 = vunpack.c.l.b16 %v2545
  %v2630 = vunpack.c.h.b16 %v2545
  %v2631 = vunpack.c.l.b16 %v2546
  %v2632 = vunpack.c.h.b16 %v2546
  %v2633 = vunpack.c.l.b16 %v2547
  %v2634 = vunpack.c.h.b16 %v2547
  %v2635 = vunpack.c.l.b16 %v2548
  %v2636 = vunpack.c.h.b16 %v2548
  %v2637 = vunpack.c.l.b16 %v2549
  %v2638 = vunpack.c.h.b16 %v2549
  %v2639 = vunpack.c.l.b16 %v2550
  %v2640 = vunpack.c.h.b16 %v2550
  %v2641 = vunpack.c.l.b16 %v2551
  %v2642 = vunpack.c.h.b16 %v2551
  %v2643 = vunpack.c.l.b16 %v2552
  %v2644 = vunpack.c.h.b16 %v2552
  %v2645 = vunpack.c.l.b16 %v2553
  %v2646 = vunpack.c.h.b16 %v2553
  %v2647 = vunpack.c.l.b16 %v2554
  %v2648 = vunpack.c.h.b16 %v2554
  %v2649 = vunpack.c.l.b16 %v2555
  %v2650 = vunpack.c.h.b16 %v2555
  %v2651 = vunpack.c.l.b16 %v2556
  %v2652 = vunpack.c.h.b16 %v2556
  %v2653 = vunpack.c.l.b16 %v2557
  %v2654 = vunpack.c.h.b16 %v2557
  %v2655 = vunpack.c.l.b16 %v2558
  %v2656 = vunpack.c.h.b16 %v2558
  %v2657 = vunpack.c.l.b16 %v2559
  %v2658 = vunpack.c.h.b16 %v2559
  %v2659 = vunpack.c.l.b16 %v2560
  %v2660 = vunpack.c.h.b16 %v2560
  %v2661 = vunpack.c.l.b16 %v2561
  %v2662 = vunpack.c.h.b16 %v2561
  %v2663 = vunpack.c.l.b16 %v2562
  %v2664 = vunpack.c.h.b16 %v2562
  %v2665 = vunpack.c.l.b16 %v2563
  %v2666 = vunpack.c.h.b16 %v2563
  %v2667 = vunpack.c.l.b16 %v2564
  %v2668 = vunpack.c.h.b16 %v2564
  %v2669 = vunpack.c.l.b16 %v2565
  %v2670 = vunpack.c.h.b16 %v2565
  %v2671 = vpack.c.b16 %v2609, %v2607
  %v2672 = vpack.c.b16 %v2610, %v2608
  %v2673 = vpack.c.b16 %v2613, %v2611
  %v2674 = vpack.c.b16 %v2614, %v2612
  %v2675 = vpack.c.b16 %v2617, %v2615
  %v2676 = vpack.c.b16 %v2618, %v2616
  %v2677 = vpack.c.b16 %v2621, %v2619
  %v2678 = vpack.c.b16 %v2622, %v2620
  %v2679 = vpack.c.b16 %v2625, %v2623
  %v2680 = vpack.c.b16 %v2626, %v2624
  %v2681 = vpack.c.b16 %v2629, %v2627
  %v2682 = vpack.c.b16 %v2630, %v2628
  %v2683 = vpack.c.b16 %v2633, %v2631
  %v2684 = vpack.c.b16 %v2634, %v2632
  %v2685 = vpack.c.b16 %v2637, %v2635
  %v2686 = vpack.c.b16 %v2638, %v2636
  %v2687 = vpack.c.b16 %v2641, %v2639
  %v2688 = vpack.c.b16 %v2642, %v2640
  %v2689 = vpack.c.b16 %v2645, %v2643
  %v2690 = vpack.c.b16 %v2646, %v2644
  %v2691 = vpack.c.b16 %v2649, %v2647
  %v2692 = vpack.c.b16 %v2650, %v2648
  %v2693 = vpack.c.b16 %v2653, %v2651
  %v2694 = vpack.c.b16 %v2654, %v2652
  %v2695 = vpack.c.b16 %v2657, %v2655
  %v2696 = vpack.c.b16 %v2658, %v2656
  %v2697 = vpack.c.b16 %v2661, %v2659
  %v2698 = vpack.c.b16 %v2662, %v2660
  %v2699 = vpack.c.b16 %v2665, %v2663
  %v2700 = vpack.c.b16 %v2666, %v2664
  %v2701 = vpack.c.b16 %v2669, %v2667
  %v2702 = vpack.c.b16 %v2670, %v2668
  %2735 = vmatprep.subr.bf16.mxu0 %v2672
  %2736 = vmatpush1.bf16.msra.mxu0 %v2671
  %2737 = vmatprep.subr.bf16.mxu0 %v2674
  %2738 = vmatpush1.bf16.msra.mxu0 %v2673
  %2739 = vmatprep.subr.bf16.mxu0 %v2676
  %2740 = vmatpush1.bf16.msra.mxu0 %v2675
  %2741 = vmatprep.subr.bf16.mxu0 %v2678
  %2742 = vmatpush1.bf16.msra.mxu0 %v2677
  %2743 = vmatprep.subr.bf16.mxu0 %v2680
  %2744 = vmatpush1.bf16.msra.mxu0 %v2679
  %2745 = vmatprep.subr.bf16.mxu0 %v2682
  %2746 = vmatpush1.bf16.msra.mxu0 %v2681
  %2747 = vmatprep.subr.bf16.mxu0 %v2684
  %2748 = vmatpush1.bf16.msra.mxu0 %v2683
  %2749 = vmatprep.subr.bf16.mxu0 %v2686
  %2750 = vmatpush1.bf16.msra.mxu0 %v2685
  %2751 = vmatprep.subr.bf16.mxu0 %v2688
  %2752 = vmatpush1.bf16.msra.mxu0 %v2687
  %2753 = vmatprep.subr.bf16.mxu0 %v2690
  %2754 = vmatpush1.bf16.msra.mxu0 %v2689
  %2755 = vmatprep.subr.bf16.mxu0 %v2692
  %2756 = vmatpush1.bf16.msra.mxu0 %v2691
  %2757 = vmatprep.subr.bf16.mxu0 %v2694
  %2758 = vmatpush1.bf16.msra.mxu0 %v2693
  %2759 = vmatprep.subr.bf16.mxu0 %v2696
  %2760 = vmatpush1.bf16.msra.mxu0 %v2695
  %2761 = vmatprep.subr.bf16.mxu0 %v2698
  %2762 = vmatpush1.bf16.msra.mxu0 %v2697
  %2763 = vmatprep.subr.bf16.mxu0 %v2700
  %2764 = vmatpush1.bf16.msra.mxu0 %v2699
  %2765 = vmatprep.subr.bf16.mxu0 %v2702
  %2766 = vmatpush1.bf16.msra.mxu0 %v2701
  %2767 = vmatprep.mubr.bf16.mxu0 %v2572
  %2768 = vmatmul.mubr.bf16.gmra.mrb[0].mxu0 %v2571
  %v2769 = vpop.f32.mrb[0].mxu0
  %v2770 = vadd.f32 0.0, %v2769
  %v2771 = vpop.f32.mrb[0].mxu0
  %v2772 = vadd.f32 0.0, %v2771
  %v2773 = vpop.f32.mrb[0].mxu0
  %v2774 = vpop.f32.mrb[0].mxu0
  %2775 = vdwg.mxu0
  %v2776 = vadd.f32 %v2530, %v2770
  %v2777 = vadd.f32 %v2531, %v2772
  %v2778 = vld [vmem:[%s0 + $0x10] sm:$0x33]
  %s2779 = scalar_lea.vmem %s1, 2816
  %v2780 = vld [vmem:[%s2779] sm:$0xff]
  %v2781 = vld [vmem:[%s2779 + $0x8] sm:$0xff]
  %v2782 = vld [vmem:[%s2779 + $0x10] sm:$0xff]
  %v2783 = vld [vmem:[%s2779 + $0x18] sm:$0xff]
  %v2784 = vld [vmem:[%s2779 + $0x20] sm:$0xff]
  %v2785 = vld [vmem:[%s2779 + $0x28] sm:$0xff]
  %v2786 = vld [vmem:[%s2779 + $0x30] sm:$0xff]
  %v2787 = vld [vmem:[%s2779 + $0x38] sm:$0xff]
  %v2788 = vld [vmem:[%s2779 + $0x40] sm:$0xff]
  %v2789 = vld [vmem:[%s2779 + $0x48] sm:$0xff]
  %v2790 = vld [vmem:[%s2779 + $0x50] sm:$0xff]
  %v2791 = vld [vmem:[%s2779 + $0x58] sm:$0xff]
  %v2792 = vld [vmem:[%s2779 + $0x60] sm:$0xff]
  %v2793 = vld [vmem:[%s2779 + $0x68] sm:$0xff]
  %v2794 = vld [vmem:[%s2779 + $0x70] sm:$0xff]
  %v2795 = vld [vmem:[%s2779 + $0x78] sm:$0xff]
  %v2796 = vld [vmem:[%s2779 + $0x80] sm:$0xff]
  %v2797 = vld [vmem:[%s2779 + $0x88] sm:$0xff]
  %v2798 = vld [vmem:[%s2779 + $0x90] sm:$0xff]
  %v2799 = vld [vmem:[%s2779 + $0x98] sm:$0xff]
  %v2800 = vld [vmem:[%s2779 + $0xa0] sm:$0xff]
  %v2801 = vld [vmem:[%s2779 + $0xa8] sm:$0xff]
  %v2802 = vld [vmem:[%s2779 + $0xb0] sm:$0xff]
  %v2803 = vld [vmem:[%s2779 + $0xb8] sm:$0xff]
  %v2804 = vld [vmem:[%s2779 + $0xc0] sm:$0xff]
  %v2805 = vld [vmem:[%s2779 + $0xc8] sm:$0xff]
  %v2806 = vld [vmem:[%s2779 + $0xd0] sm:$0xff]
  %v2807 = vld [vmem:[%s2779 + $0xd8] sm:$0xff]
  %v2808 = vld [vmem:[%s2779 + $0xe0] sm:$0xff]
  %v2809 = vld [vmem:[%s2779 + $0xe8] sm:$0xff]
  %v2810 = vld [vmem:[%s2779 + $0xf0] sm:$0xff]
  %v2811 = vld [vmem:[%s2779 + $0xf8] sm:$0xff]
  %v2813 = vunpack.c.l.b16 %v2778
  %v2814 = vunpack.c.h.b16 %v2778
  %v2815 = vpack.c.b16 %v2813, %v2567
  %v2816 = vpack.c.b16 %v2814, %v2568
  %v2818 = vshrl.u32 %v2815, 16
  %v2820 = vrot.slane %v2818, 1
  %v2821 = vshll.u32 %v2815, 16
  %v2823 = vrot.slane %v2821, 2
  %v2824 = vor.u32 %v2820, %v2823
  %v2826 = vshrl.u32 %v2816, 16
  %v2828 = vrot.slane %v2826, 1
  %v2829 = vshll.u32 %v2816, 16
  %v2831 = vrot.slane %v2829, 2
  %v2832 = vor.u32 %v2828, %v2831
  %v2867 = vunpack.c.l.b16 %v2780
  %v2868 = vunpack.c.h.b16 %v2780
  %v2869 = vunpack.c.l.b16 %v2781
  %v2870 = vunpack.c.h.b16 %v2781
  %v2871 = vunpack.c.l.b16 %v2782
  %v2872 = vunpack.c.h.b16 %v2782
  %v2873 = vunpack.c.l.b16 %v2783
  %v2874 = vunpack.c.h.b16 %v2783
  %v2875 = vunpack.c.l.b16 %v2784
  %v2876 = vunpack.c.h.b16 %v2784
  %v2877 = vunpack.c.l.b16 %v2785
  %v2878 = vunpack.c.h.b16 %v2785
  %v2879 = vunpack.c.l.b16 %v2786
  %v2880 = vunpack.c.h.b16 %v2786
  %v2881 = vunpack.c.l.b16 %v2787
  %v2882 = vunpack.c.h.b16 %v2787
  %v2883 = vunpack.c.l.b16 %v2788
  %v2884 = vunpack.c.h.b16 %v2788
  %v2885 = vunpack.c.l.b16 %v2789
  %v2886 = vunpack.c.h.b16 %v2789
  %v2887 = vunpack.c.l.b16 %v2790
  %v2888 = vunpack.c.h.b16 %v2790
  %v2889 = vunpack.c.l.b16 %v2791
  %v2890 = vunpack.c.h.b16 %v2791
  %v2891 = vunpack.c.l.b16 %v2792
  %v2892 = vunpack.c.h.b16 %v2792
  %v2893 = vunpack.c.l.b16 %v2793
  %v2894 = vunpack.c.h.b16 %v2793
  %v2895 = vunpack.c.l.b16 %v2794
  %v2896 = vunpack.c.h.b16 %v2794
  %v2897 = vunpack.c.l.b16 %v2795
  %v2898 = vunpack.c.h.b16 %v2795
  %v2899 = vunpack.c.l.b16 %v2796
  %v2900 = vunpack.c.h.b16 %v2796
  %v2901 = vunpack.c.l.b16 %v2797
  %v2902 = vunpack.c.h.b16 %v2797
  %v2903 = vunpack.c.l.b16 %v2798
  %v2904 = vunpack.c.h.b16 %v2798
  %v2905 = vunpack.c.l.b16 %v2799
  %v2906 = vunpack.c.h.b16 %v2799
  %v2907 = vunpack.c.l.b16 %v2800
  %v2908 = vunpack.c.h.b16 %v2800
  %v2909 = vunpack.c.l.b16 %v2801
  %v2910 = vunpack.c.h.b16 %v2801
  %v2911 = vunpack.c.l.b16 %v2802
  %v2912 = vunpack.c.h.b16 %v2802
  %v2913 = vunpack.c.l.b16 %v2803
  %v2914 = vunpack.c.h.b16 %v2803
  %v2915 = vunpack.c.l.b16 %v2804
  %v2916 = vunpack.c.h.b16 %v2804
  %v2917 = vunpack.c.l.b16 %v2805
  %v2918 = vunpack.c.h.b16 %v2805
  %v2919 = vunpack.c.l.b16 %v2806
  %v2920 = vunpack.c.h.b16 %v2806
  %v2921 = vunpack.c.l.b16 %v2807
  %v2922 = vunpack.c.h.b16 %v2807
  %v2923 = vunpack.c.l.b16 %v2808
  %v2924 = vunpack.c.h.b16 %v2808
  %v2925 = vunpack.c.l.b16 %v2809
  %v2926 = vunpack.c.h.b16 %v2809
  %v2927 = vunpack.c.l.b16 %v2810
  %v2928 = vunpack.c.h.b16 %v2810
  %v2929 = vunpack.c.l.b16 %v2811
  %v2930 = vunpack.c.h.b16 %v2811
  %v2931 = vpack.c.b16 %v2869, %v2867
  %v2932 = vpack.c.b16 %v2870, %v2868
  %v2933 = vpack.c.b16 %v2873, %v2871
  %v2934 = vpack.c.b16 %v2874, %v2872
  %v2935 = vpack.c.b16 %v2877, %v2875
  %v2936 = vpack.c.b16 %v2878, %v2876
  %v2937 = vpack.c.b16 %v2881, %v2879
  %v2938 = vpack.c.b16 %v2882, %v2880
  %v2939 = vpack.c.b16 %v2885, %v2883
  %v2940 = vpack.c.b16 %v2886, %v2884
  %v2941 = vpack.c.b16 %v2889, %v2887
  %v2942 = vpack.c.b16 %v2890, %v2888
  %v2943 = vpack.c.b16 %v2893, %v2891
  %v2944 = vpack.c.b16 %v2894, %v2892
  %v2945 = vpack.c.b16 %v2897, %v2895
  %v2946 = vpack.c.b16 %v2898, %v2896
  %v2947 = vpack.c.b16 %v2901, %v2899
  %v2948 = vpack.c.b16 %v2902, %v2900
  %v2949 = vpack.c.b16 %v2905, %v2903
  %v2950 = vpack.c.b16 %v2906, %v2904
  %v2951 = vpack.c.b16 %v2909, %v2907
  %v2952 = vpack.c.b16 %v2910, %v2908
  %v2953 = vpack.c.b16 %v2913, %v2911
  %v2954 = vpack.c.b16 %v2914, %v2912
  %v2955 = vpack.c.b16 %v2917, %v2915
  %v2956 = vpack.c.b16 %v2918, %v2916
  %v2957 = vpack.c.b16 %v2921, %v2919
  %v2958 = vpack.c.b16 %v2922, %v2920
  %v2959 = vpack.c.b16 %v2925, %v2923
  %v2960 = vpack.c.b16 %v2926, %v2924
  %v2961 = vpack.c.b16 %v2929, %v2927
  %v2962 = vpack.c.b16 %v2930, %v2928
  %2995 = vmatprep.subr.bf16.mxu0 %v2932
  %2996 = vmatpush1.bf16.msra.mxu0 %v2931
  %2997 = vmatprep.subr.bf16.mxu0 %v2934
  %2998 = vmatpush1.bf16.msra.mxu0 %v2933
  %2999 = vmatprep.subr.bf16.mxu0 %v2936
  %3000 = vmatpush1.bf16.msra.mxu0 %v2935
  %3001 = vmatprep.subr.bf16.mxu0 %v2938
  %3002 = vmatpush1.bf16.msra.mxu0 %v2937
  %3003 = vmatprep.subr.bf16.mxu0 %v2940
  %3004 = vmatpush1.bf16.msra.mxu0 %v2939
  %3005 = vmatprep.subr.bf16.mxu0 %v2942
  %3006 = vmatpush1.bf16.msra.mxu0 %v2941
  %3007 = vmatprep.subr.bf16.mxu0 %v2944
  %3008 = vmatpush1.bf16.msra.mxu0 %v2943
  %3009 = vmatprep.subr.bf16.mxu0 %v2946
  %3010 = vmatpush1.bf16.msra.mxu0 %v2945
  %3011 = vmatprep.subr.bf16.mxu0 %v2948
  %3012 = vmatpush1.bf16.msra.mxu0 %v2947
  %3013 = vmatprep.subr.bf16.mxu0 %v2950
  %3014 = vmatpush1.bf16.msra.mxu0 %v2949
  %3015 = vmatprep.subr.bf16.mxu0 %v2952
  %3016 = vmatpush1.bf16.msra.mxu0 %v2951
  %3017 = vmatprep.subr.bf16.mxu0 %v2954
  %3018 = vmatpush1.bf16.msra.mxu0 %v2953
  %3019 = vmatprep.subr.bf16.mxu0 %v2956
  %3020 = vmatpush1.bf16.msra.mxu0 %v2955
  %3021 = vmatprep.subr.bf16.mxu0 %v2958
  %3022 = vmatpush1.bf16.msra.mxu0 %v2957
  %3023 = vmatprep.subr.bf16.mxu0 %v2960
  %3024 = vmatpush1.bf16.msra.mxu0 %v2959
  %3025 = vmatprep.subr.bf16.mxu0 %v2962
  %3026 = vmatpush1.bf16.msra.mxu0 %v2961
  %3027 = vmatprep.mubr.bf16.mxu0 %v2832
  %3028 = vmatmul.mubr.bf16.gmra.mrb[0].mxu0 %v2824
  %v3029 = vpop.f32.mrb[0].mxu0
  %v3030 = vadd.f32 0.0, %v3029
  %v3031 = vpop.f32.mrb[0].mxu0
  %v3032 = vadd.f32 0.0, %v3031
  %v3033 = vpop.f32.mrb[0].mxu0
  %v3034 = vpop.f32.mrb[0].mxu0
  %3035 = vdwg.mxu0
  %v3036 = vadd.f32 %v2776, %v3030
  %v3037 = vadd.f32 %v2777, %v3032
  %v3038 = vld [vmem:[%s0 + $0x8] sm:$0xcc]
  %s3039 = scalar_lea.vmem %s1, 3072
  %v3040 = vld [vmem:[%s3039] sm:$0xff]
  %v3041 = vld [vmem:[%s3039 + $0x8] sm:$0xff]
  %v3042 = vld [vmem:[%s3039 + $0x10] sm:$0xff]
  %v3043 = vld [vmem:[%s3039 + $0x18] sm:$0xff]
  %v3044 = vld [vmem:[%s3039 + $0x20] sm:$0xff]
  %v3045 = vld [vmem:[%s3039 + $0x28] sm:$0xff]
  %v3046 = vld [vmem:[%s3039 + $0x30] sm:$0xff]
  %v3047 = vld [vmem:[%s3039 + $0x38] sm:$0xff]
  %v3048 = vld [vmem:[%s3039 + $0x40] sm:$0xff]
  %v3049 = vld [vmem:[%s3039 + $0x48] sm:$0xff]
  %v3050 = vld [vmem:[%s3039 + $0x50] sm:$0xff]
  %v3051 = vld [vmem:[%s3039 + $0x58] sm:$0xff]
  %v3052 = vld [vmem:[%s3039 + $0x60] sm:$0xff]
  %v3053 = vld [vmem:[%s3039 + $0x68] sm:$0xff]
  %v3054 = vld [vmem:[%s3039 + $0x70] sm:$0xff]
  %v3055 = vld [vmem:[%s3039 + $0x78] sm:$0xff]
  %v3056 = vld [vmem:[%s3039 + $0x80] sm:$0xff]
  %v3057 = vld [vmem:[%s3039 + $0x88] sm:$0xff]
  %v3058 = vld [vmem:[%s3039 + $0x90] sm:$0xff]
  %v3059 = vld [vmem:[%s3039 + $0x98] sm:$0xff]
  %v3060 = vld [vmem:[%s3039 + $0xa0] sm:$0xff]
  %v3061 = vld [vmem:[%s3039 + $0xa8] sm:$0xff]
  %v3062 = vld [vmem:[%s3039 + $0xb0] sm:$0xff]
  %v3063 = vld [vmem:[%s3039 + $0xb8] sm:$0xff]
  %v3064 = vld [vmem:[%s3039 + $0xc0] sm:$0xff]
  %v3065 = vld [vmem:[%s3039 + $0xc8] sm:$0xff]
  %v3066 = vld [vmem:[%s3039 + $0xd0] sm:$0xff]
  %v3067 = vld [vmem:[%s3039 + $0xd8] sm:$0xff]
  %v3068 = vld [vmem:[%s3039 + $0xe0] sm:$0xff]
  %v3069 = vld [vmem:[%s3039 + $0xe8] sm:$0xff]
  %v3070 = vld [vmem:[%s3039 + $0xf0] sm:$0xff]
  %v3071 = vld [vmem:[%s3039 + $0xf8] sm:$0xff]
  %v3073 = vunpack.c.l.b16 %v3038
  %v3074 = vunpack.c.h.b16 %v3038
  %v3075 = vpack.c.b16 %v2813, %v3073
  %v3076 = vpack.c.b16 %v2814, %v3074
  %v3077 = vrot.slane %v3075, 2
  %v3078 = vrot.slane %v3076, 2
  %v3113 = vunpack.c.l.b16 %v3040
  %v3114 = vunpack.c.h.b16 %v3040
  %v3115 = vunpack.c.l.b16 %v3041
  %v3116 = vunpack.c.h.b16 %v3041
  %v3117 = vunpack.c.l.b16 %v3042
  %v3118 = vunpack.c.h.b16 %v3042
  %v3119 = vunpack.c.l.b16 %v3043
  %v3120 = vunpack.c.h.b16 %v3043
  %v3121 = vunpack.c.l.b16 %v3044
  %v3122 = vunpack.c.h.b16 %v3044
  %v3123 = vunpack.c.l.b16 %v3045
  %v3124 = vunpack.c.h.b16 %v3045
  %v3125 = vunpack.c.l.b16 %v3046
  %v3126 = vunpack.c.h.b16 %v3046
  %v3127 = vunpack.c.l.b16 %v3047
  %v3128 = vunpack.c.h.b16 %v3047
  %v3129 = vunpack.c.l.b16 %v3048
  %v3130 = vunpack.c.h.b16 %v3048
  %v3131 = vunpack.c.l.b16 %v3049
  %v3132 = vunpack.c.h.b16 %v3049
  %v3133 = vunpack.c.l.b16 %v3050
  %v3134 = vunpack.c.h.b16 %v3050
  %v3135 = vunpack.c.l.b16 %v3051
  %v3136 = vunpack.c.h.b16 %v3051
  %v3137 = vunpack.c.l.b16 %v3052
  %v3138 = vunpack.c.h.b16 %v3052
  %v3139 = vunpack.c.l.b16 %v3053
  %v3140 = vunpack.c.h.b16 %v3053
  %v3141 = vunpack.c.l.b16 %v3054
  %v3142 = vunpack.c.h.b16 %v3054
  %v3143 = vunpack.c.l.b16 %v3055
  %v3144 = vunpack.c.h.b16 %v3055
  %v3145 = vunpack.c.l.b16 %v3056
  %v3146 = vunpack.c.h.b16 %v3056
  %v3147 = vunpack.c.l.b16 %v3057
  %v3148 = vunpack.c.h.b16 %v3057
  %v3149 = vunpack.c.l.b16 %v3058
  %v3150 = vunpack.c.h.b16 %v3058
  %v3151 = vunpack.c.l.b16 %v3059
  %v3152 = vunpack.c.h.b16 %v3059
  %v3153 = vunpack.c.l.b16 %v3060
  %v3154 = vunpack.c.h.b16 %v3060
  %v3155 = vunpack.c.l.b16 %v3061
  %v3156 = vunpack.c.h.b16 %v3061
  %v3157 = vunpack.c.l.b16 %v3062
  %v3158 = vunpack.c.h.b16 %v3062
  %v3159 = vunpack.c.l.b16 %v3063
  %v3160 = vunpack.c.h.b16 %v3063
  %v3161 = vunpack.c.l.b16 %v3064
  %v3162 = vunpack.c.h.b16 %v3064
  %v3163 = vunpack.c.l.b16 %v3065
  %v3164 = vunpack.c.h.b16 %v3065
  %v3165 = vunpack.c.l.b16 %v3066
  %v3166 = vunpack.c.h.b16 %v3066
  %v3167 = vunpack.c.l.b16 %v3067
  %v3168 = vunpack.c.h.b16 %v3067
  %v3169 = vunpack.c.l.b16 %v3068
  %v3170 = vunpack.c.h.b16 %v3068
  %v3171 = vunpack.c.l.b16 %v3069
  %v3172 = vunpack.c.h.b16 %v3069
  %v3173 = vunpack.c.l.b16 %v3070
  %v3174 = vunpack.c.h.b16 %v3070
  %v3175 = vunpack.c.l.b16 %v3071
  %v3176 = vunpack.c.h.b16 %v3071
  %v3177 = vpack.c.b16 %v3115, %v3113
  %v3178 = vpack.c.b16 %v3116, %v3114
  %v3179 = vpack.c.b16 %v3119, %v3117
  %v3180 = vpack.c.b16 %v3120, %v3118
  %v3181 = vpack.c.b16 %v3123, %v3121
  %v3182 = vpack.c.b16 %v3124, %v3122
  %v3183 = vpack.c.b16 %v3127, %v3125
  %v3184 = vpack.c.b16 %v3128, %v3126
  %v3185 = vpack.c.b16 %v3131, %v3129
  %v3186 = vpack.c.b16 %v3132, %v3130
  %v3187 = vpack.c.b16 %v3135, %v3133
  %v3188 = vpack.c.b16 %v3136, %v3134
  %v3189 = vpack.c.b16 %v3139, %v3137
  %v3190 = vpack.c.b16 %v3140, %v3138
  %v3191 = vpack.c.b16 %v3143, %v3141
  %v3192 = vpack.c.b16 %v3144, %v3142
  %v3193 = vpack.c.b16 %v3147, %v3145
  %v3194 = vpack.c.b16 %v3148, %v3146
  %v3195 = vpack.c.b16 %v3151, %v3149
  %v3196 = vpack.c.b16 %v3152, %v3150
  %v3197 = vpack.c.b16 %v3155, %v3153
  %v3198 = vpack.c.b16 %v3156, %v3154
  %v3199 = vpack.c.b16 %v3159, %v3157
  %v3200 = vpack.c.b16 %v3160, %v3158
  %v3201 = vpack.c.b16 %v3163, %v3161
  %v3202 = vpack.c.b16 %v3164, %v3162
  %v3203 = vpack.c.b16 %v3167, %v3165
  %v3204 = vpack.c.b16 %v3168, %v3166
  %v3205 = vpack.c.b16 %v3171, %v3169
  %v3206 = vpack.c.b16 %v3172, %v3170
  %v3207 = vpack.c.b16 %v3175, %v3173
  %v3208 = vpack.c.b16 %v3176, %v3174
  %3241 = vmatprep.subr.bf16.mxu0 %v3178
  %3242 = vmatpush1.bf16.msra.mxu0 %v3177
  %3243 = vmatprep.subr.bf16.mxu0 %v3180
  %3244 = vmatpush1.bf16.msra.mxu0 %v3179
  %3245 = vmatprep.subr.bf16.mxu0 %v3182
  %3246 = vmatpush1.bf16.msra.mxu0 %v3181
  %3247 = vmatprep.subr.bf16.mxu0 %v3184
  %3248 = vmatpush1.bf16.msra.mxu0 %v3183
  %3249 = vmatprep.subr.bf16.mxu0 %v3186
  %3250 = vmatpush1.bf16.msra.mxu0 %v3185
  %3251 = vmatprep.subr.bf16.mxu0 %v3188
  %3252 = vmatpush1.bf16.msra.mxu0 %v3187
  %3253 = vmatprep.subr.bf16.mxu0 %v3190
  %3254 = vmatpush1.bf16.msra.mxu0 %v3189
  %3255 = vmatprep.subr.bf16.mxu0 %v3192
  %3256 = vmatpush1.bf16.msra.mxu0 %v3191
  %3257 = vmatprep.subr.bf16.mxu0 %v3194
  %3258 = vmatpush1.bf16.msra.mxu0 %v3193
  %3259 = vmatprep.subr.bf16.mxu0 %v3196
  %3260 = vmatpush1.bf16.msra.mxu0 %v3195
  %3261 = vmatprep.subr.bf16.mxu0 %v3198
  %3262 = vmatpush1.bf16.msra.mxu0 %v3197
  %3263 = vmatprep.subr.bf16.mxu0 %v3200
  %3264 = vmatpush1.bf16.msra.mxu0 %v3199
  %3265 = vmatprep.subr.bf16.mxu0 %v3202
  %3266 = vmatpush1.bf16.msra.mxu0 %v3201
  %3267 = vmatprep.subr.bf16.mxu0 %v3204
  %3268 = vmatpush1.bf16.msra.mxu0 %v3203
  %3269 = vmatprep.subr.bf16.mxu0 %v3206
  %3270 = vmatpush1.bf16.msra.mxu0 %v3205
  %3271 = vmatprep.subr.bf16.mxu0 %v3208
  %3272 = vmatpush1.bf16.msra.mxu0 %v3207
  %3273 = vmatprep.mubr.bf16.mxu0 %v3078
  %3274 = vmatmul.mubr.bf16.gmra.mrb[0].mxu0 %v3077
  %v3275 = vpop.f32.mrb[0].mxu0
  %v3276 = vadd.f32 0.0, %v3275
  %v3277 = vpop.f32.mrb[0].mxu0
  %v3278 = vadd.f32 0.0, %v3277
  %v3279 = vpop.f32.mrb[0].mxu0
  %v3280 = vpop.f32.mrb[0].mxu0
  %3281 = vdwg.mxu0
  %v3282 = vadd.f32 %v3036, %v3276
  %v3283 = vadd.f32 %v3037, %v3278
  %v3285 = vlaneseq
  %v3286 = vshrl.u32 %v3285, 7
  %v3287 = vsub.s32 0, %v3286
  %v3288 = vrot.slane %v14, %v3287
  %v3289 = vlaneseq
  %v3290 = vshrl.u32 %v3289, 7
  %v3291 = vsub.s32 1, %v3290
  %v3292 = vrot.slane %v14, %v3291
  %v3295 = vadd.f32 %v3282, %v3288
  %v3296 = vadd.f32 %v3283, %v3292
  %3297 = vst [vmem:[%s3] sm:$0xff] %v3295
  %3298 = vst [vmem:[%s3 + $0x8] sm:$0xff] %v3296
  %s3299 = scalar_lea.vmem %s0, 24
  %v3300 = vld [vmem:[%s3299] sm:$0xff]
  %v3301 = vld [vmem:[%s1] sm:$0xff]
  %v3302 = vld [vmem:[%s1 + $0x8] sm:$0xff]
  %v3303 = vld [vmem:[%s1 + $0x10] sm:$0xff]
  %v3304 = vld [vmem:[%s1 + $0x18] sm:$0xff]
  %v3305 = vld [vmem:[%s1 + $0x20] sm:$0xff]
  %v3306 = vld [vmem:[%s1 + $0x28] sm:$0xff]
  %v3307 = vld [vmem:[%s1 + $0x30] sm:$0xff]
  %v3308 = vld [vmem:[%s1 + $0x38] sm:$0xff]
  %v3309 = vld [vmem:[%s1 + $0x40] sm:$0xff]
  %v3310 = vld [vmem:[%s1 + $0x48] sm:$0xff]
  %v3311 = vld [vmem:[%s1 + $0x50] sm:$0xff]
  %v3312 = vld [vmem:[%s1 + $0x58] sm:$0xff]
  %v3313 = vld [vmem:[%s1 + $0x60] sm:$0xff]
  %v3314 = vld [vmem:[%s1 + $0x68] sm:$0xff]
  %v3315 = vld [vmem:[%s1 + $0x70] sm:$0xff]
  %v3316 = vld [vmem:[%s1 + $0x78] sm:$0xff]
  %v3317 = vld [vmem:[%s1 + $0x80] sm:$0xff]
  %v3318 = vld [vmem:[%s1 + $0x88] sm:$0xff]
  %v3319 = vld [vmem:[%s1 + $0x90] sm:$0xff]
  %v3320 = vld [vmem:[%s1 + $0x98] sm:$0xff]
  %v3321 = vld [vmem:[%s1 + $0xa0] sm:$0xff]
  %v3322 = vld [vmem:[%s1 + $0xa8] sm:$0xff]
  %v3323 = vld [vmem:[%s1 + $0xb0] sm:$0xff]
  %v3324 = vld [vmem:[%s1 + $0xb8] sm:$0xff]
  %v3325 = vld [vmem:[%s1 + $0xc0] sm:$0xff]
  %v3326 = vld [vmem:[%s1 + $0xc8] sm:$0xff]
  %v3327 = vld [vmem:[%s1 + $0xd0] sm:$0xff]
  %v3328 = vld [vmem:[%s1 + $0xd8] sm:$0xff]
  %v3329 = vld [vmem:[%s1 + $0xe0] sm:$0xff]
  %v3330 = vld [vmem:[%s1 + $0xe8] sm:$0xff]
  %v3331 = vld [vmem:[%s1 + $0xf0] sm:$0xff]
  %v3332 = vld [vmem:[%s1 + $0xf8] sm:$0xff]
  %v3333 = vld [vmem:[%s3299 + $0x8] sm:$0x11]
  %v3334 = vld [vmem:[%s49] sm:$0xff]
  %v3335 = vld [vmem:[%s49 + $0x8] sm:$0xff]
  %v3336 = vld [vmem:[%s49 + $0x10] sm:$0xff]
  %v3337 = vld [vmem:[%s49 + $0x18] sm:$0xff]
  %v3338 = vld [vmem:[%s49 + $0x20] sm:$0xff]
  %v3339 = vld [vmem:[%s49 + $0x28] sm:$0xff]
  %v3340 = vld [vmem:[%s49 + $0x30] sm:$0xff]
  %v3341 = vld [vmem:[%s49 + $0x38] sm:$0xff]
  %v3342 = vld [vmem:[%s49 + $0x40] sm:$0xff]
  %v3343 = vld [vmem:[%s49 + $0x48] sm:$0xff]
  %v3344 = vld [vmem:[%s49 + $0x50] sm:$0xff]
  %v3345 = vld [vmem:[%s49 + $0x58] sm:$0xff]
  %v3346 = vld [vmem:[%s49 + $0x60] sm:$0xff]
  %v3347 = vld [vmem:[%s49 + $0x68] sm:$0xff]
  %v3348 = vld [vmem:[%s49 + $0x70] sm:$0xff]
  %v3349 = vld [vmem:[%s49 + $0x78] sm:$0xff]
  %v3350 = vld [vmem:[%s49 + $0x80] sm:$0xff]
  %v3351 = vld [vmem:[%s49 + $0x88] sm:$0xff]
  %v3352 = vld [vmem:[%s49 + $0x90] sm:$0xff]
  %v3353 = vld [vmem:[%s49 + $0x98] sm:$0xff]
  %v3354 = vld [vmem:[%s49 + $0xa0] sm:$0xff]
  %v3355 = vld [vmem:[%s49 + $0xa8] sm:$0xff]
  %v3356 = vld [vmem:[%s49 + $0xb0] sm:$0xff]
  %v3357 = vld [vmem:[%s49 + $0xb8] sm:$0xff]
  %v3358 = vld [vmem:[%s49 + $0xc0] sm:$0xff]
  %v3359 = vld [vmem:[%s49 + $0xc8] sm:$0xff]
  %v3360 = vld [vmem:[%s49 + $0xd0] sm:$0xff]
  %v3361 = vld [vmem:[%s49 + $0xd8] sm:$0xff]
  %v3362 = vld [vmem:[%s49 + $0xe0] sm:$0xff]
  %v3363 = vld [vmem:[%s49 + $0xe8] sm:$0xff]
  %v3364 = vld [vmem:[%s49 + $0xf0] sm:$0xff]
  %v3365 = vld [vmem:[%s49 + $0xf8] sm:$0xff]
  %v3368 = vunpack.c.l.b16 %v3300
  %v3369 = vunpack.c.h.b16 %v3300
  %v3370 = vunpack.c.l.b16 %v3333
  %v3371 = vunpack.c.h.b16 %v3333
  %v3372 = vpack.c.b16 %v3370, %v3368
  %v3373 = vpack.c.b16 %v3371, %v3369
  %v3375 = vshrl.u32 %v3372, 16
  %v3377 = vshll.u32 %v3372, 16
  %v3379 = vrot.slane %v3377, 1
  %v3380 = vor.u32 %v3375, %v3379
  %v3382 = vshrl.u32 %v3373, 16
  %v3384 = vshll.u32 %v3373, 16
  %v3386 = vrot.slane %v3384, 1
  %v3387 = vor.u32 %v3382, %v3386
  %v3422 = vunpack.c.l.b16 %v3334
  %v3423 = vunpack.c.h.b16 %v3334
  %v3424 = vunpack.c.l.b16 %v3335
  %v3425 = vunpack.c.h.b16 %v3335
  %v3426 = vunpack.c.l.b16 %v3336
  %v3427 = vunpack.c.h.b16 %v3336
  %v3428 = vunpack.c.l.b16 %v3337
  %v3429 = vunpack.c.h.b16 %v3337
  %v3430 = vunpack.c.l.b16 %v3338
  %v3431 = vunpack.c.h.b16 %v3338
  %v3432 = vunpack.c.l.b16 %v3339
  %v3433 = vunpack.c.h.b16 %v3339
  %v3434 = vunpack.c.l.b16 %v3340
  %v3435 = vunpack.c.h.b16 %v3340
  %v3436 = vunpack.c.l.b16 %v3341
  %v3437 = vunpack.c.h.b16 %v3341
  %v3438 = vunpack.c.l.b16 %v3342
  %v3439 = vunpack.c.h.b16 %v3342
  %v3440 = vunpack.c.l.b16 %v3343
  %v3441 = vunpack.c.h.b16 %v3343
  %v3442 = vunpack.c.l.b16 %v3344
  %v3443 = vunpack.c.h.b16 %v3344
  %v3444 = vunpack.c.l.b16 %v3345
  %v3445 = vunpack.c.h.b16 %v3345
  %v3446 = vunpack.c.l.b16 %v3346
  %v3447 = vunpack.c.h.b16 %v3346
  %v3448 = vunpack.c.l.b16 %v3347
  %v3449 = vunpack.c.h.b16 %v3347
  %v3450 = vunpack.c.l.b16 %v3348
  %v3451 = vunpack.c.h.b16 %v3348
  %v3452 = vunpack.c.l.b16 %v3349
  %v3453 = vunpack.c.h.b16 %v3349
  %v3454 = vunpack.c.l.b16 %v3350
  %v3455 = vunpack.c.h.b16 %v3350
  %v3456 = vunpack.c.l.b16 %v3351
  %v3457 = vunpack.c.h.b16 %v3351
  %v3458 = vunpack.c.l.b16 %v3352
  %v3459 = vunpack.c.h.b16 %v3352
  %v3460 = vunpack.c.l.b16 %v3353
  %v3461 = vunpack.c.h.b16 %v3353
  %v3462 = vunpack.c.l.b16 %v3354
  %v3463 = vunpack.c.h.b16 %v3354
  %v3464 = vunpack.c.l.b16 %v3355
  %v3465 = vunpack.c.h.b16 %v3355
  %v3466 = vunpack.c.l.b16 %v3356
  %v3467 = vunpack.c.h.b16 %v3356
  %v3468 = vunpack.c.l.b16 %v3357
  %v3469 = vunpack.c.h.b16 %v3357
  %v3470 = vunpack.c.l.b16 %v3358
  %v3471 = vunpack.c.h.b16 %v3358
  %v3472 = vunpack.c.l.b16 %v3359
  %v3473 = vunpack.c.h.b16 %v3359
  %v3474 = vunpack.c.l.b16 %v3360
  %v3475 = vunpack.c.h.b16 %v3360
  %v3476 = vunpack.c.l.b16 %v3361
  %v3477 = vunpack.c.h.b16 %v3361
  %v3478 = vunpack.c.l.b16 %v3362
  %v3479 = vunpack.c.h.b16 %v3362
  %v3480 = vunpack.c.l.b16 %v3363
  %v3481 = vunpack.c.h.b16 %v3363
  %v3482 = vunpack.c.l.b16 %v3364
  %v3483 = vunpack.c.h.b16 %v3364
  %v3484 = vunpack.c.l.b16 %v3365
  %v3485 = vunpack.c.h.b16 %v3365
  %v3486 = vpack.c.b16 %v3424, %v3422
  %v3487 = vpack.c.b16 %v3425, %v3423
  %v3488 = vpack.c.b16 %v3428, %v3426
  %v3489 = vpack.c.b16 %v3429, %v3427
  %v3490 = vpack.c.b16 %v3432, %v3430
  %v3491 = vpack.c.b16 %v3433, %v3431
  %v3492 = vpack.c.b16 %v3436, %v3434
  %v3493 = vpack.c.b16 %v3437, %v3435
  %v3494 = vpack.c.b16 %v3440, %v3438
  %v3495 = vpack.c.b16 %v3441, %v3439
  %v3496 = vpack.c.b16 %v3444, %v3442
  %v3497 = vpack.c.b16 %v3445, %v3443
  %v3498 = vpack.c.b16 %v3448, %v3446
  %v3499 = vpack.c.b16 %v3449, %v3447
  %v3500 = vpack.c.b16 %v3452, %v3450
  %v3501 = vpack.c.b16 %v3453, %v3451
  %v3502 = vpack.c.b16 %v3456, %v3454
  %v3503 = vpack.c.b16 %v3457, %v3455
  %v3504 = vpack.c.b16 %v3460, %v3458
  %v3505 = vpack.c.b16 %v3461, %v3459
  %v3506 = vpack.c.b16 %v3464, %v3462
  %v3507 = vpack.c.b16 %v3465, %v3463
  %v3508 = vpack.c.b16 %v3468, %v3466
  %v3509 = vpack.c.b16 %v3469, %v3467
  %v3510 = vpack.c.b16 %v3472, %v3470
  %v3511 = vpack.c.b16 %v3473, %v3471
  %v3512 = vpack.c.b16 %v3476, %v3474
  %v3513 = vpack.c.b16 %v3477, %v3475
  %v3514 = vpack.c.b16 %v3480, %v3478
  %v3515 = vpack.c.b16 %v3481, %v3479
  %v3516 = vpack.c.b16 %v3484, %v3482
  %v3517 = vpack.c.b16 %v3485, %v3483
  %3550 = vmatprep.subr.bf16.mxu0 %v3487
  %3551 = vmatpush1.bf16.msra.mxu0 %v3486
  %3552 = vmatprep.subr.bf16.mxu0 %v3489
  %3553 = vmatpush1.bf16.msra.mxu0 %v3488
  %3554 = vmatprep.subr.bf16.mxu0 %v3491
  %3555 = vmatpush1.bf16.msra.mxu0 %v3490
  %3556 = vmatprep.subr.bf16.mxu0 %v3493
  %3557 = vmatpush1.bf16.msra.mxu0 %v3492
  %3558 = vmatprep.subr.bf16.mxu0 %v3495
  %3559 = vmatpush1.bf16.msra.mxu0 %v3494
  %3560 = vmatprep.subr.bf16.mxu0 %v3497
  %3561 = vmatpush1.bf16.msra.mxu0 %v3496
  %3562 = vmatprep.subr.bf16.mxu0 %v3499
  %3563 = vmatpush1.bf16.msra.mxu0 %v3498
  %3564 = vmatprep.subr.bf16.mxu0 %v3501
  %3565 = vmatpush1.bf16.msra.mxu0 %v3500
  %3566 = vmatprep.subr.bf16.mxu0 %v3503
  %3567 = vmatpush1.bf16.msra.mxu0 %v3502
  %3568 = vmatprep.subr.bf16.mxu0 %v3505
  %3569 = vmatpush1.bf16.msra.mxu0 %v3504
  %3570 = vmatprep.subr.bf16.mxu0 %v3507
  %3571 = vmatpush1.bf16.msra.mxu0 %v3506
  %3572 = vmatprep.subr.bf16.mxu0 %v3509
  %3573 = vmatpush1.bf16.msra.mxu0 %v3508
  %3574 = vmatprep.subr.bf16.mxu0 %v3511
  %3575 = vmatpush1.bf16.msra.mxu0 %v3510
  %3576 = vmatprep.subr.bf16.mxu0 %v3513
  %3577 = vmatpush1.bf16.msra.mxu0 %v3512
  %3578 = vmatprep.subr.bf16.mxu0 %v3515
  %3579 = vmatpush1.bf16.msra.mxu0 %v3514
  %3580 = vmatprep.subr.bf16.mxu0 %v3517
  %3581 = vmatpush1.bf16.msra.mxu0 %v3516
  %3582 = vmatprep.mubr.bf16.mxu0 %v3387
  %3583 = vmatmul.mubr.bf16.gmra.mrb[0].mxu0 %v3380
  %v3584 = vpop.f32.mrb[0].mxu0
  %v3585 = vadd.f32 0.0, %v3584
  %v3586 = vpop.f32.mrb[0].mxu0
  %v3587 = vadd.f32 0.0, %v3586
  %v3588 = vpop.f32.mrb[0].mxu0
  %v3589 = vpop.f32.mrb[0].mxu0
  %3590 = vdwg.mxu0
  %v3591 = vpack.c.b16 %v3368, %v3368
  %v3592 = vpack.c.b16 %v3369, %v3369
  %v3627 = vunpack.c.l.b16 %v3301
  %v3628 = vunpack.c.h.b16 %v3301
  %v3629 = vunpack.c.l.b16 %v3302
  %v3630 = vunpack.c.h.b16 %v3302
  %v3631 = vunpack.c.l.b16 %v3303
  %v3632 = vunpack.c.h.b16 %v3303
  %v3633 = vunpack.c.l.b16 %v3304
  %v3634 = vunpack.c.h.b16 %v3304
  %v3635 = vunpack.c.l.b16 %v3305
  %v3636 = vunpack.c.h.b16 %v3305
  %v3637 = vunpack.c.l.b16 %v3306
  %v3638 = vunpack.c.h.b16 %v3306
  %v3639 = vunpack.c.l.b16 %v3307
  %v3640 = vunpack.c.h.b16 %v3307
  %v3641 = vunpack.c.l.b16 %v3308
  %v3642 = vunpack.c.h.b16 %v3308
  %v3643 = vunpack.c.l.b16 %v3309
  %v3644 = vunpack.c.h.b16 %v3309
  %v3645 = vunpack.c.l.b16 %v3310
  %v3646 = vunpack.c.h.b16 %v3310
  %v3647 = vunpack.c.l.b16 %v3311
  %v3648 = vunpack.c.h.b16 %v3311
  %v3649 = vunpack.c.l.b16 %v3312
  %v3650 = vunpack.c.h.b16 %v3312
  %v3651 = vunpack.c.l.b16 %v3313
  %v3652 = vunpack.c.h.b16 %v3313
  %v3653 = vunpack.c.l.b16 %v3314
  %v3654 = vunpack.c.h.b16 %v3314
  %v3655 = vunpack.c.l.b16 %v3315
  %v3656 = vunpack.c.h.b16 %v3315
  %v3657 = vunpack.c.l.b16 %v3316
  %v3658 = vunpack.c.h.b16 %v3316
  %v3659 = vunpack.c.l.b16 %v3317
  %v3660 = vunpack.c.h.b16 %v3317
  %v3661 = vunpack.c.l.b16 %v3318
  %v3662 = vunpack.c.h.b16 %v3318
  %v3663 = vunpack.c.l.b16 %v3319
  %v3664 = vunpack.c.h.b16 %v3319
  %v3665 = vunpack.c.l.b16 %v3320
  %v3666 = vunpack.c.h.b16 %v3320
  %v3667 = vunpack.c.l.b16 %v3321
  %v3668 = vunpack.c.h.b16 %v3321
  %v3669 = vunpack.c.l.b16 %v3322
  %v3670 = vunpack.c.h.b16 %v3322
  %v3671 = vunpack.c.l.b16 %v3323
  %v3672 = vunpack.c.h.b16 %v3323
  %v3673 = vunpack.c.l.b16 %v3324
  %v3674 = vunpack.c.h.b16 %v3324
  %v3675 = vunpack.c.l.b16 %v3325
  %v3676 = vunpack.c.h.b16 %v3325
  %v3677 = vunpack.c.l.b16 %v3326
  %v3678 = vunpack.c.h.b16 %v3326
  %v3679 = vunpack.c.l.b16 %v3327
  %v3680 = vunpack.c.h.b16 %v3327
  %v3681 = vunpack.c.l.b16 %v3328
  %v3682 = vunpack.c.h.b16 %v3328
  %v3683 = vunpack.c.l.b16 %v3329
  %v3684 = vunpack.c.h.b16 %v3329
  %v3685 = vunpack.c.l.b16 %v3330
  %v3686 = vunpack.c.h.b16 %v3330
  %v3687 = vunpack.c.l.b16 %v3331
  %v3688 = vunpack.c.h.b16 %v3331
  %v3689 = vunpack.c.l.b16 %v3332
  %v3690 = vunpack.c.h.b16 %v3332
  %v3691 = vpack.c.b16 %v3629, %v3627
  %v3692 = vpack.c.b16 %v3630, %v3628
  %v3693 = vpack.c.b16 %v3633, %v3631
  %v3694 = vpack.c.b16 %v3634, %v3632
  %v3695 = vpack.c.b16 %v3637, %v3635
  %v3696 = vpack.c.b16 %v3638, %v3636
  %v3697 = vpack.c.b16 %v3641, %v3639
  %v3698 = vpack.c.b16 %v3642, %v3640
  %v3699 = vpack.c.b16 %v3645, %v3643
  %v3700 = vpack.c.b16 %v3646, %v3644
  %v3701 = vpack.c.b16 %v3649, %v3647
  %v3702 = vpack.c.b16 %v3650, %v3648
  %v3703 = vpack.c.b16 %v3653, %v3651
  %v3704 = vpack.c.b16 %v3654, %v3652
  %v3705 = vpack.c.b16 %v3657, %v3655
  %v3706 = vpack.c.b16 %v3658, %v3656
  %v3707 = vpack.c.b16 %v3661, %v3659
  %v3708 = vpack.c.b16 %v3662, %v3660
  %v3709 = vpack.c.b16 %v3665, %v3663
  %v3710 = vpack.c.b16 %v3666, %v3664
  %v3711 = vpack.c.b16 %v3669, %v3667
  %v3712 = vpack.c.b16 %v3670, %v3668
  %v3713 = vpack.c.b16 %v3673, %v3671
  %v3714 = vpack.c.b16 %v3674, %v3672
  %v3715 = vpack.c.b16 %v3677, %v3675
  %v3716 = vpack.c.b16 %v3678, %v3676
  %v3717 = vpack.c.b16 %v3681, %v3679
  %v3718 = vpack.c.b16 %v3682, %v3680
  %v3719 = vpack.c.b16 %v3685, %v3683
  %v3720 = vpack.c.b16 %v3686, %v3684
  %v3721 = vpack.c.b16 %v3689, %v3687
  %v3722 = vpack.c.b16 %v3690, %v3688
  %3755 = vmatprep.subr.bf16.mxu0 %v3692
  %3756 = vmatpush1.bf16.msra.mxu0 %v3691
  %3757 = vmatprep.subr.bf16.mxu0 %v3694
  %3758 = vmatpush1.bf16.msra.mxu0 %v3693
  %3759 = vmatprep.subr.bf16.mxu0 %v3696
  %3760 = vmatpush1.bf16.msra.mxu0 %v3695
  %3761 = vmatprep.subr.bf16.mxu0 %v3698
  %3762 = vmatpush1.bf16.msra.mxu0 %v3697
  %3763 = vmatprep.subr.bf16.mxu0 %v3700
  %3764 = vmatpush1.bf16.msra.mxu0 %v3699
  %3765 = vmatprep.subr.bf16.mxu0 %v3702
  %3766 = vmatpush1.bf16.msra.mxu0 %v3701
  %3767 = vmatprep.subr.bf16.mxu0 %v3704
  %3768 = vmatpush1.bf16.msra.mxu0 %v3703
  %3769 = vmatprep.subr.bf16.mxu0 %v3706
  %3770 = vmatpush1.bf16.msra.mxu0 %v3705
  %3771 = vmatprep.subr.bf16.mxu0 %v3708
  %3772 = vmatpush1.bf16.msra.mxu0 %v3707
  %3773 = vmatprep.subr.bf16.mxu0 %v3710
  %3774 = vmatpush1.bf16.msra.mxu0 %v3709
  %3775 = vmatprep.subr.bf16.mxu0 %v3712
  %3776 = vmatpush1.bf16.msra.mxu0 %v3711
  %3777 = vmatprep.subr.bf16.mxu0 %v3714
  %3778 = vmatpush1.bf16.msra.mxu0 %v3713
  %3779 = vmatprep.subr.bf16.mxu0 %v3716
  %3780 = vmatpush1.bf16.msra.mxu0 %v3715
  %3781 = vmatprep.subr.bf16.mxu0 %v3718
  %3782 = vmatpush1.bf16.msra.mxu0 %v3717
  %3783 = vmatprep.subr.bf16.mxu0 %v3720
  %3784 = vmatpush1.bf16.msra.mxu0 %v3719
  %3785 = vmatprep.subr.bf16.mxu0 %v3722
  %3786 = vmatpush1.bf16.msra.mxu0 %v3721
  %3787 = vmatprep.mubr.bf16.mxu0 %v3592
  %3788 = vmatmul.mubr.bf16.gmra.mrb[0].mxu0 %v3591
  %v3789 = vpop.f32.mrb[0].mxu0
  %v3790 = vadd.f32 %v3585, %v3789
  %v3791 = vpop.f32.mrb[0].mxu0
  %v3792 = vadd.f32 %v3587, %v3791
  %v3793 = vpop.f32.mrb[0].mxu0
  %v3794 = vpop.f32.mrb[0].mxu0
  %3795 = vdwg.mxu0
  %v3796 = vld [vmem:[%s3299] sm:$0xee]
  %v3797 = vld [vmem:[%s513] sm:$0xff]
  %v3798 = vld [vmem:[%s513 + $0x8] sm:$0xff]
  %v3799 = vld [vmem:[%s513 + $0x10] sm:$0xff]
  %v3800 = vld [vmem:[%s513 + $0x18] sm:$0xff]
  %v3801 = vld [vmem:[%s513 + $0x20] sm:$0xff]
  %v3802 = vld [vmem:[%s513 + $0x28] sm:$0xff]
  %v3803 = vld [vmem:[%s513 + $0x30] sm:$0xff]
  %v3804 = vld [vmem:[%s513 + $0x38] sm:$0xff]
  %v3805 = vld [vmem:[%s513 + $0x40] sm:$0xff]
  %v3806 = vld [vmem:[%s513 + $0x48] sm:$0xff]
  %v3807 = vld [vmem:[%s513 + $0x50] sm:$0xff]
  %v3808 = vld [vmem:[%s513 + $0x58] sm:$0xff]
  %v3809 = vld [vmem:[%s513 + $0x60] sm:$0xff]
  %v3810 = vld [vmem:[%s513 + $0x68] sm:$0xff]
  %v3811 = vld [vmem:[%s513 + $0x70] sm:$0xff]
  %v3812 = vld [vmem:[%s513 + $0x78] sm:$0xff]
  %v3813 = vld [vmem:[%s513 + $0x80] sm:$0xff]
  %v3814 = vld [vmem:[%s513 + $0x88] sm:$0xff]
  %v3815 = vld [vmem:[%s513 + $0x90] sm:$0xff]
  %v3816 = vld [vmem:[%s513 + $0x98] sm:$0xff]
  %v3817 = vld [vmem:[%s513 + $0xa0] sm:$0xff]
  %v3818 = vld [vmem:[%s513 + $0xa8] sm:$0xff]
  %v3819 = vld [vmem:[%s513 + $0xb0] sm:$0xff]
  %v3820 = vld [vmem:[%s513 + $0xb8] sm:$0xff]
  %v3821 = vld [vmem:[%s513 + $0xc0] sm:$0xff]
  %v3822 = vld [vmem:[%s513 + $0xc8] sm:$0xff]
  %v3823 = vld [vmem:[%s513 + $0xd0] sm:$0xff]
  %v3824 = vld [vmem:[%s513 + $0xd8] sm:$0xff]
  %v3825 = vld [vmem:[%s513 + $0xe0] sm:$0xff]
  %v3826 = vld [vmem:[%s513 + $0xe8] sm:$0xff]
  %v3827 = vld [vmem:[%s513 + $0xf0] sm:$0xff]
  %v3828 = vld [vmem:[%s513 + $0xf8] sm:$0xff]
  %v3830 = vunpack.c.l.b16 %v3796
  %v3831 = vunpack.c.h.b16 %v3796
  %v3832 = vpack.c.b16 %v3370, %v3830
  %v3833 = vpack.c.b16 %v3371, %v3831
  %v3834 = vrot.slane %v3832, 1
  %v3835 = vrot.slane %v3833, 1
  %v3870 = vunpack.c.l.b16 %v3797
  %v3871 = vunpack.c.h.b16 %v3797
  %v3872 = vunpack.c.l.b16 %v3798
  %v3873 = vunpack.c.h.b16 %v3798
  %v3874 = vunpack.c.l.b16 %v3799
  %v3875 = vunpack.c.h.b16 %v3799
  %v3876 = vunpack.c.l.b16 %v3800
  %v3877 = vunpack.c.h.b16 %v3800
  %v3878 = vunpack.c.l.b16 %v3801
  %v3879 = vunpack.c.h.b16 %v3801
  %v3880 = vunpack.c.l.b16 %v3802
  %v3881 = vunpack.c.h.b16 %v3802
  %v3882 = vunpack.c.l.b16 %v3803
  %v3883 = vunpack.c.h.b16 %v3803
  %v3884 = vunpack.c.l.b16 %v3804
  %v3885 = vunpack.c.h.b16 %v3804
  %v3886 = vunpack.c.l.b16 %v3805
  %v3887 = vunpack.c.h.b16 %v3805
  %v3888 = vunpack.c.l.b16 %v3806
  %v3889 = vunpack.c.h.b16 %v3806
  %v3890 = vunpack.c.l.b16 %v3807
  %v3891 = vunpack.c.h.b16 %v3807
  %v3892 = vunpack.c.l.b16 %v3808
  %v3893 = vunpack.c.h.b16 %v3808
  %v3894 = vunpack.c.l.b16 %v3809
  %v3895 = vunpack.c.h.b16 %v3809
  %v3896 = vunpack.c.l.b16 %v3810
  %v3897 = vunpack.c.h.b16 %v3810
  %v3898 = vunpack.c.l.b16 %v3811
  %v3899 = vunpack.c.h.b16 %v3811
  %v3900 = vunpack.c.l.b16 %v3812
  %v3901 = vunpack.c.h.b16 %v3812
  %v3902 = vunpack.c.l.b16 %v3813
  %v3903 = vunpack.c.h.b16 %v3813
  %v3904 = vunpack.c.l.b16 %v3814
  %v3905 = vunpack.c.h.b16 %v3814
  %v3906 = vunpack.c.l.b16 %v3815
  %v3907 = vunpack.c.h.b16 %v3815
  %v3908 = vunpack.c.l.b16 %v3816
  %v3909 = vunpack.c.h.b16 %v3816
  %v3910 = vunpack.c.l.b16 %v3817
  %v3911 = vunpack.c.h.b16 %v3817
  %v3912 = vunpack.c.l.b16 %v3818
  %v3913 = vunpack.c.h.b16 %v3818
  %v3914 = vunpack.c.l.b16 %v3819
  %v3915 = vunpack.c.h.b16 %v3819
  %v3916 = vunpack.c.l.b16 %v3820
  %v3917 = vunpack.c.h.b16 %v3820
  %v3918 = vunpack.c.l.b16 %v3821
  %v3919 = vunpack.c.h.b16 %v3821
  %v3920 = vunpack.c.l.b16 %v3822
  %v3921 = vunpack.c.h.b16 %v3822
  %v3922 = vunpack.c.l.b16 %v3823
  %v3923 = vunpack.c.h.b16 %v3823
  %v3924 = vunpack.c.l.b16 %v3824
  %v3925 = vunpack.c.h.b16 %v3824
  %v3926 = vunpack.c.l.b16 %v3825
  %v3927 = vunpack.c.h.b16 %v3825
  %v3928 = vunpack.c.l.b16 %v3826
  %v3929 = vunpack.c.h.b16 %v3826
  %v3930 = vunpack.c.l.b16 %v3827
  %v3931 = vunpack.c.h.b16 %v3827
  %v3932 = vunpack.c.l.b16 %v3828
  %v3933 = vunpack.c.h.b16 %v3828
  %v3934 = vpack.c.b16 %v3872, %v3870
  %v3935 = vpack.c.b16 %v3873, %v3871
  %v3936 = vpack.c.b16 %v3876, %v3874
  %v3937 = vpack.c.b16 %v3877, %v3875
  %v3938 = vpack.c.b16 %v3880, %v3878
  %v3939 = vpack.c.b16 %v3881, %v3879
  %v3940 = vpack.c.b16 %v3884, %v3882
  %v3941 = vpack.c.b16 %v3885, %v3883
  %v3942 = vpack.c.b16 %v3888, %v3886
  %v3943 = vpack.c.b16 %v3889, %v3887
  %v3944 = vpack.c.b16 %v3892, %v3890
  %v3945 = vpack.c.b16 %v3893, %v3891
  %v3946 = vpack.c.b16 %v3896, %v3894
  %v3947 = vpack.c.b16 %v3897, %v3895
  %v3948 = vpack.c.b16 %v3900, %v3898
  %v3949 = vpack.c.b16 %v3901, %v3899
  %v3950 = vpack.c.b16 %v3904, %v3902
  %v3951 = vpack.c.b16 %v3905, %v3903
  %v3952 = vpack.c.b16 %v3908, %v3906
  %v3953 = vpack.c.b16 %v3909, %v3907
  %v3954 = vpack.c.b16 %v3912, %v3910
  %v3955 = vpack.c.b16 %v3913, %v3911
  %v3956 = vpack.c.b16 %v3916, %v3914
  %v3957 = vpack.c.b16 %v3917, %v3915
  %v3958 = vpack.c.b16 %v3920, %v3918
  %v3959 = vpack.c.b16 %v3921, %v3919
  %v3960 = vpack.c.b16 %v3924, %v3922
  %v3961 = vpack.c.b16 %v3925, %v3923
  %v3962 = vpack.c.b16 %v3928, %v3926
  %v3963 = vpack.c.b16 %v3929, %v3927
  %v3964 = vpack.c.b16 %v3932, %v3930
  %v3965 = vpack.c.b16 %v3933, %v3931
  %3998 = vmatprep.subr.bf16.mxu0 %v3935
  %3999 = vmatpush1.bf16.msra.mxu0 %v3934
  %4000 = vmatprep.subr.bf16.mxu0 %v3937
  %4001 = vmatpush1.bf16.msra.mxu0 %v3936
  %4002 = vmatprep.subr.bf16.mxu0 %v3939
  %4003 = vmatpush1.bf16.msra.mxu0 %v3938
  %4004 = vmatprep.subr.bf16.mxu0 %v3941
  %4005 = vmatpush1.bf16.msra.mxu0 %v3940
  %4006 = vmatprep.subr.bf16.mxu0 %v3943
  %4007 = vmatpush1.bf16.msra.mxu0 %v3942
  %4008 = vmatprep.subr.bf16.mxu0 %v3945
  %4009 = vmatpush1.bf16.msra.mxu0 %v3944
  %4010 = vmatprep.subr.bf16.mxu0 %v3947
  %4011 = vmatpush1.bf16.msra.mxu0 %v3946
  %4012 = vmatprep.subr.bf16.mxu0 %v3949
  %4013 = vmatpush1.bf16.msra.mxu0 %v3948
  %4014 = vmatprep.subr.bf16.mxu0 %v3951
  %4015 = vmatpush1.bf16.msra.mxu0 %v3950
  %4016 = vmatprep.subr.bf16.mxu0 %v3953
  %4017 = vmatpush1.bf16.msra.mxu0 %v3952
  %4018 = vmatprep.subr.bf16.mxu0 %v3955
  %4019 = vmatpush1.bf16.msra.mxu0 %v3954
  %4020 = vmatprep.subr.bf16.mxu0 %v3957
  %4021 = vmatpush1.bf16.msra.mxu0 %v3956
  %4022 = vmatprep.subr.bf16.mxu0 %v3959
  %4023 = vmatpush1.bf16.msra.mxu0 %v3958
  %4024 = vmatprep.subr.bf16.mxu0 %v3961
  %4025 = vmatpush1.bf16.msra.mxu0 %v3960
  %4026 = vmatprep.subr.bf16.mxu0 %v3963
  %4027 = vmatpush1.bf16.msra.mxu0 %v3962
  %4028 = vmatprep.subr.bf16.mxu0 %v3965
  %4029 = vmatpush1.bf16.msra.mxu0 %v3964
  %4030 = vmatprep.mubr.bf16.mxu0 %v3835
  %4031 = vmatmul.mubr.bf16.gmra.mrb[0].mxu0 %v3834
  %v4032 = vpop.f32.mrb[0].mxu0
  %v4033 = vadd.f32 0.0, %v4032
  %v4034 = vpop.f32.mrb[0].mxu0
  %v4035 = vadd.f32 0.0, %v4034
  %v4036 = vpop.f32.mrb[0].mxu0
  %v4037 = vpop.f32.mrb[0].mxu0
  %4038 = vdwg.mxu0
  %v4039 = vadd.f32 %v3790, %v4033
  %v4040 = vadd.f32 %v3792, %v4035
  %v4041 = vld [vmem:[%s3299 + $0x8] sm:$0x33]
  %v4042 = vld [vmem:[%s759] sm:$0xff]
  %v4043 = vld [vmem:[%s759 + $0x8] sm:$0xff]
  %v4044 = vld [vmem:[%s759 + $0x10] sm:$0xff]
  %v4045 = vld [vmem:[%s759 + $0x18] sm:$0xff]
  %v4046 = vld [vmem:[%s759 + $0x20] sm:$0xff]
  %v4047 = vld [vmem:[%s759 + $0x28] sm:$0xff]
  %v4048 = vld [vmem:[%s759 + $0x30] sm:$0xff]
  %v4049 = vld [vmem:[%s759 + $0x38] sm:$0xff]
  %v4050 = vld [vmem:[%s759 + $0x40] sm:$0xff]
  %v4051 = vld [vmem:[%s759 + $0x48] sm:$0xff]
  %v4052 = vld [vmem:[%s759 + $0x50] sm:$0xff]
  %v4053 = vld [vmem:[%s759 + $0x58] sm:$0xff]
  %v4054 = vld [vmem:[%s759 + $0x60] sm:$0xff]
  %v4055 = vld [vmem:[%s759 + $0x68] sm:$0xff]
  %v4056 = vld [vmem:[%s759 + $0x70] sm:$0xff]
  %v4057 = vld [vmem:[%s759 + $0x78] sm:$0xff]
  %v4058 = vld [vmem:[%s759 + $0x80] sm:$0xff]
  %v4059 = vld [vmem:[%s759 + $0x88] sm:$0xff]
  %v4060 = vld [vmem:[%s759 + $0x90] sm:$0xff]
  %v4061 = vld [vmem:[%s759 + $0x98] sm:$0xff]
  %v4062 = vld [vmem:[%s759 + $0xa0] sm:$0xff]
  %v4063 = vld [vmem:[%s759 + $0xa8] sm:$0xff]
  %v4064 = vld [vmem:[%s759 + $0xb0] sm:$0xff]
  %v4065 = vld [vmem:[%s759 + $0xb8] sm:$0xff]
  %v4066 = vld [vmem:[%s759 + $0xc0] sm:$0xff]
  %v4067 = vld [vmem:[%s759 + $0xc8] sm:$0xff]
  %v4068 = vld [vmem:[%s759 + $0xd0] sm:$0xff]
  %v4069 = vld [vmem:[%s759 + $0xd8] sm:$0xff]
  %v4070 = vld [vmem:[%s759 + $0xe0] sm:$0xff]
  %v4071 = vld [vmem:[%s759 + $0xe8] sm:$0xff]
  %v4072 = vld [vmem:[%s759 + $0xf0] sm:$0xff]
  %v4073 = vld [vmem:[%s759 + $0xf8] sm:$0xff]
  %v4075 = vunpack.c.l.b16 %v4041
  %v4076 = vunpack.c.h.b16 %v4041
  %v4077 = vpack.c.b16 %v4075, %v3830
  %v4078 = vpack.c.b16 %v4076, %v3831
  %v4080 = vshrl.u32 %v4077, 16
  %v4082 = vrot.slane %v4080, 1
  %v4083 = vshll.u32 %v4077, 16
  %v4085 = vrot.slane %v4083, 2
  %v4086 = vor.u32 %v4082, %v4085
  %v4088 = vshrl.u32 %v4078, 16
  %v4090 = vrot.slane %v4088, 1
  %v4091 = vshll.u32 %v4078, 16
  %v4093 = vrot.slane %v4091, 2
  %v4094 = vor.u32 %v4090, %v4093
  %v4129 = vunpack.c.l.b16 %v4042
  %v4130 = vunpack.c.h.b16 %v4042
  %v4131 = vunpack.c.l.b16 %v4043
  %v4132 = vunpack.c.h.b16 %v4043
  %v4133 = vunpack.c.l.b16 %v4044
  %v4134 = vunpack.c.h.b16 %v4044
  %v4135 = vunpack.c.l.b16 %v4045
  %v4136 = vunpack.c.h.b16 %v4045
  %v4137 = vunpack.c.l.b16 %v4046
  %v4138 = vunpack.c.h.b16 %v4046
  %v4139 = vunpack.c.l.b16 %v4047
  %v4140 = vunpack.c.h.b16 %v4047
  %v4141 = vunpack.c.l.b16 %v4048
  %v4142 = vunpack.c.h.b16 %v4048
  %v4143 = vunpack.c.l.b16 %v4049
  %v4144 = vunpack.c.h.b16 %v4049
  %v4145 = vunpack.c.l.b16 %v4050
  %v4146 = vunpack.c.h.b16 %v4050
  %v4147 = vunpack.c.l.b16 %v4051
  %v4148 = vunpack.c.h.b16 %v4051
  %v4149 = vunpack.c.l.b16 %v4052
  %v4150 = vunpack.c.h.b16 %v4052
  %v4151 = vunpack.c.l.b16 %v4053
  %v4152 = vunpack.c.h.b16 %v4053
  %v4153 = vunpack.c.l.b16 %v4054
  %v4154 = vunpack.c.h.b16 %v4054
  %v4155 = vunpack.c.l.b16 %v4055
  %v4156 = vunpack.c.h.b16 %v4055
  %v4157 = vunpack.c.l.b16 %v4056
  %v4158 = vunpack.c.h.b16 %v4056
  %v4159 = vunpack.c.l.b16 %v4057
  %v4160 = vunpack.c.h.b16 %v4057
  %v4161 = vunpack.c.l.b16 %v4058
  %v4162 = vunpack.c.h.b16 %v4058
  %v4163 = vunpack.c.l.b16 %v4059
  %v4164 = vunpack.c.h.b16 %v4059
  %v4165 = vunpack.c.l.b16 %v4060
  %v4166 = vunpack.c.h.b16 %v4060
  %v4167 = vunpack.c.l.b16 %v4061
  %v4168 = vunpack.c.h.b16 %v4061
  %v4169 = vunpack.c.l.b16 %v4062
  %v4170 = vunpack.c.h.b16 %v4062
  %v4171 = vunpack.c.l.b16 %v4063
  %v4172 = vunpack.c.h.b16 %v4063
  %v4173 = vunpack.c.l.b16 %v4064
  %v4174 = vunpack.c.h.b16 %v4064
  %v4175 = vunpack.c.l.b16 %v4065
  %v4176 = vunpack.c.h.b16 %v4065
  %v4177 = vunpack.c.l.b16 %v4066
  %v4178 = vunpack.c.h.b16 %v4066
  %v4179 = vunpack.c.l.b16 %v4067
  %v4180 = vunpack.c.h.b16 %v4067
  %v4181 = vunpack.c.l.b16 %v4068
  %v4182 = vunpack.c.h.b16 %v4068
  %v4183 = vunpack.c.l.b16 %v4069
  %v4184 = vunpack.c.h.b16 %v4069
  %v4185 = vunpack.c.l.b16 %v4070
  %v4186 = vunpack.c.h.b16 %v4070
  %v4187 = vunpack.c.l.b16 %v4071
  %v4188 = vunpack.c.h.b16 %v4071
  %v4189 = vunpack.c.l.b16 %v4072
  %v4190 = vunpack.c.h.b16 %v4072
  %v4191 = vunpack.c.l.b16 %v4073
  %v4192 = vunpack.c.h.b16 %v4073
  %v4193 = vpack.c.b16 %v4131, %v4129
  %v4194 = vpack.c.b16 %v4132, %v4130
  %v4195 = vpack.c.b16 %v4135, %v4133
  %v4196 = vpack.c.b16 %v4136, %v4134
  %v4197 = vpack.c.b16 %v4139, %v4137
  %v4198 = vpack.c.b16 %v4140, %v4138
  %v4199 = vpack.c.b16 %v4143, %v4141
  %v4200 = vpack.c.b16 %v4144, %v4142
  %v4201 = vpack.c.b16 %v4147, %v4145
  %v4202 = vpack.c.b16 %v4148, %v4146
  %v4203 = vpack.c.b16 %v4151, %v4149
  %v4204 = vpack.c.b16 %v4152, %v4150
  %v4205 = vpack.c.b16 %v4155, %v4153
  %v4206 = vpack.c.b16 %v4156, %v4154
  %v4207 = vpack.c.b16 %v4159, %v4157
  %v4208 = vpack.c.b16 %v4160, %v4158
  %v4209 = vpack.c.b16 %v4163, %v4161
  %v4210 = vpack.c.b16 %v4164, %v4162
  %v4211 = vpack.c.b16 %v4167, %v4165
  %v4212 = vpack.c.b16 %v4168, %v4166
  %v4213 = vpack.c.b16 %v4171, %v4169
  %v4214 = vpack.c.b16 %v4172, %v4170
  %v4215 = vpack.c.b16 %v4175, %v4173
  %v4216 = vpack.c.b16 %v4176, %v4174
  %v4217 = vpack.c.b16 %v4179, %v4177
  %v4218 = vpack.c.b16 %v4180, %v4178
  %v4219 = vpack.c.b16 %v4183, %v4181
  %v4220 = vpack.c.b16 %v4184, %v4182
  %v4221 = vpack.c.b16 %v4187, %v4185
  %v4222 = vpack.c.b16 %v4188, %v4186
  %v4223 = vpack.c.b16 %v4191, %v4189
  %v4224 = vpack.c.b16 %v4192, %v4190
  %4257 = vmatprep.subr.bf16.mxu0 %v4194
  %4258 = vmatpush1.bf16.msra.mxu0 %v4193
  %4259 = vmatprep.subr.bf16.mxu0 %v4196
  %4260 = vmatpush1.bf16.msra.mxu0 %v4195
  %4261 = vmatprep.subr.bf16.mxu0 %v4198
  %4262 = vmatpush1.bf16.msra.mxu0 %v4197
  %4263 = vmatprep.subr.bf16.mxu0 %v4200
  %4264 = vmatpush1.bf16.msra.mxu0 %v4199
  %4265 = vmatprep.subr.bf16.mxu0 %v4202
  %4266 = vmatpush1.bf16.msra.mxu0 %v4201
  %4267 = vmatprep.subr.bf16.mxu0 %v4204
  %4268 = vmatpush1.bf16.msra.mxu0 %v4203
  %4269 = vmatprep.subr.bf16.mxu0 %v4206
  %4270 = vmatpush1.bf16.msra.mxu0 %v4205
  %4271 = vmatprep.subr.bf16.mxu0 %v4208
  %4272 = vmatpush1.bf16.msra.mxu0 %v4207
  %4273 = vmatprep.subr.bf16.mxu0 %v4210
  %4274 = vmatpush1.bf16.msra.mxu0 %v4209
  %4275 = vmatprep.subr.bf16.mxu0 %v4212
  %4276 = vmatpush1.bf16.msra.mxu0 %v4211
  %4277 = vmatprep.subr.bf16.mxu0 %v4214
  %4278 = vmatpush1.bf16.msra.mxu0 %v4213
  %4279 = vmatprep.subr.bf16.mxu0 %v4216
  %4280 = vmatpush1.bf16.msra.mxu0 %v4215
  %4281 = vmatprep.subr.bf16.mxu0 %v4218
  %4282 = vmatpush1.bf16.msra.mxu0 %v4217
  %4283 = vmatprep.subr.bf16.mxu0 %v4220
  %4284 = vmatpush1.bf16.msra.mxu0 %v4219
  %4285 = vmatprep.subr.bf16.mxu0 %v4222
  %4286 = vmatpush1.bf16.msra.mxu0 %v4221
  %4287 = vmatprep.subr.bf16.mxu0 %v4224
  %4288 = vmatpush1.bf16.msra.mxu0 %v4223
  %4289 = vmatprep.mubr.bf16.mxu0 %v4094
  %4290 = vmatmul.mubr.bf16.gmra.mrb[0].mxu0 %v4086
  %v4291 = vpop.f32.mrb[0].mxu0
  %v4292 = vadd.f32 0.0, %v4291
  %v4293 = vpop.f32.mrb[0].mxu0
  %v4294 = vadd.f32 0.0, %v4293
  %v4295 = vpop.f32.mrb[0].mxu0
  %v4296 = vpop.f32.mrb[0].mxu0
  %4297 = vdwg.mxu0
  %v4298 = vadd.f32 %v4039, %v4292
  %v4299 = vadd.f32 %v4040, %v4294
  %v4300 = vld [vmem:[%s3299] sm:$0xcc]
  %v4301 = vld [vmem:[%s1019] sm:$0xff]
  %v4302 = vld [vmem:[%s1019 + $0x8] sm:$0xff]
  %v4303 = vld [vmem:[%s1019 + $0x10] sm:$0xff]
  %v4304 = vld [vmem:[%s1019 + $0x18] sm:$0xff]
  %v4305 = vld [vmem:[%s1019 + $0x20] sm:$0xff]
  %v4306 = vld [vmem:[%s1019 + $0x28] sm:$0xff]
  %v4307 = vld [vmem:[%s1019 + $0x30] sm:$0xff]
  %v4308 = vld [vmem:[%s1019 + $0x38] sm:$0xff]
  %v4309 = vld [vmem:[%s1019 + $0x40] sm:$0xff]
  %v4310 = vld [vmem:[%s1019 + $0x48] sm:$0xff]
  %v4311 = vld [vmem:[%s1019 + $0x50] sm:$0xff]
  %v4312 = vld [vmem:[%s1019 + $0x58] sm:$0xff]
  %v4313 = vld [vmem:[%s1019 + $0x60] sm:$0xff]
  %v4314 = vld [vmem:[%s1019 + $0x68] sm:$0xff]
  %v4315 = vld [vmem:[%s1019 + $0x70] sm:$0xff]
  %v4316 = vld [vmem:[%s1019 + $0x78] sm:$0xff]
  %v4317 = vld [vmem:[%s1019 + $0x80] sm:$0xff]
  %v4318 = vld [vmem:[%s1019 + $0x88] sm:$0xff]
  %v4319 = vld [vmem:[%s1019 + $0x90] sm:$0xff]
  %v4320 = vld [vmem:[%s1019 + $0x98] sm:$0xff]
  %v4321 = vld [vmem:[%s1019 + $0xa0] sm:$0xff]
  %v4322 = vld [vmem:[%s1019 + $0xa8] sm:$0xff]
  %v4323 = vld [vmem:[%s1019 + $0xb0] sm:$0xff]
  %v4324 = vld [vmem:[%s1019 + $0xb8] sm:$0xff]
  %v4325 = vld [vmem:[%s1019 + $0xc0] sm:$0xff]
  %v4326 = vld [vmem:[%s1019 + $0xc8] sm:$0xff]
  %v4327 = vld [vmem:[%s1019 + $0xd0] sm:$0xff]
  %v4328 = vld [vmem:[%s1019 + $0xd8] sm:$0xff]
  %v4329 = vld [vmem:[%s1019 + $0xe0] sm:$0xff]
  %v4330 = vld [vmem:[%s1019 + $0xe8] sm:$0xff]
  %v4331 = vld [vmem:[%s1019 + $0xf0] sm:$0xff]
  %v4332 = vld [vmem:[%s1019 + $0xf8] sm:$0xff]
  %v4334 = vunpack.c.l.b16 %v4300
  %v4335 = vunpack.c.h.b16 %v4300
  %v4336 = vpack.c.b16 %v4075, %v4334
  %v4337 = vpack.c.b16 %v4076, %v4335
  %v4338 = vrot.slane %v4336, 2
  %v4339 = vrot.slane %v4337, 2
  %v4374 = vunpack.c.l.b16 %v4301
  %v4375 = vunpack.c.h.b16 %v4301
  %v4376 = vunpack.c.l.b16 %v4302
  %v4377 = vunpack.c.h.b16 %v4302
  %v4378 = vunpack.c.l.b16 %v4303
  %v4379 = vunpack.c.h.b16 %v4303
  %v4380 = vunpack.c.l.b16 %v4304
  %v4381 = vunpack.c.h.b16 %v4304
  %v4382 = vunpack.c.l.b16 %v4305
  %v4383 = vunpack.c.h.b16 %v4305
  %v4384 = vunpack.c.l.b16 %v4306
  %v4385 = vunpack.c.h.b16 %v4306
  %v4386 = vunpack.c.l.b16 %v4307
  %v4387 = vunpack.c.h.b16 %v4307
  %v4388 = vunpack.c.l.b16 %v4308
  %v4389 = vunpack.c.h.b16 %v4308
  %v4390 = vunpack.c.l.b16 %v4309
  %v4391 = vunpack.c.h.b16 %v4309
  %v4392 = vunpack.c.l.b16 %v4310
  %v4393 = vunpack.c.h.b16 %v4310
  %v4394 = vunpack.c.l.b16 %v4311
  %v4395 = vunpack.c.h.b16 %v4311
  %v4396 = vunpack.c.l.b16 %v4312
  %v4397 = vunpack.c.h.b16 %v4312
  %v4398 = vunpack.c.l.b16 %v4313
  %v4399 = vunpack.c.h.b16 %v4313
  %v4400 = vunpack.c.l.b16 %v4314
  %v4401 = vunpack.c.h.b16 %v4314
  %v4402 = vunpack.c.l.b16 %v4315
  %v4403 = vunpack.c.h.b16 %v4315
  %v4404 = vunpack.c.l.b16 %v4316
  %v4405 = vunpack.c.h.b16 %v4316
  %v4406 = vunpack.c.l.b16 %v4317
  %v4407 = vunpack.c.h.b16 %v4317
  %v4408 = vunpack.c.l.b16 %v4318
  %v4409 = vunpack.c.h.b16 %v4318
  %v4410 = vunpack.c.l.b16 %v4319
  %v4411 = vunpack.c.h.b16 %v4319
  %v4412 = vunpack.c.l.b16 %v4320
  %v4413 = vunpack.c.h.b16 %v4320
  %v4414 = vunpack.c.l.b16 %v4321
  %v4415 = vunpack.c.h.b16 %v4321
  %v4416 = vunpack.c.l.b16 %v4322
  %v4417 = vunpack.c.h.b16 %v4322
  %v4418 = vunpack.c.l.b16 %v4323
  %v4419 = vunpack.c.h.b16 %v4323
  %v4420 = vunpack.c.l.b16 %v4324
  %v4421 = vunpack.c.h.b16 %v4324
  %v4422 = vunpack.c.l.b16 %v4325
  %v4423 = vunpack.c.h.b16 %v4325
  %v4424 = vunpack.c.l.b16 %v4326
  %v4425 = vunpack.c.h.b16 %v4326
  %v4426 = vunpack.c.l.b16 %v4327
  %v4427 = vunpack.c.h.b16 %v4327
  %v4428 = vunpack.c.l.b16 %v4328
  %v4429 = vunpack.c.h.b16 %v4328
  %v4430 = vunpack.c.l.b16 %v4329
  %v4431 = vunpack.c.h.b16 %v4329
  %v4432 = vunpack.c.l.b16 %v4330
  %v4433 = vunpack.c.h.b16 %v4330
  %v4434 = vunpack.c.l.b16 %v4331
  %v4435 = vunpack.c.h.b16 %v4331
  %v4436 = vunpack.c.l.b16 %v4332
  %v4437 = vunpack.c.h.b16 %v4332
  %v4438 = vpack.c.b16 %v4376, %v4374
  %v4439 = vpack.c.b16 %v4377, %v4375
  %v4440 = vpack.c.b16 %v4380, %v4378
  %v4441 = vpack.c.b16 %v4381, %v4379
  %v4442 = vpack.c.b16 %v4384, %v4382
  %v4443 = vpack.c.b16 %v4385, %v4383
  %v4444 = vpack.c.b16 %v4388, %v4386
  %v4445 = vpack.c.b16 %v4389, %v4387
  %v4446 = vpack.c.b16 %v4392, %v4390
  %v4447 = vpack.c.b16 %v4393, %v4391
  %v4448 = vpack.c.b16 %v4396, %v4394
  %v4449 = vpack.c.b16 %v4397, %v4395
  %v4450 = vpack.c.b16 %v4400, %v4398
  %v4451 = vpack.c.b16 %v4401, %v4399
  %v4452 = vpack.c.b16 %v4404, %v4402
  %v4453 = vpack.c.b16 %v4405, %v4403
  %v4454 = vpack.c.b16 %v4408, %v4406
  %v4455 = vpack.c.b16 %v4409, %v4407
  %v4456 = vpack.c.b16 %v4412, %v4410
  %v4457 = vpack.c.b16 %v4413, %v4411
  %v4458 = vpack.c.b16 %v4416, %v4414
  %v4459 = vpack.c.b16 %v4417, %v4415
  %v4460 = vpack.c.b16 %v4420, %v4418
  %v4461 = vpack.c.b16 %v4421, %v4419
  %v4462 = vpack.c.b16 %v4424, %v4422
  %v4463 = vpack.c.b16 %v4425, %v4423
  %v4464 = vpack.c.b16 %v4428, %v4426
  %v4465 = vpack.c.b16 %v4429, %v4427
  %v4466 = vpack.c.b16 %v4432, %v4430
  %v4467 = vpack.c.b16 %v4433, %v4431
  %v4468 = vpack.c.b16 %v4436, %v4434
  %v4469 = vpack.c.b16 %v4437, %v4435
  %4502 = vmatprep.subr.bf16.mxu0 %v4439
  %4503 = vmatpush1.bf16.msra.mxu0 %v4438
  %4504 = vmatprep.subr.bf16.mxu0 %v4441
  %4505 = vmatpush1.bf16.msra.mxu0 %v4440
  %4506 = vmatprep.subr.bf16.mxu0 %v4443
  %4507 = vmatpush1.bf16.msra.mxu0 %v4442
  %4508 = vmatprep.subr.bf16.mxu0 %v4445
  %4509 = vmatpush1.bf16.msra.mxu0 %v4444
  %4510 = vmatprep.subr.bf16.mxu0 %v4447
  %4511 = vmatpush1.bf16.msra.mxu0 %v4446
  %4512 = vmatprep.subr.bf16.mxu0 %v4449
  %4513 = vmatpush1.bf16.msra.mxu0 %v4448
  %4514 = vmatprep.subr.bf16.mxu0 %v4451
  %4515 = vmatpush1.bf16.msra.mxu0 %v4450
  %4516 = vmatprep.subr.bf16.mxu0 %v4453
  %4517 = vmatpush1.bf16.msra.mxu0 %v4452
  %4518 = vmatprep.subr.bf16.mxu0 %v4455
  %4519 = vmatpush1.bf16.msra.mxu0 %v4454
  %4520 = vmatprep.subr.bf16.mxu0 %v4457
  %4521 = vmatpush1.bf16.msra.mxu0 %v4456
  %4522 = vmatprep.subr.bf16.mxu0 %v4459
  %4523 = vmatpush1.bf16.msra.mxu0 %v4458
  %4524 = vmatprep.subr.bf16.mxu0 %v4461
  %4525 = vmatpush1.bf16.msra.mxu0 %v4460
  %4526 = vmatprep.subr.bf16.mxu0 %v4463
  %4527 = vmatpush1.bf16.msra.mxu0 %v4462
  %4528 = vmatprep.subr.bf16.mxu0 %v4465
  %4529 = vmatpush1.bf16.msra.mxu0 %v4464
  %4530 = vmatprep.subr.bf16.mxu0 %v4467
  %4531 = vmatpush1.bf16.msra.mxu0 %v4466
  %4532 = vmatprep.subr.bf16.mxu0 %v4469
  %4533 = vmatpush1.bf16.msra.mxu0 %v4468
  %4534 = vmatprep.mubr.bf16.mxu0 %v4339
  %4535 = vmatmul.mubr.bf16.gmra.mrb[0].mxu0 %v4338
  %v4536 = vpop.f32.mrb[0].mxu0
  %v4537 = vadd.f32 0.0, %v4536
  %v4538 = vpop.f32.mrb[0].mxu0
  %v4539 = vadd.f32 0.0, %v4538
  %v4540 = vpop.f32.mrb[0].mxu0
  %v4541 = vpop.f32.mrb[0].mxu0
  %4542 = vdwg.mxu0
  %v4543 = vadd.f32 %v4298, %v4537
  %v4544 = vadd.f32 %v4299, %v4539
  %v4545 = vld [vmem:[%s3299 + $0x8] sm:$0x77]
  %v4546 = vld [vmem:[%s1265] sm:$0xff]
  %v4547 = vld [vmem:[%s1265 + $0x8] sm:$0xff]
  %v4548 = vld [vmem:[%s1265 + $0x10] sm:$0xff]
  %v4549 = vld [vmem:[%s1265 + $0x18] sm:$0xff]
  %v4550 = vld [vmem:[%s1265 + $0x20] sm:$0xff]
  %v4551 = vld [vmem:[%s1265 + $0x28] sm:$0xff]
  %v4552 = vld [vmem:[%s1265 + $0x30] sm:$0xff]
  %v4553 = vld [vmem:[%s1265 + $0x38] sm:$0xff]
  %v4554 = vld [vmem:[%s1265 + $0x40] sm:$0xff]
  %v4555 = vld [vmem:[%s1265 + $0x48] sm:$0xff]
  %v4556 = vld [vmem:[%s1265 + $0x50] sm:$0xff]
  %v4557 = vld [vmem:[%s1265 + $0x58] sm:$0xff]
  %v4558 = vld [vmem:[%s1265 + $0x60] sm:$0xff]
  %v4559 = vld [vmem:[%s1265 + $0x68] sm:$0xff]
  %v4560 = vld [vmem:[%s1265 + $0x70] sm:$0xff]
  %v4561 = vld [vmem:[%s1265 + $0x78] sm:$0xff]
  %v4562 = vld [vmem:[%s1265 + $0x80] sm:$0xff]
  %v4563 = vld [vmem:[%s1265 + $0x88] sm:$0xff]
  %v4564 = vld [vmem:[%s1265 + $0x90] sm:$0xff]
  %v4565 = vld [vmem:[%s1265 + $0x98] sm:$0xff]
  %v4566 = vld [vmem:[%s1265 + $0xa0] sm:$0xff]
  %v4567 = vld [vmem:[%s1265 + $0xa8] sm:$0xff]
  %v4568 = vld [vmem:[%s1265 + $0xb0] sm:$0xff]
  %v4569 = vld [vmem:[%s1265 + $0xb8] sm:$0xff]
  %v4570 = vld [vmem:[%s1265 + $0xc0] sm:$0xff]
  %v4571 = vld [vmem:[%s1265 + $0xc8] sm:$0xff]
  %v4572 = vld [vmem:[%s1265 + $0xd0] sm:$0xff]
  %v4573 = vld [vmem:[%s1265 + $0xd8] sm:$0xff]
  %v4574 = vld [vmem:[%s1265 + $0xe0] sm:$0xff]
  %v4575 = vld [vmem:[%s1265 + $0xe8] sm:$0xff]
  %v4576 = vld [vmem:[%s1265 + $0xf0] sm:$0xff]
  %v4577 = vld [vmem:[%s1265 + $0xf8] sm:$0xff]
  %v4579 = vunpack.c.l.b16 %v4545
  %v4580 = vunpack.c.h.b16 %v4545
  %v4581 = vpack.c.b16 %v4579, %v4334
  %v4582 = vpack.c.b16 %v4580, %v4335
  %v4584 = vshrl.u32 %v4581, 16
  %v4586 = vrot.slane %v4584, 2
  %v4587 = vshll.u32 %v4581, 16
  %v4589 = vrot.slane %v4587, 3
  %v4590 = vor.u32 %v4586, %v4589
  %v4592 = vshrl.u32 %v4582, 16
  %v4594 = vrot.slane %v4592, 2
  %v4595 = vshll.u32 %v4582, 16
  %v4597 = vrot.slane %v4595, 3
  %v4598 = vor.u32 %v4594, %v4597
  %v4633 = vunpack.c.l.b16 %v4546
  %v4634 = vunpack.c.h.b16 %v4546
  %v4635 = vunpack.c.l.b16 %v4547
  %v4636 = vunpack.c.h.b16 %v4547
  %v4637 = vunpack.c.l.b16 %v4548
  %v4638 = vunpack.c.h.b16 %v4548
  %v4639 = vunpack.c.l.b16 %v4549
  %v4640 = vunpack.c.h.b16 %v4549
  %v4641 = vunpack.c.l.b16 %v4550
  %v4642 = vunpack.c.h.b16 %v4550
  %v4643 = vunpack.c.l.b16 %v4551
  %v4644 = vunpack.c.h.b16 %v4551
  %v4645 = vunpack.c.l.b16 %v4552
  %v4646 = vunpack.c.h.b16 %v4552
  %v4647 = vunpack.c.l.b16 %v4553
  %v4648 = vunpack.c.h.b16 %v4553
  %v4649 = vunpack.c.l.b16 %v4554
  %v4650 = vunpack.c.h.b16 %v4554
  %v4651 = vunpack.c.l.b16 %v4555
  %v4652 = vunpack.c.h.b16 %v4555
  %v4653 = vunpack.c.l.b16 %v4556
  %v4654 = vunpack.c.h.b16 %v4556
  %v4655 = vunpack.c.l.b16 %v4557
  %v4656 = vunpack.c.h.b16 %v4557
  %v4657 = vunpack.c.l.b16 %v4558
  %v4658 = vunpack.c.h.b16 %v4558
  %v4659 = vunpack.c.l.b16 %v4559
  %v4660 = vunpack.c.h.b16 %v4559
  %v4661 = vunpack.c.l.b16 %v4560
  %v4662 = vunpack.c.h.b16 %v4560
  %v4663 = vunpack.c.l.b16 %v4561
  %v4664 = vunpack.c.h.b16 %v4561
  %v4665 = vunpack.c.l.b16 %v4562
  %v4666 = vunpack.c.h.b16 %v4562
  %v4667 = vunpack.c.l.b16 %v4563
  %v4668 = vunpack.c.h.b16 %v4563
  %v4669 = vunpack.c.l.b16 %v4564
  %v4670 = vunpack.c.h.b16 %v4564
  %v4671 = vunpack.c.l.b16 %v4565
  %v4672 = vunpack.c.h.b16 %v4565
  %v4673 = vunpack.c.l.b16 %v4566
  %v4674 = vunpack.c.h.b16 %v4566
  %v4675 = vunpack.c.l.b16 %v4567
  %v4676 = vunpack.c.h.b16 %v4567
  %v4677 = vunpack.c.l.b16 %v4568
  %v4678 = vunpack.c.h.b16 %v4568
  %v4679 = vunpack.c.l.b16 %v4569
  %v4680 = vunpack.c.h.b16 %v4569
  %v4681 = vunpack.c.l.b16 %v4570
  %v4682 = vunpack.c.h.b16 %v4570
  %v4683 = vunpack.c.l.b16 %v4571
  %v4684 = vunpack.c.h.b16 %v4571
  %v4685 = vunpack.c.l.b16 %v4572
  %v4686 = vunpack.c.h.b16 %v4572
  %v4687 = vunpack.c.l.b16 %v4573
  %v4688 = vunpack.c.h.b16 %v4573
  %v4689 = vunpack.c.l.b16 %v4574
  %v4690 = vunpack.c.h.b16 %v4574
  %v4691 = vunpack.c.l.b16 %v4575
  %v4692 = vunpack.c.h.b16 %v4575
  %v4693 = vunpack.c.l.b16 %v4576
  %v4694 = vunpack.c.h.b16 %v4576
  %v4695 = vunpack.c.l.b16 %v4577
  %v4696 = vunpack.c.h.b16 %v4577
  %v4697 = vpack.c.b16 %v4635, %v4633
  %v4698 = vpack.c.b16 %v4636, %v4634
  %v4699 = vpack.c.b16 %v4639, %v4637
  %v4700 = vpack.c.b16 %v4640, %v4638
  %v4701 = vpack.c.b16 %v4643, %v4641
  %v4702 = vpack.c.b16 %v4644, %v4642
  %v4703 = vpack.c.b16 %v4647, %v4645
  %v4704 = vpack.c.b16 %v4648, %v4646
  %v4705 = vpack.c.b16 %v4651, %v4649
  %v4706 = vpack.c.b16 %v4652, %v4650
  %v4707 = vpack.c.b16 %v4655, %v4653
  %v4708 = vpack.c.b16 %v4656, %v4654
  %v4709 = vpack.c.b16 %v4659, %v4657
  %v4710 = vpack.c.b16 %v4660, %v4658
  %v4711 = vpack.c.b16 %v4663, %v4661
  %v4712 = vpack.c.b16 %v4664, %v4662
  %v4713 = vpack.c.b16 %v4667, %v4665
  %v4714 = vpack.c.b16 %v4668, %v4666
  %v4715 = vpack.c.b16 %v4671, %v4669
  %v4716 = vpack.c.b16 %v4672, %v4670
  %v4717 = vpack.c.b16 %v4675, %v4673
  %v4718 = vpack.c.b16 %v4676, %v4674
  %v4719 = vpack.c.b16 %v4679, %v4677
  %v4720 = vpack.c.b16 %v4680, %v4678
  %v4721 = vpack.c.b16 %v4683, %v4681
  %v4722 = vpack.c.b16 %v4684, %v4682
  %v4723 = vpack.c.b16 %v4687, %v4685
  %v4724 = vpack.c.b16 %v4688, %v4686
  %v4725 = vpack.c.b16 %v4691, %v4689
  %v4726 = vpack.c.b16 %v4692, %v4690
  %v4727 = vpack.c.b16 %v4695, %v4693
  %v4728 = vpack.c.b16 %v4696, %v4694
  %4761 = vmatprep.subr.bf16.mxu0 %v4698
  %4762 = vmatpush1.bf16.msra.mxu0 %v4697
  %4763 = vmatprep.subr.bf16.mxu0 %v4700
  %4764 = vmatpush1.bf16.msra.mxu0 %v4699
  %4765 = vmatprep.subr.bf16.mxu0 %v4702
  %4766 = vmatpush1.bf16.msra.mxu0 %v4701
  %4767 = vmatprep.subr.bf16.mxu0 %v4704
  %4768 = vmatpush1.bf16.msra.mxu0 %v4703
  %4769 = vmatprep.subr.bf16.mxu0 %v4706
  %4770 = vmatpush1.bf16.msra.mxu0 %v4705
  %4771 = vmatprep.subr.bf16.mxu0 %v4708
  %4772 = vmatpush1.bf16.msra.mxu0 %v4707
  %4773 = vmatprep.subr.bf16.mxu0 %v4710
  %4774 = vmatpush1.bf16.msra.mxu0 %v4709
  %4775 = vmatprep.subr.bf16.mxu0 %v4712
  %4776 = vmatpush1.bf16.msra.mxu0 %v4711
  %4777 = vmatprep.subr.bf16.mxu0 %v4714
  %4778 = vmatpush1.bf16.msra.mxu0 %v4713
  %4779 = vmatprep.subr.bf16.mxu0 %v4716
  %4780 = vmatpush1.bf16.msra.mxu0 %v4715
  %4781 = vmatprep.subr.bf16.mxu0 %v4718
  %4782 = vmatpush1.bf16.msra.mxu0 %v4717
  %4783 = vmatprep.subr.bf16.mxu0 %v4720
  %4784 = vmatpush1.bf16.msra.mxu0 %v4719
  %4785 = vmatprep.subr.bf16.mxu0 %v4722
  %4786 = vmatpush1.bf16.msra.mxu0 %v4721
  %4787 = vmatprep.subr.bf16.mxu0 %v4724
  %4788 = vmatpush1.bf16.msra.mxu0 %v4723
  %4789 = vmatprep.subr.bf16.mxu0 %v4726
  %4790 = vmatpush1.bf16.msra.mxu0 %v4725
  %4791 = vmatprep.subr.bf16.mxu0 %v4728
  %4792 = vmatpush1.bf16.msra.mxu0 %v4727
  %4793 = vmatprep.mubr.bf16.mxu0 %v4598
  %4794 = vmatmul.mubr.bf16.gmra.mrb[0].mxu0 %v4590
  %v4795 = vpop.f32.mrb[0].mxu0
  %v4796 = vadd.f32 0.0, %v4795
  %v4797 = vpop.f32.mrb[0].mxu0
  %v4798 = vadd.f32 0.0, %v4797
  %v4799 = vpop.f32.mrb[0].mxu0
  %v4800 = vpop.f32.mrb[0].mxu0
  %4801 = vdwg.mxu0
  %v4802 = vadd.f32 %v4543, %v4796
  %v4803 = vadd.f32 %v4544, %v4798
  %v4804 = vld [vmem:[%s3299] sm:$0x88]
  %v4805 = vld [vmem:[%s1525] sm:$0xff]
  %v4806 = vld [vmem:[%s1525 + $0x8] sm:$0xff]
  %v4807 = vld [vmem:[%s1525 + $0x10] sm:$0xff]
  %v4808 = vld [vmem:[%s1525 + $0x18] sm:$0xff]
  %v4809 = vld [vmem:[%s1525 + $0x20] sm:$0xff]
  %v4810 = vld [vmem:[%s1525 + $0x28] sm:$0xff]
  %v4811 = vld [vmem:[%s1525 + $0x30] sm:$0xff]
  %v4812 = vld [vmem:[%s1525 + $0x38] sm:$0xff]
  %v4813 = vld [vmem:[%s1525 + $0x40] sm:$0xff]
  %v4814 = vld [vmem:[%s1525 + $0x48] sm:$0xff]
  %v4815 = vld [vmem:[%s1525 + $0x50] sm:$0xff]
  %v4816 = vld [vmem:[%s1525 + $0x58] sm:$0xff]
  %v4817 = vld [vmem:[%s1525 + $0x60] sm:$0xff]
  %v4818 = vld [vmem:[%s1525 + $0x68] sm:$0xff]
  %v4819 = vld [vmem:[%s1525 + $0x70] sm:$0xff]
  %v4820 = vld [vmem:[%s1525 + $0x78] sm:$0xff]
  %v4821 = vld [vmem:[%s1525 + $0x80] sm:$0xff]
  %v4822 = vld [vmem:[%s1525 + $0x88] sm:$0xff]
  %v4823 = vld [vmem:[%s1525 + $0x90] sm:$0xff]
  %v4824 = vld [vmem:[%s1525 + $0x98] sm:$0xff]
  %v4825 = vld [vmem:[%s1525 + $0xa0] sm:$0xff]
  %v4826 = vld [vmem:[%s1525 + $0xa8] sm:$0xff]
  %v4827 = vld [vmem:[%s1525 + $0xb0] sm:$0xff]
  %v4828 = vld [vmem:[%s1525 + $0xb8] sm:$0xff]
  %v4829 = vld [vmem:[%s1525 + $0xc0] sm:$0xff]
  %v4830 = vld [vmem:[%s1525 + $0xc8] sm:$0xff]
  %v4831 = vld [vmem:[%s1525 + $0xd0] sm:$0xff]
  %v4832 = vld [vmem:[%s1525 + $0xd8] sm:$0xff]
  %v4833 = vld [vmem:[%s1525 + $0xe0] sm:$0xff]
  %v4834 = vld [vmem:[%s1525 + $0xe8] sm:$0xff]
  %v4835 = vld [vmem:[%s1525 + $0xf0] sm:$0xff]
  %v4836 = vld [vmem:[%s1525 + $0xf8] sm:$0xff]
  %v4838 = vunpack.c.l.b16 %v4804
  %v4839 = vunpack.c.h.b16 %v4804
  %v4840 = vpack.c.b16 %v4579, %v4838
  %v4841 = vpack.c.b16 %v4580, %v4839
  %v4842 = vrot.slane %v4840, 3
  %v4843 = vrot.slane %v4841, 3
  %v4878 = vunpack.c.l.b16 %v4805
  %v4879 = vunpack.c.h.b16 %v4805
  %v4880 = vunpack.c.l.b16 %v4806
  %v4881 = vunpack.c.h.b16 %v4806
  %v4882 = vunpack.c.l.b16 %v4807
  %v4883 = vunpack.c.h.b16 %v4807
  %v4884 = vunpack.c.l.b16 %v4808
  %v4885 = vunpack.c.h.b16 %v4808
  %v4886 = vunpack.c.l.b16 %v4809
  %v4887 = vunpack.c.h.b16 %v4809
  %v4888 = vunpack.c.l.b16 %v4810
  %v4889 = vunpack.c.h.b16 %v4810
  %v4890 = vunpack.c.l.b16 %v4811
  %v4891 = vunpack.c.h.b16 %v4811
  %v4892 = vunpack.c.l.b16 %v4812
  %v4893 = vunpack.c.h.b16 %v4812
  %v4894 = vunpack.c.l.b16 %v4813
  %v4895 = vunpack.c.h.b16 %v4813
  %v4896 = vunpack.c.l.b16 %v4814
  %v4897 = vunpack.c.h.b16 %v4814
  %v4898 = vunpack.c.l.b16 %v4815
  %v4899 = vunpack.c.h.b16 %v4815
  %v4900 = vunpack.c.l.b16 %v4816
  %v4901 = vunpack.c.h.b16 %v4816
  %v4902 = vunpack.c.l.b16 %v4817
  %v4903 = vunpack.c.h.b16 %v4817
  %v4904 = vunpack.c.l.b16 %v4818
  %v4905 = vunpack.c.h.b16 %v4818
  %v4906 = vunpack.c.l.b16 %v4819
  %v4907 = vunpack.c.h.b16 %v4819
  %v4908 = vunpack.c.l.b16 %v4820
  %v4909 = vunpack.c.h.b16 %v4820
  %v4910 = vunpack.c.l.b16 %v4821
  %v4911 = vunpack.c.h.b16 %v4821
  %v4912 = vunpack.c.l.b16 %v4822
  %v4913 = vunpack.c.h.b16 %v4822
  %v4914 = vunpack.c.l.b16 %v4823
  %v4915 = vunpack.c.h.b16 %v4823
  %v4916 = vunpack.c.l.b16 %v4824
  %v4917 = vunpack.c.h.b16 %v4824
  %v4918 = vunpack.c.l.b16 %v4825
  %v4919 = vunpack.c.h.b16 %v4825
  %v4920 = vunpack.c.l.b16 %v4826
  %v4921 = vunpack.c.h.b16 %v4826
  %v4922 = vunpack.c.l.b16 %v4827
  %v4923 = vunpack.c.h.b16 %v4827
  %v4924 = vunpack.c.l.b16 %v4828
  %v4925 = vunpack.c.h.b16 %v4828
  %v4926 = vunpack.c.l.b16 %v4829
  %v4927 = vunpack.c.h.b16 %v4829
  %v4928 = vunpack.c.l.b16 %v4830
  %v4929 = vunpack.c.h.b16 %v4830
  %v4930 = vunpack.c.l.b16 %v4831
  %v4931 = vunpack.c.h.b16 %v4831
  %v4932 = vunpack.c.l.b16 %v4832
  %v4933 = vunpack.c.h.b16 %v4832
  %v4934 = vunpack.c.l.b16 %v4833
  %v4935 = vunpack.c.h.b16 %v4833
  %v4936 = vunpack.c.l.b16 %v4834
  %v4937 = vunpack.c.h.b16 %v4834
  %v4938 = vunpack.c.l.b16 %v4835
  %v4939 = vunpack.c.h.b16 %v4835
  %v4940 = vunpack.c.l.b16 %v4836
  %v4941 = vunpack.c.h.b16 %v4836
  %v4942 = vpack.c.b16 %v4880, %v4878
  %v4943 = vpack.c.b16 %v4881, %v4879
  %v4944 = vpack.c.b16 %v4884, %v4882
  %v4945 = vpack.c.b16 %v4885, %v4883
  %v4946 = vpack.c.b16 %v4888, %v4886
  %v4947 = vpack.c.b16 %v4889, %v4887
  %v4948 = vpack.c.b16 %v4892, %v4890
  %v4949 = vpack.c.b16 %v4893, %v4891
  %v4950 = vpack.c.b16 %v4896, %v4894
  %v4951 = vpack.c.b16 %v4897, %v4895
  %v4952 = vpack.c.b16 %v4900, %v4898
  %v4953 = vpack.c.b16 %v4901, %v4899
  %v4954 = vpack.c.b16 %v4904, %v4902
  %v4955 = vpack.c.b16 %v4905, %v4903
  %v4956 = vpack.c.b16 %v4908, %v4906
  %v4957 = vpack.c.b16 %v4909, %v4907
  %v4958 = vpack.c.b16 %v4912, %v4910
  %v4959 = vpack.c.b16 %v4913, %v4911
  %v4960 = vpack.c.b16 %v4916, %v4914
  %v4961 = vpack.c.b16 %v4917, %v4915
  %v4962 = vpack.c.b16 %v4920, %v4918
  %v4963 = vpack.c.b16 %v4921, %v4919
  %v4964 = vpack.c.b16 %v4924, %v4922
  %v4965 = vpack.c.b16 %v4925, %v4923
  %v4966 = vpack.c.b16 %v4928, %v4926
  %v4967 = vpack.c.b16 %v4929, %v4927
  %v4968 = vpack.c.b16 %v4932, %v4930
  %v4969 = vpack.c.b16 %v4933, %v4931
  %v4970 = vpack.c.b16 %v4936, %v4934
  %v4971 = vpack.c.b16 %v4937, %v4935
  %v4972 = vpack.c.b16 %v4940, %v4938
  %v4973 = vpack.c.b16 %v4941, %v4939
  %5006 = vmatprep.subr.bf16.mxu0 %v4943
  %5007 = vmatpush1.bf16.msra.mxu0 %v4942
  %5008 = vmatprep.subr.bf16.mxu0 %v4945
  %5009 = vmatpush1.bf16.msra.mxu0 %v4944
  %5010 = vmatprep.subr.bf16.mxu0 %v4947
  %5011 = vmatpush1.bf16.msra.mxu0 %v4946
  %5012 = vmatprep.subr.bf16.mxu0 %v4949
  %5013 = vmatpush1.bf16.msra.mxu0 %v4948
  %5014 = vmatprep.subr.bf16.mxu0 %v4951
  %5015 = vmatpush1.bf16.msra.mxu0 %v4950
  %5016 = vmatprep.subr.bf16.mxu0 %v4953
  %5017 = vmatpush1.bf16.msra.mxu0 %v4952
  %5018 = vmatprep.subr.bf16.mxu0 %v4955
  %5019 = vmatpush1.bf16.msra.mxu0 %v4954
  %5020 = vmatprep.subr.bf16.mxu0 %v4957
  %5021 = vmatpush1.bf16.msra.mxu0 %v4956
  %5022 = vmatprep.subr.bf16.mxu0 %v4959
  %5023 = vmatpush1.bf16.msra.mxu0 %v4958
  %5024 = vmatprep.subr.bf16.mxu0 %v4961
  %5025 = vmatpush1.bf16.msra.mxu0 %v4960
  %5026 = vmatprep.subr.bf16.mxu0 %v4963
  %5027 = vmatpush1.bf16.msra.mxu0 %v4962
  %5028 = vmatprep.subr.bf16.mxu0 %v4965
  %5029 = vmatpush1.bf16.msra.mxu0 %v4964
  %5030 = vmatprep.subr.bf16.mxu0 %v4967
  %5031 = vmatpush1.bf16.msra.mxu0 %v4966
  %5032 = vmatprep.subr.bf16.mxu0 %v4969
  %5033 = vmatpush1.bf16.msra.mxu0 %v4968
  %5034 = vmatprep.subr.bf16.mxu0 %v4971
  %5035 = vmatpush1.bf16.msra.mxu0 %v4970
  %5036 = vmatprep.subr.bf16.mxu0 %v4973
  %5037 = vmatpush1.bf16.msra.mxu0 %v4972
  %5038 = vmatprep.mubr.bf16.mxu0 %v4843
  %5039 = vmatmul.mubr.bf16.gmra.mrb[0].mxu0 %v4842
  %v5040 = vpop.f32.mrb[0].mxu0
  %v5041 = vadd.f32 0.0, %v5040
  %v5042 = vpop.f32.mrb[0].mxu0
  %v5043 = vadd.f32 0.0, %v5042
  %v5044 = vpop.f32.mrb[0].mxu0
  %v5045 = vpop.f32.mrb[0].mxu0
  %5046 = vdwg.mxu0
  %v5047 = vadd.f32 %v4802, %v5041
  %v5048 = vadd.f32 %v4803, %v5043
  %v5049 = vld [vmem:[%s3299 + $0x8] sm:$0xff]
  %v5050 = vld [vmem:[%s1771] sm:$0xff]
  %v5051 = vld [vmem:[%s1771 + $0x8] sm:$0xff]
  %v5052 = vld [vmem:[%s1771 + $0x10] sm:$0xff]
  %v5053 = vld [vmem:[%s1771 + $0x18] sm:$0xff]
  %v5054 = vld [vmem:[%s1771 + $0x20] sm:$0xff]
  %v5055 = vld [vmem:[%s1771 + $0x28] sm:$0xff]
  %v5056 = vld [vmem:[%s1771 + $0x30] sm:$0xff]
  %v5057 = vld [vmem:[%s1771 + $0x38] sm:$0xff]
  %v5058 = vld [vmem:[%s1771 + $0x40] sm:$0xff]
  %v5059 = vld [vmem:[%s1771 + $0x48] sm:$0xff]
  %v5060 = vld [vmem:[%s1771 + $0x50] sm:$0xff]
  %v5061 = vld [vmem:[%s1771 + $0x58] sm:$0xff]
  %v5062 = vld [vmem:[%s1771 + $0x60] sm:$0xff]
  %v5063 = vld [vmem:[%s1771 + $0x68] sm:$0xff]
  %v5064 = vld [vmem:[%s1771 + $0x70] sm:$0xff]
  %v5065 = vld [vmem:[%s1771 + $0x78] sm:$0xff]
  %v5066 = vld [vmem:[%s1771 + $0x80] sm:$0xff]
  %v5067 = vld [vmem:[%s1771 + $0x88] sm:$0xff]
  %v5068 = vld [vmem:[%s1771 + $0x90] sm:$0xff]
  %v5069 = vld [vmem:[%s1771 + $0x98] sm:$0xff]
  %v5070 = vld [vmem:[%s1771 + $0xa0] sm:$0xff]
  %v5071 = vld [vmem:[%s1771 + $0xa8] sm:$0xff]
  %v5072 = vld [vmem:[%s1771 + $0xb0] sm:$0xff]
  %v5073 = vld [vmem:[%s1771 + $0xb8] sm:$0xff]
  %v5074 = vld [vmem:[%s1771 + $0xc0] sm:$0xff]
  %v5075 = vld [vmem:[%s1771 + $0xc8] sm:$0xff]
  %v5076 = vld [vmem:[%s1771 + $0xd0] sm:$0xff]
  %v5077 = vld [vmem:[%s1771 + $0xd8] sm:$0xff]
  %v5078 = vld [vmem:[%s1771 + $0xe0] sm:$0xff]
  %v5079 = vld [vmem:[%s1771 + $0xe8] sm:$0xff]
  %v5080 = vld [vmem:[%s1771 + $0xf0] sm:$0xff]
  %v5081 = vld [vmem:[%s1771 + $0xf8] sm:$0xff]
  %v5083 = vunpack.c.l.b16 %v5049
  %v5084 = vunpack.c.h.b16 %v5049
  %v5085 = vpack.c.b16 %v5083, %v4838
  %v5086 = vpack.c.b16 %v5084, %v4839
  %v5088 = vshrl.u32 %v5085, 16
  %v5090 = vrot.slane %v5088, 3
  %v5091 = vshll.u32 %v5085, 16
  %v5093 = vrot.slane %v5091, 4
  %v5094 = vor.u32 %v5090, %v5093
  %v5096 = vshrl.u32 %v5086, 16
  %v5098 = vrot.slane %v5096, 3
  %v5099 = vshll.u32 %v5086, 16
  %v5101 = vrot.slane %v5099, 4
  %v5102 = vor.u32 %v5098, %v5101
  %v5137 = vunpack.c.l.b16 %v5050
  %v5138 = vunpack.c.h.b16 %v5050
  %v5139 = vunpack.c.l.b16 %v5051
  %v5140 = vunpack.c.h.b16 %v5051
  %v5141 = vunpack.c.l.b16 %v5052
  %v5142 = vunpack.c.h.b16 %v5052
  %v5143 = vunpack.c.l.b16 %v5053
  %v5144 = vunpack.c.h.b16 %v5053
  %v5145 = vunpack.c.l.b16 %v5054
  %v5146 = vunpack.c.h.b16 %v5054
  %v5147 = vunpack.c.l.b16 %v5055
  %v5148 = vunpack.c.h.b16 %v5055
  %v5149 = vunpack.c.l.b16 %v5056
  %v5150 = vunpack.c.h.b16 %v5056
  %v5151 = vunpack.c.l.b16 %v5057
  %v5152 = vunpack.c.h.b16 %v5057
  %v5153 = vunpack.c.l.b16 %v5058
  %v5154 = vunpack.c.h.b16 %v5058
  %v5155 = vunpack.c.l.b16 %v5059
  %v5156 = vunpack.c.h.b16 %v5059
  %v5157 = vunpack.c.l.b16 %v5060
  %v5158 = vunpack.c.h.b16 %v5060
  %v5159 = vunpack.c.l.b16 %v5061
  %v5160 = vunpack.c.h.b16 %v5061
  %v5161 = vunpack.c.l.b16 %v5062
  %v5162 = vunpack.c.h.b16 %v5062
  %v5163 = vunpack.c.l.b16 %v5063
  %v5164 = vunpack.c.h.b16 %v5063
  %v5165 = vunpack.c.l.b16 %v5064
  %v5166 = vunpack.c.h.b16 %v5064
  %v5167 = vunpack.c.l.b16 %v5065
  %v5168 = vunpack.c.h.b16 %v5065
  %v5169 = vunpack.c.l.b16 %v5066
  %v5170 = vunpack.c.h.b16 %v5066
  %v5171 = vunpack.c.l.b16 %v5067
  %v5172 = vunpack.c.h.b16 %v5067
  %v5173 = vunpack.c.l.b16 %v5068
  %v5174 = vunpack.c.h.b16 %v5068
  %v5175 = vunpack.c.l.b16 %v5069
  %v5176 = vunpack.c.h.b16 %v5069
  %v5177 = vunpack.c.l.b16 %v5070
  %v5178 = vunpack.c.h.b16 %v5070
  %v5179 = vunpack.c.l.b16 %v5071
  %v5180 = vunpack.c.h.b16 %v5071
  %v5181 = vunpack.c.l.b16 %v5072
  %v5182 = vunpack.c.h.b16 %v5072
  %v5183 = vunpack.c.l.b16 %v5073
  %v5184 = vunpack.c.h.b16 %v5073
  %v5185 = vunpack.c.l.b16 %v5074
  %v5186 = vunpack.c.h.b16 %v5074
  %v5187 = vunpack.c.l.b16 %v5075
  %v5188 = vunpack.c.h.b16 %v5075
  %v5189 = vunpack.c.l.b16 %v5076
  %v5190 = vunpack.c.h.b16 %v5076
  %v5191 = vunpack.c.l.b16 %v5077
  %v5192 = vunpack.c.h.b16 %v5077
  %v5193 = vunpack.c.l.b16 %v5078
  %v5194 = vunpack.c.h.b16 %v5078
  %v5195 = vunpack.c.l.b16 %v5079
  %v5196 = vunpack.c.h.b16 %v5079
  %v5197 = vunpack.c.l.b16 %v5080
  %v5198 = vunpack.c.h.b16 %v5080
  %v5199 = vunpack.c.l.b16 %v5081
  %v5200 = vunpack.c.h.b16 %v5081
  %v5201 = vpack.c.b16 %v5139, %v5137
  %v5202 = vpack.c.b16 %v5140, %v5138
  %v5203 = vpack.c.b16 %v5143, %v5141
  %v5204 = vpack.c.b16 %v5144, %v5142
  %v5205 = vpack.c.b16 %v5147, %v5145
  %v5206 = vpack.c.b16 %v5148, %v5146
  %v5207 = vpack.c.b16 %v5151, %v5149
  %v5208 = vpack.c.b16 %v5152, %v5150
  %v5209 = vpack.c.b16 %v5155, %v5153
  %v5210 = vpack.c.b16 %v5156, %v5154
  %v5211 = vpack.c.b16 %v5159, %v5157
  %v5212 = vpack.c.b16 %v5160, %v5158
  %v5213 = vpack.c.b16 %v5163, %v5161
  %v5214 = vpack.c.b16 %v5164, %v5162
  %v5215 = vpack.c.b16 %v5167, %v5165
  %v5216 = vpack.c.b16 %v5168, %v5166
  %v5217 = vpack.c.b16 %v5171, %v5169
  %v5218 = vpack.c.b16 %v5172, %v5170
  %v5219 = vpack.c.b16 %v5175, %v5173
  %v5220 = vpack.c.b16 %v5176, %v5174
  %v5221 = vpack.c.b16 %v5179, %v5177
  %v5222 = vpack.c.b16 %v5180, %v5178
  %v5223 = vpack.c.b16 %v5183, %v5181
  %v5224 = vpack.c.b16 %v5184, %v5182
  %v5225 = vpack.c.b16 %v5187, %v5185
  %v5226 = vpack.c.b16 %v5188, %v5186
  %v5227 = vpack.c.b16 %v5191, %v5189
  %v5228 = vpack.c.b16 %v5192, %v5190
  %v5229 = vpack.c.b16 %v5195, %v5193
  %v5230 = vpack.c.b16 %v5196, %v5194
  %v5231 = vpack.c.b16 %v5199, %v5197
  %v5232 = vpack.c.b16 %v5200, %v5198
  %5265 = vmatprep.subr.bf16.mxu0 %v5202
  %5266 = vmatpush1.bf16.msra.mxu0 %v5201
  %5267 = vmatprep.subr.bf16.mxu0 %v5204
  %5268 = vmatpush1.bf16.msra.mxu0 %v5203
  %5269 = vmatprep.subr.bf16.mxu0 %v5206
  %5270 = vmatpush1.bf16.msra.mxu0 %v5205
  %5271 = vmatprep.subr.bf16.mxu0 %v5208
  %5272 = vmatpush1.bf16.msra.mxu0 %v5207
  %5273 = vmatprep.subr.bf16.mxu0 %v5210
  %5274 = vmatpush1.bf16.msra.mxu0 %v5209
  %5275 = vmatprep.subr.bf16.mxu0 %v5212
  %5276 = vmatpush1.bf16.msra.mxu0 %v5211
  %5277 = vmatprep.subr.bf16.mxu0 %v5214
  %5278 = vmatpush1.bf16.msra.mxu0 %v5213
  %5279 = vmatprep.subr.bf16.mxu0 %v5216
  %5280 = vmatpush1.bf16.msra.mxu0 %v5215
  %5281 = vmatprep.subr.bf16.mxu0 %v5218
  %5282 = vmatpush1.bf16.msra.mxu0 %v5217
  %5283 = vmatprep.subr.bf16.mxu0 %v5220
  %5284 = vmatpush1.bf16.msra.mxu0 %v5219
  %5285 = vmatprep.subr.bf16.mxu0 %v5222
  %5286 = vmatpush1.bf16.msra.mxu0 %v5221
  %5287 = vmatprep.subr.bf16.mxu0 %v5224
  %5288 = vmatpush1.bf16.msra.mxu0 %v5223
  %5289 = vmatprep.subr.bf16.mxu0 %v5226
  %5290 = vmatpush1.bf16.msra.mxu0 %v5225
  %5291 = vmatprep.subr.bf16.mxu0 %v5228
  %5292 = vmatpush1.bf16.msra.mxu0 %v5227
  %5293 = vmatprep.subr.bf16.mxu0 %v5230
  %5294 = vmatpush1.bf16.msra.mxu0 %v5229
  %5295 = vmatprep.subr.bf16.mxu0 %v5232
  %5296 = vmatpush1.bf16.msra.mxu0 %v5231
  %5297 = vmatprep.mubr.bf16.mxu0 %v5102
  %5298 = vmatmul.mubr.bf16.gmra.mrb[0].mxu0 %v5094
  %v5299 = vpop.f32.mrb[0].mxu0
  %v5300 = vadd.f32 0.0, %v5299
  %v5301 = vpop.f32.mrb[0].mxu0
  %v5302 = vadd.f32 0.0, %v5301
  %v5303 = vpop.f32.mrb[0].mxu0
  %v5304 = vpop.f32.mrb[0].mxu0
  %5305 = vdwg.mxu0
  %v5306 = vadd.f32 %v5047, %v5300
  %v5307 = vadd.f32 %v5048, %v5302
  %v5308 = vld [vmem:[%s2030] sm:$0xff]
  %v5309 = vld [vmem:[%s2030 + $0x8] sm:$0xff]
  %v5310 = vld [vmem:[%s2030 + $0x10] sm:$0xff]
  %v5311 = vld [vmem:[%s2030 + $0x18] sm:$0xff]
  %v5312 = vld [vmem:[%s2030 + $0x20] sm:$0xff]
  %v5313 = vld [vmem:[%s2030 + $0x28] sm:$0xff]
  %v5314 = vld [vmem:[%s2030 + $0x30] sm:$0xff]
  %v5315 = vld [vmem:[%s2030 + $0x38] sm:$0xff]
  %v5316 = vld [vmem:[%s2030 + $0x40] sm:$0xff]
  %v5317 = vld [vmem:[%s2030 + $0x48] sm:$0xff]
  %v5318 = vld [vmem:[%s2030 + $0x50] sm:$0xff]
  %v5319 = vld [vmem:[%s2030 + $0x58] sm:$0xff]
  %v5320 = vld [vmem:[%s2030 + $0x60] sm:$0xff]
  %v5321 = vld [vmem:[%s2030 + $0x68] sm:$0xff]
  %v5322 = vld [vmem:[%s2030 + $0x70] sm:$0xff]
  %v5323 = vld [vmem:[%s2030 + $0x78] sm:$0xff]
  %v5324 = vld [vmem:[%s2030 + $0x80] sm:$0xff]
  %v5325 = vld [vmem:[%s2030 + $0x88] sm:$0xff]
  %v5326 = vld [vmem:[%s2030 + $0x90] sm:$0xff]
  %v5327 = vld [vmem:[%s2030 + $0x98] sm:$0xff]
  %v5328 = vld [vmem:[%s2030 + $0xa0] sm:$0xff]
  %v5329 = vld [vmem:[%s2030 + $0xa8] sm:$0xff]
  %v5330 = vld [vmem:[%s2030 + $0xb0] sm:$0xff]
  %v5331 = vld [vmem:[%s2030 + $0xb8] sm:$0xff]
  %v5332 = vld [vmem:[%s2030 + $0xc0] sm:$0xff]
  %v5333 = vld [vmem:[%s2030 + $0xc8] sm:$0xff]
  %v5334 = vld [vmem:[%s2030 + $0xd0] sm:$0xff]
  %v5335 = vld [vmem:[%s2030 + $0xd8] sm:$0xff]
  %v5336 = vld [vmem:[%s2030 + $0xe0] sm:$0xff]
  %v5337 = vld [vmem:[%s2030 + $0xe8] sm:$0xff]
  %v5338 = vld [vmem:[%s2030 + $0xf0] sm:$0xff]
  %v5339 = vld [vmem:[%s2030 + $0xf8] sm:$0xff]
  %v5340 = vpack.c.b16 %v5083, %v5083
  %v5341 = vpack.c.b16 %v5084, %v5084
  %v5376 = vunpack.c.l.b16 %v5308
  %v5377 = vunpack.c.h.b16 %v5308
  %v5378 = vunpack.c.l.b16 %v5309
  %v5379 = vunpack.c.h.b16 %v5309
  %v5380 = vunpack.c.l.b16 %v5310
  %v5381 = vunpack.c.h.b16 %v5310
  %v5382 = vunpack.c.l.b16 %v5311
  %v5383 = vunpack.c.h.b16 %v5311
  %v5384 = vunpack.c.l.b16 %v5312
  %v5385 = vunpack.c.h.b16 %v5312
  %v5386 = vunpack.c.l.b16 %v5313
  %v5387 = vunpack.c.h.b16 %v5313
  %v5388 = vunpack.c.l.b16 %v5314
  %v5389 = vunpack.c.h.b16 %v5314
  %v5390 = vunpack.c.l.b16 %v5315
  %v5391 = vunpack.c.h.b16 %v5315
  %v5392 = vunpack.c.l.b16 %v5316
  %v5393 = vunpack.c.h.b16 %v5316
  %v5394 = vunpack.c.l.b16 %v5317
  %v5395 = vunpack.c.h.b16 %v5317
  %v5396 = vunpack.c.l.b16 %v5318
  %v5397 = vunpack.c.h.b16 %v5318
  %v5398 = vunpack.c.l.b16 %v5319
  %v5399 = vunpack.c.h.b16 %v5319
  %v5400 = vunpack.c.l.b16 %v5320
  %v5401 = vunpack.c.h.b16 %v5320
  %v5402 = vunpack.c.l.b16 %v5321
  %v5403 = vunpack.c.h.b16 %v5321
  %v5404 = vunpack.c.l.b16 %v5322
  %v5405 = vunpack.c.h.b16 %v5322
  %v5406 = vunpack.c.l.b16 %v5323
  %v5407 = vunpack.c.h.b16 %v5323
  %v5408 = vunpack.c.l.b16 %v5324
  %v5409 = vunpack.c.h.b16 %v5324
  %v5410 = vunpack.c.l.b16 %v5325
  %v5411 = vunpack.c.h.b16 %v5325
  %v5412 = vunpack.c.l.b16 %v5326
  %v5413 = vunpack.c.h.b16 %v5326
  %v5414 = vunpack.c.l.b16 %v5327
  %v5415 = vunpack.c.h.b16 %v5327
  %v5416 = vunpack.c.l.b16 %v5328
  %v5417 = vunpack.c.h.b16 %v5328
  %v5418 = vunpack.c.l.b16 %v5329
  %v5419 = vunpack.c.h.b16 %v5329
  %v5420 = vunpack.c.l.b16 %v5330
  %v5421 = vunpack.c.h.b16 %v5330
  %v5422 = vunpack.c.l.b16 %v5331
  %v5423 = vunpack.c.h.b16 %v5331
  %v5424 = vunpack.c.l.b16 %v5332
  %v5425 = vunpack.c.h.b16 %v5332
  %v5426 = vunpack.c.l.b16 %v5333
  %v5427 = vunpack.c.h.b16 %v5333
  %v5428 = vunpack.c.l.b16 %v5334
  %v5429 = vunpack.c.h.b16 %v5334
  %v5430 = vunpack.c.l.b16 %v5335
  %v5431 = vunpack.c.h.b16 %v5335
  %v5432 = vunpack.c.l.b16 %v5336
  %v5433 = vunpack.c.h.b16 %v5336
  %v5434 = vunpack.c.l.b16 %v5337
  %v5435 = vunpack.c.h.b16 %v5337
  %v5436 = vunpack.c.l.b16 %v5338
  %v5437 = vunpack.c.h.b16 %v5338
  %v5438 = vunpack.c.l.b16 %v5339
  %v5439 = vunpack.c.h.b16 %v5339
  %v5440 = vpack.c.b16 %v5378, %v5376
  %v5441 = vpack.c.b16 %v5379, %v5377
  %v5442 = vpack.c.b16 %v5382, %v5380
  %v5443 = vpack.c.b16 %v5383, %v5381
  %v5444 = vpack.c.b16 %v5386, %v5384
  %v5445 = vpack.c.b16 %v5387, %v5385
  %v5446 = vpack.c.b16 %v5390, %v5388
  %v5447 = vpack.c.b16 %v5391, %v5389
  %v5448 = vpack.c.b16 %v5394, %v5392
  %v5449 = vpack.c.b16 %v5395, %v5393
  %v5450 = vpack.c.b16 %v5398, %v5396
  %v5451 = vpack.c.b16 %v5399, %v5397
  %v5452 = vpack.c.b16 %v5402, %v5400
  %v5453 = vpack.c.b16 %v5403, %v5401
  %v5454 = vpack.c.b16 %v5406, %v5404
  %v5455 = vpack.c.b16 %v5407, %v5405
  %v5456 = vpack.c.b16 %v5410, %v5408
  %v5457 = vpack.c.b16 %v5411, %v5409
  %v5458 = vpack.c.b16 %v5414, %v5412
  %v5459 = vpack.c.b16 %v5415, %v5413
  %v5460 = vpack.c.b16 %v5418, %v5416
  %v5461 = vpack.c.b16 %v5419, %v5417
  %v5462 = vpack.c.b16 %v5422, %v5420
  %v5463 = vpack.c.b16 %v5423, %v5421
  %v5464 = vpack.c.b16 %v5426, %v5424
  %v5465 = vpack.c.b16 %v5427, %v5425
  %v5466 = vpack.c.b16 %v5430, %v5428
  %v5467 = vpack.c.b16 %v5431, %v5429
  %v5468 = vpack.c.b16 %v5434, %v5432
  %v5469 = vpack.c.b16 %v5435, %v5433
  %v5470 = vpack.c.b16 %v5438, %v5436
  %v5471 = vpack.c.b16 %v5439, %v5437
  %5504 = vmatprep.subr.bf16.mxu0 %v5441
  %5505 = vmatpush1.bf16.msra.mxu0 %v5440
  %5506 = vmatprep.subr.bf16.mxu0 %v5443
  %5507 = vmatpush1.bf16.msra.mxu0 %v5442
  %5508 = vmatprep.subr.bf16.mxu0 %v5445
  %5509 = vmatpush1.bf16.msra.mxu0 %v5444
  %5510 = vmatprep.subr.bf16.mxu0 %v5447
  %5511 = vmatpush1.bf16.msra.mxu0 %v5446
  %5512 = vmatprep.subr.bf16.mxu0 %v5449
  %5513 = vmatpush1.bf16.msra.mxu0 %v5448
  %5514 = vmatprep.subr.bf16.mxu0 %v5451
  %5515 = vmatpush1.bf16.msra.mxu0 %v5450
  %5516 = vmatprep.subr.bf16.mxu0 %v5453
  %5517 = vmatpush1.bf16.msra.mxu0 %v5452
  %5518 = vmatprep.subr.bf16.mxu0 %v5455
  %5519 = vmatpush1.bf16.msra.mxu0 %v5454
  %5520 = vmatprep.subr.bf16.mxu0 %v5457
  %5521 = vmatpush1.bf16.msra.mxu0 %v5456
  %5522 = vmatprep.subr.bf16.mxu0 %v5459
  %5523 = vmatpush1.bf16.msra.mxu0 %v5458
  %5524 = vmatprep.subr.bf16.mxu0 %v5461
  %5525 = vmatpush1.bf16.msra.mxu0 %v5460
  %5526 = vmatprep.subr.bf16.mxu0 %v5463
  %5527 = vmatpush1.bf16.msra.mxu0 %v5462
  %5528 = vmatprep.subr.bf16.mxu0 %v5465
  %5529 = vmatpush1.bf16.msra.mxu0 %v5464
  %5530 = vmatprep.subr.bf16.mxu0 %v5467
  %5531 = vmatpush1.bf16.msra.mxu0 %v5466
  %5532 = vmatprep.subr.bf16.mxu0 %v5469
  %5533 = vmatpush1.bf16.msra.mxu0 %v5468
  %5534 = vmatprep.subr.bf16.mxu0 %v5471
  %5535 = vmatpush1.bf16.msra.mxu0 %v5470
  %5536 = vmatprep.mubr.bf16.mxu0 %v5341
  %5537 = vmatmul.mubr.bf16.gmra.mrb[0].mxu0 %v5340
  %v5538 = vpop.f32.mrb[0].mxu0
  %v5539 = vadd.f32 0.0, %v5538
  %v5540 = vpop.f32.mrb[0].mxu0
  %v5541 = vadd.f32 0.0, %v5540
  %v5542 = vpop.f32.mrb[0].mxu0
  %v5543 = vpop.f32.mrb[0].mxu0
  %5544 = vdwg.mxu0
  %v5545 = vadd.f32 %v5306, %v5539
  %v5546 = vadd.f32 %v5307, %v5541
  %v5547 = vld [vmem:[%s3299 + $0x8] sm:$0xff]
  %v5548 = vld [vmem:[%s3299 + $0x10] sm:$0x11]
  %v5549 = vld [vmem:[%s2272] sm:$0xff]
  %v5550 = vld [vmem:[%s2272 + $0x8] sm:$0xff]
  %v5551 = vld [vmem:[%s2272 + $0x10] sm:$0xff]
  %v5552 = vld [vmem:[%s2272 + $0x18] sm:$0xff]
  %v5553 = vld [vmem:[%s2272 + $0x20] sm:$0xff]
  %v5554 = vld [vmem:[%s2272 + $0x28] sm:$0xff]
  %v5555 = vld [vmem:[%s2272 + $0x30] sm:$0xff]
  %v5556 = vld [vmem:[%s2272 + $0x38] sm:$0xff]
  %v5557 = vld [vmem:[%s2272 + $0x40] sm:$0xff]
  %v5558 = vld [vmem:[%s2272 + $0x48] sm:$0xff]
  %v5559 = vld [vmem:[%s2272 + $0x50] sm:$0xff]
  %v5560 = vld [vmem:[%s2272 + $0x58] sm:$0xff]
  %v5561 = vld [vmem:[%s2272 + $0x60] sm:$0xff]
  %v5562 = vld [vmem:[%s2272 + $0x68] sm:$0xff]
  %v5563 = vld [vmem:[%s2272 + $0x70] sm:$0xff]
  %v5564 = vld [vmem:[%s2272 + $0x78] sm:$0xff]
  %v5565 = vld [vmem:[%s2272 + $0x80] sm:$0xff]
  %v5566 = vld [vmem:[%s2272 + $0x88] sm:$0xff]
  %v5567 = vld [vmem:[%s2272 + $0x90] sm:$0xff]
  %v5568 = vld [vmem:[%s2272 + $0x98] sm:$0xff]
  %v5569 = vld [vmem:[%s2272 + $0xa0] sm:$0xff]
  %v5570 = vld [vmem:[%s2272 + $0xa8] sm:$0xff]
  %v5571 = vld [vmem:[%s2272 + $0xb0] sm:$0xff]
  %v5572 = vld [vmem:[%s2272 + $0xb8] sm:$0xff]
  %v5573 = vld [vmem:[%s2272 + $0xc0] sm:$0xff]
  %v5574 = vld [vmem:[%s2272 + $0xc8] sm:$0xff]
  %v5575 = vld [vmem:[%s2272 + $0xd0] sm:$0xff]
  %v5576 = vld [vmem:[%s2272 + $0xd8] sm:$0xff]
  %v5577 = vld [vmem:[%s2272 + $0xe0] sm:$0xff]
  %v5578 = vld [vmem:[%s2272 + $0xe8] sm:$0xff]
  %v5579 = vld [vmem:[%s2272 + $0xf0] sm:$0xff]
  %v5580 = vld [vmem:[%s2272 + $0xf8] sm:$0xff]
  %v5583 = vunpack.c.l.b16 %v5547
  %v5584 = vunpack.c.h.b16 %v5547
  %v5585 = vunpack.c.l.b16 %v5548
  %v5586 = vunpack.c.h.b16 %v5548
  %v5587 = vpack.c.b16 %v5585, %v5583
  %v5588 = vpack.c.b16 %v5586, %v5584
  %v5590 = vshrl.u32 %v5587, 16
  %v5592 = vshll.u32 %v5587, 16
  %v5594 = vrot.slane %v5592, 1
  %v5595 = vor.u32 %v5590, %v5594
  %v5597 = vshrl.u32 %v5588, 16
  %v5599 = vshll.u32 %v5588, 16
  %v5601 = vrot.slane %v5599, 1
  %v5602 = vor.u32 %v5597, %v5601
  %v5637 = vunpack.c.l.b16 %v5549
  %v5638 = vunpack.c.h.b16 %v5549
  %v5639 = vunpack.c.l.b16 %v5550
  %v5640 = vunpack.c.h.b16 %v5550
  %v5641 = vunpack.c.l.b16 %v5551
  %v5642 = vunpack.c.h.b16 %v5551
  %v5643 = vunpack.c.l.b16 %v5552
  %v5644 = vunpack.c.h.b16 %v5552
  %v5645 = vunpack.c.l.b16 %v5553
  %v5646 = vunpack.c.h.b16 %v5553
  %v5647 = vunpack.c.l.b16 %v5554
  %v5648 = vunpack.c.h.b16 %v5554
  %v5649 = vunpack.c.l.b16 %v5555
  %v5650 = vunpack.c.h.b16 %v5555
  %v5651 = vunpack.c.l.b16 %v5556
  %v5652 = vunpack.c.h.b16 %v5556
  %v5653 = vunpack.c.l.b16 %v5557
  %v5654 = vunpack.c.h.b16 %v5557
  %v5655 = vunpack.c.l.b16 %v5558
  %v5656 = vunpack.c.h.b16 %v5558
  %v5657 = vunpack.c.l.b16 %v5559
  %v5658 = vunpack.c.h.b16 %v5559
  %v5659 = vunpack.c.l.b16 %v5560
  %v5660 = vunpack.c.h.b16 %v5560
  %v5661 = vunpack.c.l.b16 %v5561
  %v5662 = vunpack.c.h.b16 %v5561
  %v5663 = vunpack.c.l.b16 %v5562
  %v5664 = vunpack.c.h.b16 %v5562
  %v5665 = vunpack.c.l.b16 %v5563
  %v5666 = vunpack.c.h.b16 %v5563
  %v5667 = vunpack.c.l.b16 %v5564
  %v5668 = vunpack.c.h.b16 %v5564
  %v5669 = vunpack.c.l.b16 %v5565
  %v5670 = vunpack.c.h.b16 %v5565
  %v5671 = vunpack.c.l.b16 %v5566
  %v5672 = vunpack.c.h.b16 %v5566
  %v5673 = vunpack.c.l.b16 %v5567
  %v5674 = vunpack.c.h.b16 %v5567
  %v5675 = vunpack.c.l.b16 %v5568
  %v5676 = vunpack.c.h.b16 %v5568
  %v5677 = vunpack.c.l.b16 %v5569
  %v5678 = vunpack.c.h.b16 %v5569
  %v5679 = vunpack.c.l.b16 %v5570
  %v5680 = vunpack.c.h.b16 %v5570
  %v5681 = vunpack.c.l.b16 %v5571
  %v5682 = vunpack.c.h.b16 %v5571
  %v5683 = vunpack.c.l.b16 %v5572
  %v5684 = vunpack.c.h.b16 %v5572
  %v5685 = vunpack.c.l.b16 %v5573
  %v5686 = vunpack.c.h.b16 %v5573
  %v5687 = vunpack.c.l.b16 %v5574
  %v5688 = vunpack.c.h.b16 %v5574
  %v5689 = vunpack.c.l.b16 %v5575
  %v5690 = vunpack.c.h.b16 %v5575
  %v5691 = vunpack.c.l.b16 %v5576
  %v5692 = vunpack.c.h.b16 %v5576
  %v5693 = vunpack.c.l.b16 %v5577
  %v5694 = vunpack.c.h.b16 %v5577
  %v5695 = vunpack.c.l.b16 %v5578
  %v5696 = vunpack.c.h.b16 %v5578
  %v5697 = vunpack.c.l.b16 %v5579
  %v5698 = vunpack.c.h.b16 %v5579
  %v5699 = vunpack.c.l.b16 %v5580
  %v5700 = vunpack.c.h.b16 %v5580
  %v5701 = vpack.c.b16 %v5639, %v5637
  %v5702 = vpack.c.b16 %v5640, %v5638
  %v5703 = vpack.c.b16 %v5643, %v5641
  %v5704 = vpack.c.b16 %v5644, %v5642
  %v5705 = vpack.c.b16 %v5647, %v5645
  %v5706 = vpack.c.b16 %v5648, %v5646
  %v5707 = vpack.c.b16 %v5651, %v5649
  %v5708 = vpack.c.b16 %v5652, %v5650
  %v5709 = vpack.c.b16 %v5655, %v5653
  %v5710 = vpack.c.b16 %v5656, %v5654
  %v5711 = vpack.c.b16 %v5659, %v5657
  %v5712 = vpack.c.b16 %v5660, %v5658
  %v5713 = vpack.c.b16 %v5663, %v5661
  %v5714 = vpack.c.b16 %v5664, %v5662
  %v5715 = vpack.c.b16 %v5667, %v5665
  %v5716 = vpack.c.b16 %v5668, %v5666
  %v5717 = vpack.c.b16 %v5671, %v5669
  %v5718 = vpack.c.b16 %v5672, %v5670
  %v5719 = vpack.c.b16 %v5675, %v5673
  %v5720 = vpack.c.b16 %v5676, %v5674
  %v5721 = vpack.c.b16 %v5679, %v5677
  %v5722 = vpack.c.b16 %v5680, %v5678
  %v5723 = vpack.c.b16 %v5683, %v5681
  %v5724 = vpack.c.b16 %v5684, %v5682
  %v5725 = vpack.c.b16 %v5687, %v5685
  %v5726 = vpack.c.b16 %v5688, %v5686
  %v5727 = vpack.c.b16 %v5691, %v5689
  %v5728 = vpack.c.b16 %v5692, %v5690
  %v5729 = vpack.c.b16 %v5695, %v5693
  %v5730 = vpack.c.b16 %v5696, %v5694
  %v5731 = vpack.c.b16 %v5699, %v5697
  %v5732 = vpack.c.b16 %v5700, %v5698
  %5765 = vmatprep.subr.bf16.mxu0 %v5702
  %5766 = vmatpush1.bf16.msra.mxu0 %v5701
  %5767 = vmatprep.subr.bf16.mxu0 %v5704
  %5768 = vmatpush1.bf16.msra.mxu0 %v5703
  %5769 = vmatprep.subr.bf16.mxu0 %v5706
  %5770 = vmatpush1.bf16.msra.mxu0 %v5705
  %5771 = vmatprep.subr.bf16.mxu0 %v5708
  %5772 = vmatpush1.bf16.msra.mxu0 %v5707
  %5773 = vmatprep.subr.bf16.mxu0 %v5710
  %5774 = vmatpush1.bf16.msra.mxu0 %v5709
  %5775 = vmatprep.subr.bf16.mxu0 %v5712
  %5776 = vmatpush1.bf16.msra.mxu0 %v5711
  %5777 = vmatprep.subr.bf16.mxu0 %v5714
  %5778 = vmatpush1.bf16.msra.mxu0 %v5713
  %5779 = vmatprep.subr.bf16.mxu0 %v5716
  %5780 = vmatpush1.bf16.msra.mxu0 %v5715
  %5781 = vmatprep.subr.bf16.mxu0 %v5718
  %5782 = vmatpush1.bf16.msra.mxu0 %v5717
  %5783 = vmatprep.subr.bf16.mxu0 %v5720
  %5784 = vmatpush1.bf16.msra.mxu0 %v5719
  %5785 = vmatprep.subr.bf16.mxu0 %v5722
  %5786 = vmatpush1.bf16.msra.mxu0 %v5721
  %5787 = vmatprep.subr.bf16.mxu0 %v5724
  %5788 = vmatpush1.bf16.msra.mxu0 %v5723
  %5789 = vmatprep.subr.bf16.mxu0 %v5726
  %5790 = vmatpush1.bf16.msra.mxu0 %v5725
  %5791 = vmatprep.subr.bf16.mxu0 %v5728
  %5792 = vmatpush1.bf16.msra.mxu0 %v5727
  %5793 = vmatprep.subr.bf16.mxu0 %v5730
  %5794 = vmatpush1.bf16.msra.mxu0 %v5729
  %5795 = vmatprep.subr.bf16.mxu0 %v5732
  %5796 = vmatpush1.bf16.msra.mxu0 %v5731
  %5797 = vmatprep.mubr.bf16.mxu0 %v5602
  %5798 = vmatmul.mubr.bf16.gmra.mrb[0].mxu0 %v5595
  %v5799 = vpop.f32.mrb[0].mxu0
  %v5800 = vadd.f32 0.0, %v5799
  %v5801 = vpop.f32.mrb[0].mxu0
  %v5802 = vadd.f32 0.0, %v5801
  %v5803 = vpop.f32.mrb[0].mxu0
  %v5804 = vpop.f32.mrb[0].mxu0
  %5805 = vdwg.mxu0
  %v5806 = vadd.f32 %v5545, %v5800
  %v5807 = vadd.f32 %v5546, %v5802
  %v5808 = vld [vmem:[%s3299 + $0x8] sm:$0xee]
  %v5809 = vld [vmem:[%s2533] sm:$0xff]
  %v5810 = vld [vmem:[%s2533 + $0x8] sm:$0xff]
  %v5811 = vld [vmem:[%s2533 + $0x10] sm:$0xff]
  %v5812 = vld [vmem:[%s2533 + $0x18] sm:$0xff]
  %v5813 = vld [vmem:[%s2533 + $0x20] sm:$0xff]
  %v5814 = vld [vmem:[%s2533 + $0x28] sm:$0xff]
  %v5815 = vld [vmem:[%s2533 + $0x30] sm:$0xff]
  %v5816 = vld [vmem:[%s2533 + $0x38] sm:$0xff]
  %v5817 = vld [vmem:[%s2533 + $0x40] sm:$0xff]
  %v5818 = vld [vmem:[%s2533 + $0x48] sm:$0xff]
  %v5819 = vld [vmem:[%s2533 + $0x50] sm:$0xff]
  %v5820 = vld [vmem:[%s2533 + $0x58] sm:$0xff]
  %v5821 = vld [vmem:[%s2533 + $0x60] sm:$0xff]
  %v5822 = vld [vmem:[%s2533 + $0x68] sm:$0xff]
  %v5823 = vld [vmem:[%s2533 + $0x70] sm:$0xff]
  %v5824 = vld [vmem:[%s2533 + $0x78] sm:$0xff]
  %v5825 = vld [vmem:[%s2533 + $0x80] sm:$0xff]
  %v5826 = vld [vmem:[%s2533 + $0x88] sm:$0xff]
  %v5827 = vld [vmem:[%s2533 + $0x90] sm:$0xff]
  %v5828 = vld [vmem:[%s2533 + $0x98] sm:$0xff]
  %v5829 = vld [vmem:[%s2533 + $0xa0] sm:$0xff]
  %v5830 = vld [vmem:[%s2533 + $0xa8] sm:$0xff]
  %v5831 = vld [vmem:[%s2533 + $0xb0] sm:$0xff]
  %v5832 = vld [vmem:[%s2533 + $0xb8] sm:$0xff]
  %v5833 = vld [vmem:[%s2533 + $0xc0] sm:$0xff]
  %v5834 = vld [vmem:[%s2533 + $0xc8] sm:$0xff]
  %v5835 = vld [vmem:[%s2533 + $0xd0] sm:$0xff]
  %v5836 = vld [vmem:[%s2533 + $0xd8] sm:$0xff]
  %v5837 = vld [vmem:[%s2533 + $0xe0] sm:$0xff]
  %v5838 = vld [vmem:[%s2533 + $0xe8] sm:$0xff]
  %v5839 = vld [vmem:[%s2533 + $0xf0] sm:$0xff]
  %v5840 = vld [vmem:[%s2533 + $0xf8] sm:$0xff]
  %v5842 = vunpack.c.l.b16 %v5808
  %v5843 = vunpack.c.h.b16 %v5808
  %v5844 = vpack.c.b16 %v5585, %v5842
  %v5845 = vpack.c.b16 %v5586, %v5843
  %v5846 = vrot.slane %v5844, 1
  %v5847 = vrot.slane %v5845, 1
  %v5882 = vunpack.c.l.b16 %v5809
  %v5883 = vunpack.c.h.b16 %v5809
  %v5884 = vunpack.c.l.b16 %v5810
  %v5885 = vunpack.c.h.b16 %v5810
  %v5886 = vunpack.c.l.b16 %v5811
  %v5887 = vunpack.c.h.b16 %v5811
  %v5888 = vunpack.c.l.b16 %v5812
  %v5889 = vunpack.c.h.b16 %v5812
  %v5890 = vunpack.c.l.b16 %v5813
  %v5891 = vunpack.c.h.b16 %v5813
  %v5892 = vunpack.c.l.b16 %v5814
  %v5893 = vunpack.c.h.b16 %v5814
  %v5894 = vunpack.c.l.b16 %v5815
  %v5895 = vunpack.c.h.b16 %v5815
  %v5896 = vunpack.c.l.b16 %v5816
  %v5897 = vunpack.c.h.b16 %v5816
  %v5898 = vunpack.c.l.b16 %v5817
  %v5899 = vunpack.c.h.b16 %v5817
  %v5900 = vunpack.c.l.b16 %v5818
  %v5901 = vunpack.c.h.b16 %v5818
  %v5902 = vunpack.c.l.b16 %v5819
  %v5903 = vunpack.c.h.b16 %v5819
  %v5904 = vunpack.c.l.b16 %v5820
  %v5905 = vunpack.c.h.b16 %v5820
  %v5906 = vunpack.c.l.b16 %v5821
  %v5907 = vunpack.c.h.b16 %v5821
  %v5908 = vunpack.c.l.b16 %v5822
  %v5909 = vunpack.c.h.b16 %v5822
  %v5910 = vunpack.c.l.b16 %v5823
  %v5911 = vunpack.c.h.b16 %v5823
  %v5912 = vunpack.c.l.b16 %v5824
  %v5913 = vunpack.c.h.b16 %v5824
  %v5914 = vunpack.c.l.b16 %v5825
  %v5915 = vunpack.c.h.b16 %v5825
  %v5916 = vunpack.c.l.b16 %v5826
  %v5917 = vunpack.c.h.b16 %v5826
  %v5918 = vunpack.c.l.b16 %v5827
  %v5919 = vunpack.c.h.b16 %v5827
  %v5920 = vunpack.c.l.b16 %v5828
  %v5921 = vunpack.c.h.b16 %v5828
  %v5922 = vunpack.c.l.b16 %v5829
  %v5923 = vunpack.c.h.b16 %v5829
  %v5924 = vunpack.c.l.b16 %v5830
  %v5925 = vunpack.c.h.b16 %v5830
  %v5926 = vunpack.c.l.b16 %v5831
  %v5927 = vunpack.c.h.b16 %v5831
  %v5928 = vunpack.c.l.b16 %v5832
  %v5929 = vunpack.c.h.b16 %v5832
  %v5930 = vunpack.c.l.b16 %v5833
  %v5931 = vunpack.c.h.b16 %v5833
  %v5932 = vunpack.c.l.b16 %v5834
  %v5933 = vunpack.c.h.b16 %v5834
  %v5934 = vunpack.c.l.b16 %v5835
  %v5935 = vunpack.c.h.b16 %v5835
  %v5936 = vunpack.c.l.b16 %v5836
  %v5937 = vunpack.c.h.b16 %v5836
  %v5938 = vunpack.c.l.b16 %v5837
  %v5939 = vunpack.c.h.b16 %v5837
  %v5940 = vunpack.c.l.b16 %v5838
  %v5941 = vunpack.c.h.b16 %v5838
  %v5942 = vunpack.c.l.b16 %v5839
  %v5943 = vunpack.c.h.b16 %v5839
  %v5944 = vunpack.c.l.b16 %v5840
  %v5945 = vunpack.c.h.b16 %v5840
  %v5946 = vpack.c.b16 %v5884, %v5882
  %v5947 = vpack.c.b16 %v5885, %v5883
  %v5948 = vpack.c.b16 %v5888, %v5886
  %v5949 = vpack.c.b16 %v5889, %v5887
  %v5950 = vpack.c.b16 %v5892, %v5890
  %v5951 = vpack.c.b16 %v5893, %v5891
  %v5952 = vpack.c.b16 %v5896, %v5894
  %v5953 = vpack.c.b16 %v5897, %v5895
  %v5954 = vpack.c.b16 %v5900, %v5898
  %v5955 = vpack.c.b16 %v5901, %v5899
  %v5956 = vpack.c.b16 %v5904, %v5902
  %v5957 = vpack.c.b16 %v5905, %v5903
  %v5958 = vpack.c.b16 %v5908, %v5906
  %v5959 = vpack.c.b16 %v5909, %v5907
  %v5960 = vpack.c.b16 %v5912, %v5910
  %v5961 = vpack.c.b16 %v5913, %v5911
  %v5962 = vpack.c.b16 %v5916, %v5914
  %v5963 = vpack.c.b16 %v5917, %v5915
  %v5964 = vpack.c.b16 %v5920, %v5918
  %v5965 = vpack.c.b16 %v5921, %v5919
  %v5966 = vpack.c.b16 %v5924, %v5922
  %v5967 = vpack.c.b16 %v5925, %v5923
  %v5968 = vpack.c.b16 %v5928, %v5926
  %v5969 = vpack.c.b16 %v5929, %v5927
  %v5970 = vpack.c.b16 %v5932, %v5930
  %v5971 = vpack.c.b16 %v5933, %v5931
  %v5972 = vpack.c.b16 %v5936, %v5934
  %v5973 = vpack.c.b16 %v5937, %v5935
  %v5974 = vpack.c.b16 %v5940, %v5938
  %v5975 = vpack.c.b16 %v5941, %v5939
  %v5976 = vpack.c.b16 %v5944, %v5942
  %v5977 = vpack.c.b16 %v5945, %v5943
  %6010 = vmatprep.subr.bf16.mxu0 %v5947
  %6011 = vmatpush1.bf16.msra.mxu0 %v5946
  %6012 = vmatprep.subr.bf16.mxu0 %v5949
  %6013 = vmatpush1.bf16.msra.mxu0 %v5948
  %6014 = vmatprep.subr.bf16.mxu0 %v5951
  %6015 = vmatpush1.bf16.msra.mxu0 %v5950
  %6016 = vmatprep.subr.bf16.mxu0 %v5953
  %6017 = vmatpush1.bf16.msra.mxu0 %v5952
  %6018 = vmatprep.subr.bf16.mxu0 %v5955
  %6019 = vmatpush1.bf16.msra.mxu0 %v5954
  %6020 = vmatprep.subr.bf16.mxu0 %v5957
  %6021 = vmatpush1.bf16.msra.mxu0 %v5956
  %6022 = vmatprep.subr.bf16.mxu0 %v5959
  %6023 = vmatpush1.bf16.msra.mxu0 %v5958
  %6024 = vmatprep.subr.bf16.mxu0 %v5961
  %6025 = vmatpush1.bf16.msra.mxu0 %v5960
  %6026 = vmatprep.subr.bf16.mxu0 %v5963
  %6027 = vmatpush1.bf16.msra.mxu0 %v5962
  %6028 = vmatprep.subr.bf16.mxu0 %v5965
  %6029 = vmatpush1.bf16.msra.mxu0 %v5964
  %6030 = vmatprep.subr.bf16.mxu0 %v5967
  %6031 = vmatpush1.bf16.msra.mxu0 %v5966
  %6032 = vmatprep.subr.bf16.mxu0 %v5969
  %6033 = vmatpush1.bf16.msra.mxu0 %v5968
  %6034 = vmatprep.subr.bf16.mxu0 %v5971
  %6035 = vmatpush1.bf16.msra.mxu0 %v5970
  %6036 = vmatprep.subr.bf16.mxu0 %v5973
  %6037 = vmatpush1.bf16.msra.mxu0 %v5972
  %6038 = vmatprep.subr.bf16.mxu0 %v5975
  %6039 = vmatpush1.bf16.msra.mxu0 %v5974
  %6040 = vmatprep.subr.bf16.mxu0 %v5977
  %6041 = vmatpush1.bf16.msra.mxu0 %v5976
  %6042 = vmatprep.mubr.bf16.mxu0 %v5847
  %6043 = vmatmul.mubr.bf16.gmra.mrb[0].mxu0 %v5846
  %v6044 = vpop.f32.mrb[0].mxu0
  %v6045 = vadd.f32 0.0, %v6044
  %v6046 = vpop.f32.mrb[0].mxu0
  %v6047 = vadd.f32 0.0, %v6046
  %v6048 = vpop.f32.mrb[0].mxu0
  %v6049 = vpop.f32.mrb[0].mxu0
  %6050 = vdwg.mxu0
  %v6051 = vadd.f32 %v5806, %v6045
  %v6052 = vadd.f32 %v5807, %v6047
  %v6053 = vld [vmem:[%s3299 + $0x10] sm:$0x33]
  %v6054 = vld [vmem:[%s2779] sm:$0xff]
  %v6055 = vld [vmem:[%s2779 + $0x8] sm:$0xff]
  %v6056 = vld [vmem:[%s2779 + $0x10] sm:$0xff]
  %v6057 = vld [vmem:[%s2779 + $0x18] sm:$0xff]
  %v6058 = vld [vmem:[%s2779 + $0x20] sm:$0xff]
  %v6059 = vld [vmem:[%s2779 + $0x28] sm:$0xff]
  %v6060 = vld [vmem:[%s2779 + $0x30] sm:$0xff]
  %v6061 = vld [vmem:[%s2779 + $0x38] sm:$0xff]
  %v6062 = vld [vmem:[%s2779 + $0x40] sm:$0xff]
  %v6063 = vld [vmem:[%s2779 + $0x48] sm:$0xff]
  %v6064 = vld [vmem:[%s2779 + $0x50] sm:$0xff]
  %v6065 = vld [vmem:[%s2779 + $0x58] sm:$0xff]
  %v6066 = vld [vmem:[%s2779 + $0x60] sm:$0xff]
  %v6067 = vld [vmem:[%s2779 + $0x68] sm:$0xff]
  %v6068 = vld [vmem:[%s2779 + $0x70] sm:$0xff]
  %v6069 = vld [vmem:[%s2779 + $0x78] sm:$0xff]
  %v6070 = vld [vmem:[%s2779 + $0x80] sm:$0xff]
  %v6071 = vld [vmem:[%s2779 + $0x88] sm:$0xff]
  %v6072 = vld [vmem:[%s2779 + $0x90] sm:$0xff]
  %v6073 = vld [vmem:[%s2779 + $0x98] sm:$0xff]
  %v6074 = vld [vmem:[%s2779 + $0xa0] sm:$0xff]
  %v6075 = vld [vmem:[%s2779 + $0xa8] sm:$0xff]
  %v6076 = vld [vmem:[%s2779 + $0xb0] sm:$0xff]
  %v6077 = vld [vmem:[%s2779 + $0xb8] sm:$0xff]
  %v6078 = vld [vmem:[%s2779 + $0xc0] sm:$0xff]
  %v6079 = vld [vmem:[%s2779 + $0xc8] sm:$0xff]
  %v6080 = vld [vmem:[%s2779 + $0xd0] sm:$0xff]
  %v6081 = vld [vmem:[%s2779 + $0xd8] sm:$0xff]
  %v6082 = vld [vmem:[%s2779 + $0xe0] sm:$0xff]
  %v6083 = vld [vmem:[%s2779 + $0xe8] sm:$0xff]
  %v6084 = vld [vmem:[%s2779 + $0xf0] sm:$0xff]
  %v6085 = vld [vmem:[%s2779 + $0xf8] sm:$0xff]
  %v6087 = vunpack.c.l.b16 %v6053
  %v6088 = vunpack.c.h.b16 %v6053
  %v6089 = vpack.c.b16 %v6087, %v5842
  %v6090 = vpack.c.b16 %v6088, %v5843
  %v6092 = vshrl.u32 %v6089, 16
  %v6094 = vrot.slane %v6092, 1
  %v6095 = vshll.u32 %v6089, 16
  %v6097 = vrot.slane %v6095, 2
  %v6098 = vor.u32 %v6094, %v6097
  %v6100 = vshrl.u32 %v6090, 16
  %v6102 = vrot.slane %v6100, 1
  %v6103 = vshll.u32 %v6090, 16
  %v6105 = vrot.slane %v6103, 2
  %v6106 = vor.u32 %v6102, %v6105
  %v6141 = vunpack.c.l.b16 %v6054
  %v6142 = vunpack.c.h.b16 %v6054
  %v6143 = vunpack.c.l.b16 %v6055
  %v6144 = vunpack.c.h.b16 %v6055
  %v6145 = vunpack.c.l.b16 %v6056
  %v6146 = vunpack.c.h.b16 %v6056
  %v6147 = vunpack.c.l.b16 %v6057
  %v6148 = vunpack.c.h.b16 %v6057
  %v6149 = vunpack.c.l.b16 %v6058
  %v6150 = vunpack.c.h.b16 %v6058
  %v6151 = vunpack.c.l.b16 %v6059
  %v6152 = vunpack.c.h.b16 %v6059
  %v6153 = vunpack.c.l.b16 %v6060
  %v6154 = vunpack.c.h.b16 %v6060
  %v6155 = vunpack.c.l.b16 %v6061
  %v6156 = vunpack.c.h.b16 %v6061
  %v6157 = vunpack.c.l.b16 %v6062
  %v6158 = vunpack.c.h.b16 %v6062
  %v6159 = vunpack.c.l.b16 %v6063
  %v6160 = vunpack.c.h.b16 %v6063
  %v6161 = vunpack.c.l.b16 %v6064
  %v6162 = vunpack.c.h.b16 %v6064
  %v6163 = vunpack.c.l.b16 %v6065
  %v6164 = vunpack.c.h.b16 %v6065
  %v6165 = vunpack.c.l.b16 %v6066
  %v6166 = vunpack.c.h.b16 %v6066
  %v6167 = vunpack.c.l.b16 %v6067
  %v6168 = vunpack.c.h.b16 %v6067
  %v6169 = vunpack.c.l.b16 %v6068
  %v6170 = vunpack.c.h.b16 %v6068
  %v6171 = vunpack.c.l.b16 %v6069
  %v6172 = vunpack.c.h.b16 %v6069
  %v6173 = vunpack.c.l.b16 %v6070
  %v6174 = vunpack.c.h.b16 %v6070
  %v6175 = vunpack.c.l.b16 %v6071
  %v6176 = vunpack.c.h.b16 %v6071
  %v6177 = vunpack.c.l.b16 %v6072
  %v6178 = vunpack.c.h.b16 %v6072
  %v6179 = vunpack.c.l.b16 %v6073
  %v6180 = vunpack.c.h.b16 %v6073
  %v6181 = vunpack.c.l.b16 %v6074
  %v6182 = vunpack.c.h.b16 %v6074
  %v6183 = vunpack.c.l.b16 %v6075
  %v6184 = vunpack.c.h.b16 %v6075
  %v6185 = vunpack.c.l.b16 %v6076
  %v6186 = vunpack.c.h.b16 %v6076
  %v6187 = vunpack.c.l.b16 %v6077
  %v6188 = vunpack.c.h.b16 %v6077
  %v6189 = vunpack.c.l.b16 %v6078
  %v6190 = vunpack.c.h.b16 %v6078
  %v6191 = vunpack.c.l.b16 %v6079
  %v6192 = vunpack.c.h.b16 %v6079
  %v6193 = vunpack.c.l.b16 %v6080
  %v6194 = vunpack.c.h.b16 %v6080
  %v6195 = vunpack.c.l.b16 %v6081
  %v6196 = vunpack.c.h.b16 %v6081
  %v6197 = vunpack.c.l.b16 %v6082
  %v6198 = vunpack.c.h.b16 %v6082
  %v6199 = vunpack.c.l.b16 %v6083
  %v6200 = vunpack.c.h.b16 %v6083
  %v6201 = vunpack.c.l.b16 %v6084
  %v6202 = vunpack.c.h.b16 %v6084
  %v6203 = vunpack.c.l.b16 %v6085
  %v6204 = vunpack.c.h.b16 %v6085
  %v6205 = vpack.c.b16 %v6143, %v6141
  %v6206 = vpack.c.b16 %v6144, %v6142
  %v6207 = vpack.c.b16 %v6147, %v6145
  %v6208 = vpack.c.b16 %v6148, %v6146
  %v6209 = vpack.c.b16 %v6151, %v6149
  %v6210 = vpack.c.b16 %v6152, %v6150
  %v6211 = vpack.c.b16 %v6155, %v6153
  %v6212 = vpack.c.b16 %v6156, %v6154
  %v6213 = vpack.c.b16 %v6159, %v6157
  %v6214 = vpack.c.b16 %v6160, %v6158
  %v6215 = vpack.c.b16 %v6163, %v6161
  %v6216 = vpack.c.b16 %v6164, %v6162
  %v6217 = vpack.c.b16 %v6167, %v6165
  %v6218 = vpack.c.b16 %v6168, %v6166
  %v6219 = vpack.c.b16 %v6171, %v6169
  %v6220 = vpack.c.b16 %v6172, %v6170
  %v6221 = vpack.c.b16 %v6175, %v6173
  %v6222 = vpack.c.b16 %v6176, %v6174
  %v6223 = vpack.c.b16 %v6179, %v6177
  %v6224 = vpack.c.b16 %v6180, %v6178
  %v6225 = vpack.c.b16 %v6183, %v6181
  %v6226 = vpack.c.b16 %v6184, %v6182
  %v6227 = vpack.c.b16 %v6187, %v6185
  %v6228 = vpack.c.b16 %v6188, %v6186
  %v6229 = vpack.c.b16 %v6191, %v6189
  %v6230 = vpack.c.b16 %v6192, %v6190
  %v6231 = vpack.c.b16 %v6195, %v6193
  %v6232 = vpack.c.b16 %v6196, %v6194
  %v6233 = vpack.c.b16 %v6199, %v6197
  %v6234 = vpack.c.b16 %v6200, %v6198
  %v6235 = vpack.c.b16 %v6203, %v6201
  %v6236 = vpack.c.b16 %v6204, %v6202
  %6269 = vmatprep.subr.bf16.mxu0 %v6206
  %6270 = vmatpush1.bf16.msra.mxu0 %v6205
  %6271 = vmatprep.subr.bf16.mxu0 %v6208
  %6272 = vmatpush1.bf16.msra.mxu0 %v6207
  %6273 = vmatprep.subr.bf16.mxu0 %v6210
  %6274 = vmatpush1.bf16.msra.mxu0 %v6209
  %6275 = vmatprep.subr.bf16.mxu0 %v6212
  %6276 = vmatpush1.bf16.msra.mxu0 %v6211
  %6277 = vmatprep.subr.bf16.mxu0 %v6214
  %6278 = vmatpush1.bf16.msra.mxu0 %v6213
  %6279 = vmatprep.subr.bf16.mxu0 %v6216
  %6280 = vmatpush1.bf16.msra.mxu0 %v6215
  %6281 = vmatprep.subr.bf16.mxu0 %v6218
  %6282 = vmatpush1.bf16.msra.mxu0 %v6217
  %6283 = vmatprep.subr.bf16.mxu0 %v6220
  %6284 = vmatpush1.bf16.msra.mxu0 %v6219
  %6285 = vmatprep.subr.bf16.mxu0 %v6222
  %6286 = vmatpush1.bf16.msra.mxu0 %v6221
  %6287 = vmatprep.subr.bf16.mxu0 %v6224
  %6288 = vmatpush1.bf16.msra.mxu0 %v6223
  %6289 = vmatprep.subr.bf16.mxu0 %v6226
  %6290 = vmatpush1.bf16.msra.mxu0 %v6225
  %6291 = vmatprep.subr.bf16.mxu0 %v6228
  %6292 = vmatpush1.bf16.msra.mxu0 %v6227
  %6293 = vmatprep.subr.bf16.mxu0 %v6230
  %6294 = vmatpush1.bf16.msra.mxu0 %v6229
  %6295 = vmatprep.subr.bf16.mxu0 %v6232
  %6296 = vmatpush1.bf16.msra.mxu0 %v6231
  %6297 = vmatprep.subr.bf16.mxu0 %v6234
  %6298 = vmatpush1.bf16.msra.mxu0 %v6233
  %6299 = vmatprep.subr.bf16.mxu0 %v6236
  %6300 = vmatpush1.bf16.msra.mxu0 %v6235
  %6301 = vmatprep.mubr.bf16.mxu0 %v6106
  %6302 = vmatmul.mubr.bf16.gmra.mrb[0].mxu0 %v6098
  %v6303 = vpop.f32.mrb[0].mxu0
  %v6304 = vadd.f32 0.0, %v6303
  %v6305 = vpop.f32.mrb[0].mxu0
  %v6306 = vadd.f32 0.0, %v6305
  %v6307 = vpop.f32.mrb[0].mxu0
  %v6308 = vpop.f32.mrb[0].mxu0
  %6309 = vdwg.mxu0
  %v6310 = vadd.f32 %v6051, %v6304
  %v6311 = vadd.f32 %v6052, %v6306
  %v6312 = vld [vmem:[%s3299 + $0x8] sm:$0xcc]
  %v6313 = vld [vmem:[%s3039] sm:$0xff]
  %v6314 = vld [vmem:[%s3039 + $0x8] sm:$0xff]
  %v6315 = vld [vmem:[%s3039 + $0x10] sm:$0xff]
  %v6316 = vld [vmem:[%s3039 + $0x18] sm:$0xff]
  %v6317 = vld [vmem:[%s3039 + $0x20] sm:$0xff]
  %v6318 = vld [vmem:[%s3039 + $0x28] sm:$0xff]
  %v6319 = vld [vmem:[%s3039 + $0x30] sm:$0xff]
  %v6320 = vld [vmem:[%s3039 + $0x38] sm:$0xff]
  %v6321 = vld [vmem:[%s3039 + $0x40] sm:$0xff]
  %v6322 = vld [vmem:[%s3039 + $0x48] sm:$0xff]
  %v6323 = vld [vmem:[%s3039 + $0x50] sm:$0xff]
  %v6324 = vld [vmem:[%s3039 + $0x58] sm:$0xff]
  %v6325 = vld [vmem:[%s3039 + $0x60] sm:$0xff]
  %v6326 = vld [vmem:[%s3039 + $0x68] sm:$0xff]
  %v6327 = vld [vmem:[%s3039 + $0x70] sm:$0xff]
  %v6328 = vld [vmem:[%s3039 + $0x78] sm:$0xff]
  %v6329 = vld [vmem:[%s3039 + $0x80] sm:$0xff]
  %v6330 = vld [vmem:[%s3039 + $0x88] sm:$0xff]
  %v6331 = vld [vmem:[%s3039 + $0x90] sm:$0xff]
  %v6332 = vld [vmem:[%s3039 + $0x98] sm:$0xff]
  %v6333 = vld [vmem:[%s3039 + $0xa0] sm:$0xff]
  %v6334 = vld [vmem:[%s3039 + $0xa8] sm:$0xff]
  %v6335 = vld [vmem:[%s3039 + $0xb0] sm:$0xff]
  %v6336 = vld [vmem:[%s3039 + $0xb8] sm:$0xff]
  %v6337 = vld [vmem:[%s3039 + $0xc0] sm:$0xff]
  %v6338 = vld [vmem:[%s3039 + $0xc8] sm:$0xff]
  %v6339 = vld [vmem:[%s3039 + $0xd0] sm:$0xff]
  %v6340 = vld [vmem:[%s3039 + $0xd8] sm:$0xff]
  %v6341 = vld [vmem:[%s3039 + $0xe0] sm:$0xff]
  %v6342 = vld [vmem:[%s3039 + $0xe8] sm:$0xff]
  %v6343 = vld [vmem:[%s3039 + $0xf0] sm:$0xff]
  %v6344 = vld [vmem:[%s3039 + $0xf8] sm:$0xff]
  %v6346 = vunpack.c.l.b16 %v6312
  %v6347 = vunpack.c.h.b16 %v6312
  %v6348 = vpack.c.b16 %v6087, %v6346
  %v6349 = vpack.c.b16 %v6088, %v6347
  %v6350 = vrot.slane %v6348, 2
  %v6351 = vrot.slane %v6349, 2
  %v6386 = vunpack.c.l.b16 %v6313
  %v6387 = vunpack.c.h.b16 %v6313
  %v6388 = vunpack.c.l.b16 %v6314
  %v6389 = vunpack.c.h.b16 %v6314
  %v6390 = vunpack.c.l.b16 %v6315
  %v6391 = vunpack.c.h.b16 %v6315
  %v6392 = vunpack.c.l.b16 %v6316
  %v6393 = vunpack.c.h.b16 %v6316
  %v6394 = vunpack.c.l.b16 %v6317
  %v6395 = vunpack.c.h.b16 %v6317
  %v6396 = vunpack.c.l.b16 %v6318
  %v6397 = vunpack.c.h.b16 %v6318
  %v6398 = vunpack.c.l.b16 %v6319
  %v6399 = vunpack.c.h.b16 %v6319
  %v6400 = vunpack.c.l.b16 %v6320
  %v6401 = vunpack.c.h.b16 %v6320
  %v6402 = vunpack.c.l.b16 %v6321
  %v6403 = vunpack.c.h.b16 %v6321
  %v6404 = vunpack.c.l.b16 %v6322
  %v6405 = vunpack.c.h.b16 %v6322
  %v6406 = vunpack.c.l.b16 %v6323
  %v6407 = vunpack.c.h.b16 %v6323
  %v6408 = vunpack.c.l.b16 %v6324
  %v6409 = vunpack.c.h.b16 %v6324
  %v6410 = vunpack.c.l.b16 %v6325
  %v6411 = vunpack.c.h.b16 %v6325
  %v6412 = vunpack.c.l.b16 %v6326
  %v6413 = vunpack.c.h.b16 %v6326
  %v6414 = vunpack.c.l.b16 %v6327
  %v6415 = vunpack.c.h.b16 %v6327
  %v6416 = vunpack.c.l.b16 %v6328
  %v6417 = vunpack.c.h.b16 %v6328
  %v6418 = vunpack.c.l.b16 %v6329
  %v6419 = vunpack.c.h.b16 %v6329
  %v6420 = vunpack.c.l.b16 %v6330
  %v6421 = vunpack.c.h.b16 %v6330
  %v6422 = vunpack.c.l.b16 %v6331
  %v6423 = vunpack.c.h.b16 %v6331
  %v6424 = vunpack.c.l.b16 %v6332
  %v6425 = vunpack.c.h.b16 %v6332
  %v6426 = vunpack.c.l.b16 %v6333
  %v6427 = vunpack.c.h.b16 %v6333
  %v6428 = vunpack.c.l.b16 %v6334
  %v6429 = vunpack.c.h.b16 %v6334
  %v6430 = vunpack.c.l.b16 %v6335
  %v6431 = vunpack.c.h.b16 %v6335
  %v6432 = vunpack.c.l.b16 %v6336
  %v6433 = vunpack.c.h.b16 %v6336
  %v6434 = vunpack.c.l.b16 %v6337
  %v6435 = vunpack.c.h.b16 %v6337
  %v6436 = vunpack.c.l.b16 %v6338
  %v6437 = vunpack.c.h.b16 %v6338
  %v6438 = vunpack.c.l.b16 %v6339
  %v6439 = vunpack.c.h.b16 %v6339
  %v6440 = vunpack.c.l.b16 %v6340
  %v6441 = vunpack.c.h.b16 %v6340
  %v6442 = vunpack.c.l.b16 %v6341
  %v6443 = vunpack.c.h.b16 %v6341
  %v6444 = vunpack.c.l.b16 %v6342
  %v6445 = vunpack.c.h.b16 %v6342
  %v6446 = vunpack.c.l.b16 %v6343
  %v6447 = vunpack.c.h.b16 %v6343
  %v6448 = vunpack.c.l.b16 %v6344
  %v6449 = vunpack.c.h.b16 %v6344
  %v6450 = vpack.c.b16 %v6388, %v6386
  %v6451 = vpack.c.b16 %v6389, %v6387
  %v6452 = vpack.c.b16 %v6392, %v6390
  %v6453 = vpack.c.b16 %v6393, %v6391
  %v6454 = vpack.c.b16 %v6396, %v6394
  %v6455 = vpack.c.b16 %v6397, %v6395
  %v6456 = vpack.c.b16 %v6400, %v6398
  %v6457 = vpack.c.b16 %v6401, %v6399
  %v6458 = vpack.c.b16 %v6404, %v6402
  %v6459 = vpack.c.b16 %v6405, %v6403
  %v6460 = vpack.c.b16 %v6408, %v6406
  %v6461 = vpack.c.b16 %v6409, %v6407
  %v6462 = vpack.c.b16 %v6412, %v6410
  %v6463 = vpack.c.b16 %v6413, %v6411
  %v6464 = vpack.c.b16 %v6416, %v6414
  %v6465 = vpack.c.b16 %v6417, %v6415
  %v6466 = vpack.c.b16 %v6420, %v6418
  %v6467 = vpack.c.b16 %v6421, %v6419
  %v6468 = vpack.c.b16 %v6424, %v6422
  %v6469 = vpack.c.b16 %v6425, %v6423
  %v6470 = vpack.c.b16 %v6428, %v6426
  %v6471 = vpack.c.b16 %v6429, %v6427
  %v6472 = vpack.c.b16 %v6432, %v6430
  %v6473 = vpack.c.b16 %v6433, %v6431
  %v6474 = vpack.c.b16 %v6436, %v6434
  %v6475 = vpack.c.b16 %v6437, %v6435
  %v6476 = vpack.c.b16 %v6440, %v6438
  %v6477 = vpack.c.b16 %v6441, %v6439
  %v6478 = vpack.c.b16 %v6444, %v6442
  %v6479 = vpack.c.b16 %v6445, %v6443
  %v6480 = vpack.c.b16 %v6448, %v6446
  %v6481 = vpack.c.b16 %v6449, %v6447
  %6514 = vmatprep.subr.bf16.mxu0 %v6451
  %6515 = vmatpush1.bf16.msra.mxu0 %v6450
  %6516 = vmatprep.subr.bf16.mxu0 %v6453
  %6517 = vmatpush1.bf16.msra.mxu0 %v6452
  %6518 = vmatprep.subr.bf16.mxu0 %v6455
  %6519 = vmatpush1.bf16.msra.mxu0 %v6454
  %6520 = vmatprep.subr.bf16.mxu0 %v6457
  %6521 = vmatpush1.bf16.msra.mxu0 %v6456
  %6522 = vmatprep.subr.bf16.mxu0 %v6459
  %6523 = vmatpush1.bf16.msra.mxu0 %v6458
  %6524 = vmatprep.subr.bf16.mxu0 %v6461
  %6525 = vmatpush1.bf16.msra.mxu0 %v6460
  %6526 = vmatprep.subr.bf16.mxu0 %v6463
  %6527 = vmatpush1.bf16.msra.mxu0 %v6462
  %6528 = vmatprep.subr.bf16.mxu0 %v6465
  %6529 = vmatpush1.bf16.msra.mxu0 %v6464
  %6530 = vmatprep.subr.bf16.mxu0 %v6467
  %6531 = vmatpush1.bf16.msra.mxu0 %v6466
  %6532 = vmatprep.subr.bf16.mxu0 %v6469
  %6533 = vmatpush1.bf16.msra.mxu0 %v6468
  %6534 = vmatprep.subr.bf16.mxu0 %v6471
  %6535 = vmatpush1.bf16.msra.mxu0 %v6470
  %6536 = vmatprep.subr.bf16.mxu0 %v6473
  %6537 = vmatpush1.bf16.msra.mxu0 %v6472
  %6538 = vmatprep.subr.bf16.mxu0 %v6475
  %6539 = vmatpush1.bf16.msra.mxu0 %v6474
  %6540 = vmatprep.subr.bf16.mxu0 %v6477
  %6541 = vmatpush1.bf16.msra.mxu0 %v6476
  %6542 = vmatprep.subr.bf16.mxu0 %v6479
  %6543 = vmatpush1.bf16.msra.mxu0 %v6478
  %6544 = vmatprep.subr.bf16.mxu0 %v6481
  %6545 = vmatpush1.bf16.msra.mxu0 %v6480
  %6546 = vmatprep.mubr.bf16.mxu0 %v6351
  %6547 = vmatmul.mubr.bf16.gmra.mrb[0].mxu0 %v6350
  %v6548 = vpop.f32.mrb[0].mxu0
  %v6549 = vadd.f32 0.0, %v6548
  %v6550 = vpop.f32.mrb[0].mxu0
  %v6551 = vadd.f32 0.0, %v6550
  %v6552 = vpop.f32.mrb[0].mxu0
  %v6553 = vpop.f32.mrb[0].mxu0
  %6554 = vdwg.mxu0
  %v6555 = vadd.f32 %v6310, %v6549
  %v6556 = vadd.f32 %v6311, %v6551
  %v6557 = vadd.f32 %v6555, %v3288
  %v6558 = vadd.f32 %v6556, %v3292
  %s6559 = scalar_lea.vmem %s3, 16
  %6560 = vst [vmem:[%s6559] sm:$0xff] %v6557
  %6561 = vst [vmem:[%s6559 + $0x8] sm:$0xff] %v6558
  // Predicated region
  $region14: #{conv_decoder_single.1} parent=0 // pred_check
    _
  $region15: #{conv_decoder_single.1} parent=0 // pred_check_branch
    %6563 = sbr.rel (0) target = $region17
  $region16: #{conv_decoder_single.1} parent=0 // pred_region
    _
  $region17: #{conv_decoder_single.1} parent=0 // pred_fallthru
    _
  // Predicated region
  $region18: #{conv_decoder_single.1} parent=0 // pred_check
    _
  $region19: #{conv_decoder_single.1} parent=0 // pred_check_branch
    %6565 = sbr.rel (0) target = $region21
  $region20: #{conv_decoder_single.1} parent=0 // pred_region
    _
  $region21: #{conv_decoder_single.1} parent=0 // pred_fallthru
    _

</llo_original>
